<compile_context>
chip_gen: v7x
topology: tpu7x:2x2x1
jax: 0.10.0
libtpu: 0.0.40
codegen_flags: <defaults>
</compile_context>

<pallas_src>
import functools

import jax
import jax.numpy as jnp
from jax.experimental import pallas as pl
from jax.experimental.pallas import tpu as pltpu


def _ctrgc_kernel(x_ref, smt_ref, smr_ref, w12_ref, bd_ref, w3_ref, b3_ref,
                  w4_ref, b4_ref, at_ref, o_ref, *, alpha, nb, r, c_out, t, v):
    """One block of `nb` samples per grid step, fully batched (no python loop).

    x_ref  : (nb, C_in, T*V)        lane-dense input block
    smt/smr: (T*V, V*V)             mean-over-T folded with tile / repeat expansion
    w12    : (2*nb*R, nb*C_in)      block-diag stacked conv1/conv2 weights
    bd     : (nb*R, 1)              (b1 - b2) tiled over the block
    w3     : (nb*C_out, nb*C_in)    block-diag conv3 weights, b3: (nb*C_out, 1)
    w4     : (nb*C_out, nb*R)       block-diag conv4 weights, b4: (nb*C_out, 1)
    at     : (1, V*V)               A transposed and flattened (column v*V+u -> A[u, v])
    o_ref  : (nb, C_out, T*V)       lane-dense output block
    """
    c_in = x_ref.shape[1]
    tv = t * v
    nbr = nb * r
    nbo = nb * c_out

    # Merge (nb, C_in) -> nb*C_in : layout-free, keeps T*V lane-dense.
    x_m = x_ref[...].reshape(nb * c_in, tv)

    # conv3 for the whole block: one block-diagonal MXU matmul (K = nb*C_in).
    x3_m = jnp.dot(w3_ref[...], x_m,
                   preferred_element_type=jnp.float32) + b3_ref[...]        # (nb*C_out, T*V)

    # conv1 / conv2 (pre-mean) for the whole block, stacked into one matmul.
    y12 = jnp.dot(w12_ref[...], x_m, preferred_element_type=jnp.float32)    # (2*nb*R, T*V)
    y1 = y12[:nbr]                                                          # conv1(x), no bias yet
    y2 = y12[nbr:]                                                          # conv2(x), no bias yet

    # mean over T + (v,u)-ordered column expansion via precomputed matrices:
    #   e1[(n,r), v*V+u] = mean_t conv1(x)[n,r,t,u]
    #   e2[(n,r), v*V+u] = mean_t conv2(x)[n,r,t,v]
    e1 = jnp.dot(y1, smt_ref[...], preferred_element_type=jnp.float32)      # (nb*R, V*V)
    e2 = jnp.dot(y2, smr_ref[...], preferred_element_type=jnp.float32)      # (nb*R, V*V)
    diff = jnp.tanh(e1 - e2 + bd_ref[...])                                  # (nb*R, V*V)

    # conv4 (block-diagonal, one push), alpha-scale, add shared A^T topology.
    adj = jnp.dot(w4_ref[...], diff,
                  preferred_element_type=jnp.float32) + b4_ref[...]         # (nb*C_out, V*V)
    adj = adj * jnp.float32(alpha) + at_ref[...]

    # einsum('ncuv,nctv->nctu') with adj already stored transposed ((v,u) order):
    # plain batched (T,V)@(V,U) matmul, no per-channel transpose.
    x3_r = x3_m.reshape(nbo, t, v)
    adj_r = adj.reshape(nbo, v, v)
    out = jnp.einsum('btv,bvu->btu', x3_r, adj_r,
                     preferred_element_type=jnp.float32)                    # (nb*C_out, T, V)

    # Lane-dense store.
    o_ref[...] = out.reshape(nb, c_out, tv).astype(o_ref.dtype)


def _pick_block_n(N, C_in, C_out, TV, itemsize=4):
    """>= 4 grid steps when possible (>= 2 per TC on v7x), VMEM-gated, capped at 8
    (block-diagonal weight constants grow as block_n**2)."""
    try:
        vmem_bytes = pltpu.get_tpu_info().vmem_capacity_bytes
    except Exception:
        vmem_bytes = 64 * 1024 * 1024           # conservative (v7x per-TC VMEM)
    budget = vmem_bytes // 8                     # headroom for constants/scratch
    divisors = [d for d in range(1, min(N, 8) + 1)
                if N % d == 0 and 2 * d * (C_in + C_out) * TV * itemsize <= budget]
    if not divisors:
        return 1
    for min_steps in (4, 2, 1):
        cands = [d for d in divisors if N // d >= min_steps]
        if cands:
            return max(cands)
    return 1


def ctrgc_pallas(x, params, A=None, alpha=1.0, block_n=None):
    w1, b1, w2, b2, w3, b3, w4, b4 = params
    N, C_in, T, V = x.shape
    R = w1.shape[0]
    C_out = w3.shape[0]
    TV = T * V
    VV = V * V

    if A is None:
        A = jnp.zeros((V, V), jnp.float32)

    if block_n is None:
        block_n = _pick_block_n(N, C_in, C_out, TV)
    assert N % block_n == 0, (N, block_n)
    NB = block_n

    # --- layout plumbing (all in the wrapper, kernel tensors stay lane-dense) ---
    x_flat = x.reshape(N, C_in, TV)

    # mean-over-T matrix (entries 1/T) folded with the (v,u)-ordered expansions:
    #   column v*V+u of sm_tile picks mean_t[..., u]; of sm_rep picks mean_t[..., v].
    eye_v = jnp.eye(V, dtype=jnp.float32)
    sm = jnp.tile(eye_v, (T, 1)) / jnp.float32(T)              # (TV, V)
    e_tile = jnp.tile(eye_v, (1, V))                           # (V, VV)
    e_rep = jnp.repeat(eye_v, V, axis=1)                       # (V, VV)
    sm_tile = sm @ e_tile                                      # (TV, VV)
    sm_rep = sm @ e_rep                                        # (TV, VV)

    # Block-diagonal weights: one matmul per conv for the whole sample block.
    eye_b = jnp.eye(NB, dtype=jnp.float32)
    w12_blk = jnp.concatenate([jnp.kron(eye_b, w1), jnp.kron(eye_b, w2)], axis=0)  # (2*NB*R, NB*C_in)
    w3_blk = jnp.kron(eye_b, w3)                               # (NB*C_out, NB*C_in)
    w4_blk = jnp.kron(eye_b, w4)                               # (NB*C_out, NB*R)
    b3_blk = jnp.tile(b3, NB).reshape(NB * C_out, 1)
    b4_blk = jnp.tile(b4, NB).reshape(NB * C_out, 1)
    bd_blk = jnp.tile(b1 - b2, NB).reshape(NB * R, 1)
    a_t = A.T.reshape(1, VV)                                   # column v*V+u -> A[u, v]

    kernel = functools.partial(_ctrgc_kernel, alpha=float(alpha),
                               nb=NB, r=R, c_out=C_out, t=T, v=V)

    def const_spec(shape):
        nd = len(shape)
        return pl.BlockSpec(shape, lambda n: (0,) * nd)

    out_flat = pl.pallas_call(
        kernel,
        out_shape=jax.ShapeDtypeStruct((N, C_out, TV), x.dtype),
        grid_spec=pltpu.PrefetchScalarGridSpec(
            num_scalar_prefetch=0,
            grid=(N // NB,),
            in_specs=[
                pl.BlockSpec((NB, C_in, TV), lambda n: (n, 0, 0)),
                const_spec((TV, VV)),              # sm_tile
                const_spec((TV, VV)),              # sm_rep
                const_spec((2 * NB * R, NB * C_in)),
                const_spec((NB * R, 1)),
                const_spec((NB * C_out, NB * C_in)),
                const_spec((NB * C_out, 1)),
                const_spec((NB * C_out, NB * R)),
                const_spec((NB * C_out, 1)),
                const_spec((1, VV)),
            ],
            out_specs=pl.BlockSpec((NB, C_out, TV), lambda n: (n, 0, 0)),
        ),
        compiler_params=pltpu.CompilerParams(
            dimension_semantics=("parallel",),
            vmem_limit_bytes=32 * 1024 * 1024),
    )(x_flat, sm_tile, sm_rep, w12_blk, bd_blk, w3_blk, b3_blk,
      w4_blk, b4_blk, a_t)

    return out_flat.reshape(N, C_out, T, V)


def init_params(key, in_channels, out_channels, rel_reduction=8):
    """Deterministic stand-in for the PyTorch module init (kaiming fan_out, zero bias)."""
    if in_channels in (2, 9):
        rel_channels = 8
    else:
        rel_channels = in_channels // rel_reduction
    k1, k2, k3, k4 = jax.random.split(key, 4)

    def kaiming(k, out_c, in_c):
        # kaiming_normal_(mode='fan_out'), 1x1 conv: fan_out = out_c, gain = sqrt(2)
        std = (2.0 / out_c) ** 0.5
        return std * jax.random.normal(k, (out_c, in_c), jnp.float32)

    w1 = kaiming(k1, rel_channels, in_channels)
    b1 = jnp.zeros((rel_channels,), jnp.float32)
    w2 = kaiming(k2, rel_channels, in_channels)
    b2 = jnp.zeros((rel_channels,), jnp.float32)
    w3 = kaiming(k3, out_channels, in_channels)
    b3 = jnp.zeros((out_channels,), jnp.float32)
    w4 = kaiming(k4, out_channels, rel_channels)
    b4 = jnp.zeros((out_channels,), jnp.float32)
    return (w1, b1, w2, b2, w3, b3, w4, b4)


def ctrgc_ref(x, params, A, alpha=1.0):
    """Plain-JAX reference mirroring the PyTorch forward."""
    w1, b1, w2, b2, w3, b3, w4, b4 = params
    x1 = jnp.einsum('rc,nctv->nrtv', w1, x) + b1[None, :, None, None]
    x1 = x1.mean(axis=2)                                   # (N, R, V)
    x2 = jnp.einsum('rc,nctv->nrtv', w2, x) + b2[None, :, None, None]
    x2 = x2.mean(axis=2)                                   # (N, R, V)
    x3 = jnp.einsum('oc,nctv->notv', w3, x) + b3[None, :, None, None]
    d = jnp.tanh(x1[:, :, :, None] - x2[:, :, None, :])    # (N, R, V, V)
    adj = jnp.einsum('or,nruv->nouv', w4, d) + b4[None, :, None, None]
    adj = adj * alpha + A[None, None]
    return jnp.einsum('ncuv,nctv->nctu', adj, x3)


if __name__ == "__main__":
    key = jax.random.PRNGKey(0)
    kx, ka, kp = jax.random.split(key, 3)

    # N=8 exercises the batched sample-block path (block_n=2) with 4 grid steps.
    N, C_in, C_out, T, V = 8, 16, 16, 8, 16
    x = jax.random.normal(kx, (N, C_in, T, V), jnp.float32)
    A = 0.1 * jax.random.normal(ka, (V, V), jnp.float32)
    params = init_params(kp, C_in, C_out)

    out = ctrgc_pallas(x, params, A, alpha=1.0)
    out = jax.block_until_ready(out)

    ref = ctrgc_ref(x, params, A, alpha=1.0)
    assert out.shape == (N, C_out, T, V), out.shape
    max_err = float(jnp.max(jnp.abs(out - ref)))
    assert jnp.allclose(out, ref, atol=1e-3, rtol=1e-3), f"max_err={max_err}"

    print("KERNEL_OK")
</pallas_src>

<mosaic_0001>
module attributes {stable_mosaic.version = 11 : i64} {
  func.func @_ctrgc_kernel(%arg0: i32, %arg1: memref<2x16x128xf32, #tpu.memory_space<vmem>>, %arg2: memref<128x256xf32, #tpu.memory_space<vmem>>, %arg3: memref<128x256xf32, #tpu.memory_space<vmem>>, %arg4: memref<8x32xf32, #tpu.memory_space<vmem>>, %arg5: memref<4x1xf32, #tpu.memory_space<vmem>>, %arg6: memref<32x32xf32, #tpu.memory_space<vmem>>, %arg7: memref<32x1xf32, #tpu.memory_space<vmem>>, %arg8: memref<32x4xf32, #tpu.memory_space<vmem>>, %arg9: memref<32x1xf32, #tpu.memory_space<vmem>>, %arg10: memref<1x256xf32, #tpu.memory_space<vmem>>, %arg11: memref<2x16x128xf32, #tpu.memory_space<vmem>>) attributes {dimension_semantics = [#tpu.dimension_semantics<parallel>], iteration_bounds = array<i64: 4>, scalar_prefetch = 0 : i64, scratch_operands = 0 : i64, tpu.core_type = #tpu.core_type<tc>, window_params = [{transform_indices = @transform_0, window_bounds = array<i64: 2, 16, 128>}, {pipeline_mode = #tpu.pipeline_mode<synchronous>, transform_indices = @transform_1, window_bounds = array<i64: 128, 256>}, {pipeline_mode = #tpu.pipeline_mode<synchronous>, transform_indices = @transform_2, window_bounds = array<i64: 128, 256>}, {pipeline_mode = #tpu.pipeline_mode<synchronous>, transform_indices = @transform_3, window_bounds = array<i64: 8, 32>}, {pipeline_mode = #tpu.pipeline_mode<synchronous>, transform_indices = @transform_4, window_bounds = array<i64: 4, 1>}, {pipeline_mode = #tpu.pipeline_mode<synchronous>, transform_indices = @transform_5, window_bounds = array<i64: 32, 32>}, {pipeline_mode = #tpu.pipeline_mode<synchronous>, transform_indices = @transform_6, window_bounds = array<i64: 32, 1>}, {pipeline_mode = #tpu.pipeline_mode<synchronous>, transform_indices = @transform_7, window_bounds = array<i64: 32, 4>}, {pipeline_mode = #tpu.pipeline_mode<synchronous>, transform_indices = @transform_8, window_bounds = array<i64: 32, 1>}, {pipeline_mode = #tpu.pipeline_mode<synchronous>, transform_indices = @transform_9, window_bounds = array<i64: 1, 256>}, {transform_indices = @transform_10, window_bounds = array<i64: 2, 16, 128>}]} {
    %c0 = arith.constant 0 : index
    %c0_0 = arith.constant 0 : index
    %c0_1 = arith.constant 0 : index
    %0 = vector.load %arg1[%c0, %c0_0, %c0_1] : memref<2x16x128xf32, #tpu.memory_space<vmem>>, vector<2x16x128xf32>
    %1 = vector.shape_cast %0 : vector<2x16x128xf32> to vector<32x128xf32>
    %c0_2 = arith.constant 0 : index
    %c0_3 = arith.constant 0 : index
    %2 = vector.load %arg6[%c0_2, %c0_3] : memref<32x32xf32, #tpu.memory_space<vmem>>, vector<32x32xf32>
    %cst = arith.constant dense<0.000000e+00> : vector<32x128xf32>
    %3 = tpu.matmul %2, %1, %cst {dimension_numbers = #tpu.dot_dimension_numbers<[1], [0], [0], [1], [0, 0, 1, 1], [], []>} : vector<32x32xf32>, vector<32x128xf32>, vector<32x128xf32> -> vector<32x128xf32>
    %c0_4 = arith.constant 0 : index
    %c0_5 = arith.constant 0 : index
    %4 = vector.load %arg7[%c0_4, %c0_5] : memref<32x1xf32, #tpu.memory_space<vmem>>, vector<32x1xf32>
    %5 = vector.broadcast %4 : vector<32x1xf32> to vector<32x128xf32>
    %6 = arith.addf %3, %5 : vector<32x128xf32>
    %c0_6 = arith.constant 0 : index
    %c0_7 = arith.constant 0 : index
    %7 = vector.load %arg4[%c0_6, %c0_7] : memref<8x32xf32, #tpu.memory_space<vmem>>, vector<8x32xf32>
    %cst_8 = arith.constant dense<0.000000e+00> : vector<8x128xf32>
    %8 = tpu.matmul %7, %1, %cst_8 {dimension_numbers = #tpu.dot_dimension_numbers<[1], [0], [0], [1], [0, 0, 1, 1], [], []>} : vector<8x32xf32>, vector<32x128xf32>, vector<8x128xf32> -> vector<8x128xf32>
    %9 = vector.extract_strided_slice %8 {offsets = [0, 0], sizes = [4, 128], strides = [1, 1]} : vector<8x128xf32> to vector<4x128xf32>
    %10 = vector.extract_strided_slice %8 {offsets = [4, 0], sizes = [4, 128], strides = [1, 1]} : vector<8x128xf32> to vector<4x128xf32>
    %c0_9 = arith.constant 0 : index
    %c0_10 = arith.constant 0 : index
    %11 = vector.load %arg2[%c0_9, %c0_10] : memref<128x256xf32, #tpu.memory_space<vmem>>, vector<128x256xf32>
    %cst_11 = arith.constant dense<0.000000e+00> : vector<4x256xf32>
    %12 = tpu.matmul %9, %11, %cst_11 {dimension_numbers = #tpu.dot_dimension_numbers<[1], [0], [0], [1], [0, 0, 1, 1], [], []>} : vector<4x128xf32>, vector<128x256xf32>, vector<4x256xf32> -> vector<4x256xf32>
    %c0_12 = arith.constant 0 : index
    %c0_13 = arith.constant 0 : index
    %13 = vector.load %arg3[%c0_12, %c0_13] : memref<128x256xf32, #tpu.memory_space<vmem>>, vector<128x256xf32>
    %cst_14 = arith.constant dense<0.000000e+00> : vector<4x256xf32>
    %14 = tpu.matmul %10, %13, %cst_14 {dimension_numbers = #tpu.dot_dimension_numbers<[1], [0], [0], [1], [0, 0, 1, 1], [], []>} : vector<4x128xf32>, vector<128x256xf32>, vector<4x256xf32> -> vector<4x256xf32>
    %15 = arith.subf %12, %14 : vector<4x256xf32>
    %c0_15 = arith.constant 0 : index
    %c0_16 = arith.constant 0 : index
    %16 = vector.load %arg5[%c0_15, %c0_16] : memref<4x1xf32, #tpu.memory_space<vmem>>, vector<4x1xf32>
    %17 = vector.broadcast %16 : vector<4x1xf32> to vector<4x256xf32>
    %18 = arith.addf %15, %17 : vector<4x256xf32>
    %19 = math.tanh %18 : vector<4x256xf32>
    %c0_17 = arith.constant 0 : index
    %c0_18 = arith.constant 0 : index
    %20 = vector.load %arg8[%c0_17, %c0_18] : memref<32x4xf32, #tpu.memory_space<vmem>>, vector<32x4xf32>
    %cst_19 = arith.constant dense<0.000000e+00> : vector<32x256xf32>
    %21 = tpu.matmul %20, %19, %cst_19 {dimension_numbers = #tpu.dot_dimension_numbers<[1], [0], [0], [1], [0, 0, 1, 1], [], []>} : vector<32x4xf32>, vector<4x256xf32>, vector<32x256xf32> -> vector<32x256xf32>
    %c0_20 = arith.constant 0 : index
    %c0_21 = arith.constant 0 : index
    %22 = vector.load %arg9[%c0_20, %c0_21] : memref<32x1xf32, #tpu.memory_space<vmem>>, vector<32x1xf32>
    %23 = vector.broadcast %22 : vector<32x1xf32> to vector<32x256xf32>
    %24 = arith.addf %21, %23 : vector<32x256xf32>
    %cst_22 = arith.constant 1.000000e+00 : f32
    %25 = vector.broadcast %cst_22 : f32 to vector<32x256xf32>
    %26 = arith.mulf %24, %25 : vector<32x256xf32>
    %c0_23 = arith.constant 0 : index
    %c0_24 = arith.constant 0 : index
    %27 = vector.load %arg10[%c0_23, %c0_24] : memref<1x256xf32, #tpu.memory_space<vmem>>, vector<1x256xf32>
    %28 = vector.broadcast %27 : vector<1x256xf32> to vector<32x256xf32>
    %29 = arith.addf %26, %28 : vector<32x256xf32>
    %30 = vector.shape_cast %6 : vector<32x128xf32> to vector<32x8x16xf32>
    %31 = vector.shape_cast %29 : vector<32x256xf32> to vector<32x16x16xf32>
    "tpu.trace_start"() <{level = 10 : i32, message = "btv,bvu->btu"}> : () -> ()
    %cst_25 = arith.constant dense<0.000000e+00> : vector<32x8x16xf32>
    %32 = tpu.matmul %30, %31, %cst_25 {dimension_numbers = #tpu.dot_dimension_numbers<[2], [1], [1], [2], [0, 0, 0, 1, 1, 2], [0], [0]>} : vector<32x8x16xf32>, vector<32x16x16xf32>, vector<32x8x16xf32> -> vector<32x8x16xf32>
    "tpu.trace_stop"() : () -> ()
    %33 = vector.shape_cast %32 : vector<32x8x16xf32> to vector<2x16x128xf32>
    %c0_26 = arith.constant 0 : index
    %c0_27 = arith.constant 0 : index
    %c0_28 = arith.constant 0 : index
    %34 = vector.load %arg11[%c0_26, %c0_27, %c0_28] : memref<2x16x128xf32, #tpu.memory_space<vmem>>, vector<2x16x128xf32>
    tpu.vector_store %arg11[%c0_26, %c0_27, %c0_28], %33 {strides = array<i32>} : memref<2x16x128xf32, #tpu.memory_space<vmem>>, vector<2x16x128xf32>,
    return
  }
  func.func @transform_0(%arg0: i32) -> (i32, i32, i32) {
    %c0_i32 = arith.constant 0 : i32
    %c0_i32_0 = arith.constant 0 : i32
    %c0_i32_1 = arith.constant 0 : i32
    return %arg0, %c0_i32, %c0_i32_0 : i32, i32, i32
  }
  func.func @transform_1(%arg0: i32) -> (i32, i32) {
    %c0_i32 = arith.constant 0 : i32
    %c0_i32_0 = arith.constant 0 : i32
    %c0_i32_1 = arith.constant 0 : i32
    return %c0_i32, %c0_i32_0 : i32, i32
  }
  func.func @transform_2(%arg0: i32) -> (i32, i32) {
    %c0_i32 = arith.constant 0 : i32
    %c0_i32_0 = arith.constant 0 : i32
    %c0_i32_1 = arith.constant 0 : i32
    return %c0_i32, %c0_i32_0 : i32, i32
  }
  func.func @transform_3(%arg0: i32) -> (i32, i32) {
    %c0_i32 = arith.constant 0 : i32
    %c0_i32_0 = arith.constant 0 : i32
    %c0_i32_1 = arith.constant 0 : i32
    return %c0_i32, %c0_i32_0 : i32, i32
  }
  func.func @transform_4(%arg0: i32) -> (i32, i32) {
    %c0_i32 = arith.constant 0 : i32
    %c0_i32_0 = arith.constant 0 : i32
    %c0_i32_1 = arith.constant 0 : i32
    return %c0_i32, %c0_i32_0 : i32, i32
  }
  func.func @transform_5(%arg0: i32) -> (i32, i32) {
    %c0_i32 = arith.constant 0 : i32
    %c0_i32_0 = arith.constant 0 : i32
    %c0_i32_1 = arith.constant 0 : i32
    return %c0_i32, %c0_i32_0 : i32, i32
  }
  func.func @transform_6(%arg0: i32) -> (i32, i32) {
    %c0_i32 = arith.constant 0 : i32
    %c0_i32_0 = arith.constant 0 : i32
    %c0_i32_1 = arith.constant 0 : i32
    return %c0_i32, %c0_i32_0 : i32, i32
  }
  func.func @transform_7(%arg0: i32) -> (i32, i32) {
    %c0_i32 = arith.constant 0 : i32
    %c0_i32_0 = arith.constant 0 : i32
    %c0_i32_1 = arith.constant 0 : i32
    return %c0_i32, %c0_i32_0 : i32, i32
  }
  func.func @transform_8(%arg0: i32) -> (i32, i32) {
    %c0_i32 = arith.constant 0 : i32
    %c0_i32_0 = arith.constant 0 : i32
    %c0_i32_1 = arith.constant 0 : i32
    return %c0_i32, %c0_i32_0 : i32, i32
  }
  func.func @transform_9(%arg0: i32) -> (i32, i32) {
    %c0_i32 = arith.constant 0 : i32
    %c0_i32_0 = arith.constant 0 : i32
    %c0_i32_1 = arith.constant 0 : i32
    return %c0_i32, %c0_i32_0 : i32, i32
  }
  func.func @transform_10(%arg0: i32) -> (i32, i32, i32) {
    %c0_i32 = arith.constant 0 : i32
    %c0_i32_0 = arith.constant 0 : i32
    %c0_i32_1 = arith.constant 0 : i32
    return %arg0, %c0_i32, %c0_i32_0 : i32, i32, i32
  }
}

</mosaic_0001>

<llo_original>
// kernel: tpu_custom_call.1
$region0: #{tpu_custom_call.1}
  #allocation0 [shape = 'u32[]', space=smem, size = 0x4, offset = 0x4, fixed_abs, tag = 'smem constant byte address 0x4 - core index']
  #allocation1 [shape = 'u32[144,128]{1,0:T(1,128)}', space=vmem, size = 0x12000, scoped, tag = 'internal scratch']
  %s0 = inlined_call_operand.hbm [shape: f32[8,16,128], index: 0, kind: input, shape index: {}]
  %s1 = inlined_call_operand.hbm [shape: f32[128,256], index: 1, kind: input, shape index: {}]
  %s2 = inlined_call_operand.hbm [shape: f32[128,256], index: 2, kind: input, shape index: {}]
  %s3 = inlined_call_operand.vmem [shape: f32[8,32], index: 3, kind: input, shape index: {}]
  %s4 = inlined_call_operand.vmem [shape: f32[4,1], index: 4, kind: input, shape index: {}]
  %s5 = inlined_call_operand.vmem [shape: f32[32,32], index: 5, kind: input, shape index: {}]
  %s6 = inlined_call_operand.vmem [shape: f32[32,1], index: 6, kind: input, shape index: {}]
  %s7 = inlined_call_operand.vmem [shape: f32[32,4], index: 7, kind: input, shape index: {}]
  %s8 = inlined_call_operand.vmem [shape: f32[32,1], index: 8, kind: input, shape index: {}]
  %s9 = inlined_call_operand.vmem [shape: f32[1,256], index: 9, kind: input, shape index: {}]
  %s10 = inlined_call_operand.hbm [shape: f32[8,16,128], index: 10, kind: output, shape index: {}]
  %s11 = sld [smem:[#allocation0]]
  $region85: #{tpu_custom_call.1} parent=0
    _
  %s13 = ssub.s32 1, %s11
  %s14 = scalar_select 0, %s13, %s11
  $region1: #{tpu_custom_call.1} parent=0
    #allocation2 [shape = 'u8[32768]{0}', space=vmem, size = 0x8000, scoped, tag = 'input window, operand 0']
    #allocation3 [shape = 's32[2]{0}', space=sflag, size = 0x8, scoped, tag = 'scoped memory for tpu_custom_call.1']
    #allocation4 [shape = 's32[2]{0}', space=sflag, size = 0x8, scoped, tag = 'scoped memory for tpu_custom_call.1']
    #allocation5 [shape = 'u8[131072]{0}', space=vmem, size = 0x20000, scoped, tag = 'input window, operand 1, single buffered']
    #allocation6 [shape = 's32[1]{0}', space=sflag, size = 0x4, scoped, tag = 'scoped memory for tpu_custom_call.1']
    #allocation7 [shape = 'u8[131072]{0}', space=vmem, size = 0x20000, scoped, tag = 'input window, operand 2, single buffered']
    #allocation8 [shape = 'u8[32768]{0}', space=vmem, size = 0x8000, scoped, tag = 'output window, operand 0']
    %15 = vsyncpa [#allocation3], 0
    %s16 = scalar_lea.sflag [#allocation3], 1
    %17 = vsyncpa %s16, 0
    %18 = vsyncpa [#allocation6], 0
    %19 = vsyncpa [#allocation4], 0
    %s20 = scalar_lea.sflag [#allocation4], 1
    %21 = vsyncpa %s20, 0
    loop: start=0, step=1, limit=6
    $region2: #{tpu_custom_call.1} parent=1 // loop_pre_header
      _
    $region3: #{tpu_custom_call.1} parent=1 // loop_header
      %s23 = sphi 0, %s27
      %p24 = scmp.ge.s32.totalorder %s23, 6
      %s33 = sphi 0, %s35
      %s36 = sphi 0, %s33
      %s37 = sphi 0, %s36
      %s53 = sphi 0, %s37
      %s57 = sphi 0, %s57
      %s59 = sphi 0, %s57
      %s60 = sphi 0, %s59
      %s74 = sphi 0, %s60
      %s78 = sphi 0, %s78
      %s80 = sphi 0, %s78
      %s81 = sphi 0, %s80
      %s95 = sphi 0, %s81
      %s99 = sphi 0, %s99
      %s101 = sphi 0, %s99
      %s102 = sphi 0, %s101
      %s116 = sphi 0, %s102
      %s120 = sphi 0, %s120
      %s122 = sphi 0, %s120
      %s123 = sphi 0, %s122
      %s137 = sphi 0, %s123
      %s141 = sphi 0, %s141
      %s143 = sphi 0, %s141
      %s144 = sphi 0, %s143
      %s158 = sphi 0, %s144
      %s162 = sphi 0, %s162
      %s164 = sphi 0, %s162
      %s165 = sphi 0, %s164
      %s179 = sphi 0, %s165
      %s183 = sphi 0, %s183
      %s185 = sphi 0, %s183
      %s186 = sphi 0, %s185
      %s200 = sphi 0, %s186
      %s204 = sphi 0, %s204
      %s206 = sphi 0, %s204
      %s207 = sphi 0, %s206
      %s221 = sphi 0, %s207
      %s225 = sphi 0, %s225
      %s227 = sphi 0, %s225
      %s228 = sphi 0, %s227
      %s242 = sphi 0, %s228
      %s248 = sphi 0, %s250
      %s251 = sphi 0, %s248
      %s252 = sphi 0, %s251
      %s268 = sphi 0, %s252
    $region4: #{tpu_custom_call.1} parent=1 // loop_header_branch
      %26 = sbr.rel (%p24) target = $region8
    $region5: #{tpu_custom_call.1} parent=1 // loop_body
      %s28 = ssub.s32 %s23, 1
      %s29 = ssub.s32 %s23, 2
      %s30 = sadd.s32 %s23, 1
      %s31 = ssub.s32 %s23, %s30
      %p32 = scmp.eq.s32.totalorder %s31, 0
      %s34 = sadd.s32 %s33, 1
      %s35 = scalar_select %p32, %s33, %s34
      %p38 = pneg %p32
      %p39 = scmp.eq.s32.totalorder %s23, 3
      %p40 = por %p38, %p39
      %p41 = scmp.ne.s32.totalorder %s33, %s36
      %p42 = scmp.eq.s32.totalorder %s23, 0
      %p43 = por %p41, %p42
      %p44 = scmp.ne.s32.totalorder %s33, %s36
      %p45 = scmp.eq.s32.totalorder %s28, 3
      %p46 = por %p44, %p45
      %p47 = scmp.ne.s32.totalorder %s36, %s37
      %p48 = scmp.eq.s32.totalorder %s28, 0
      %p49 = por %p47, %p48
      %p50 = scmp.ne.s32.totalorder %s36, %s37
      %p51 = scmp.eq.s32.totalorder %s29, 3
      %p52 = por %p50, %p51
      %p54 = scmp.ne.s32.totalorder %s37, %s53
      %p55 = scmp.eq.s32.totalorder %s29, 0
      %p56 = por %p54, %p55
      %s58 = sadd.s32 %s57, 1
      %p61 = scmp.eq.s32.totalorder %s23, 3
      %p62 = scmp.ne.s32.totalorder %s57, %s59
      %p63 = scmp.eq.s32.totalorder %s23, 0
      %p64 = por %p62, %p63
      %p65 = scmp.ne.s32.totalorder %s57, %s59
      %p66 = scmp.eq.s32.totalorder %s28, 3
      %p67 = por %p65, %p66
      %p68 = scmp.ne.s32.totalorder %s59, %s60
      %p69 = scmp.eq.s32.totalorder %s28, 0
      %p70 = por %p68, %p69
      %p71 = scmp.ne.s32.totalorder %s59, %s60
      %p72 = scmp.eq.s32.totalorder %s29, 3
      %p73 = por %p71, %p72
      %p75 = scmp.ne.s32.totalorder %s60, %s74
      %p76 = scmp.eq.s32.totalorder %s29, 0
      %p77 = por %p75, %p76
      %s79 = sadd.s32 %s78, 1
      %p82 = scmp.eq.s32.totalorder %s23, 3
      %p83 = scmp.ne.s32.totalorder %s78, %s80
      %p84 = scmp.eq.s32.totalorder %s23, 0
      %p85 = por %p83, %p84
      %p86 = scmp.ne.s32.totalorder %s78, %s80
      %p87 = scmp.eq.s32.totalorder %s28, 3
      %p88 = por %p86, %p87
      %p89 = scmp.ne.s32.totalorder %s80, %s81
      %p90 = scmp.eq.s32.totalorder %s28, 0
      %p91 = por %p89, %p90
      %p92 = scmp.ne.s32.totalorder %s80, %s81
      %p93 = scmp.eq.s32.totalorder %s29, 3
      %p94 = por %p92, %p93
      %p96 = scmp.ne.s32.totalorder %s81, %s95
      %p97 = scmp.eq.s32.totalorder %s29, 0
      %p98 = por %p96, %p97
      %s100 = sadd.s32 %s99, 1
      %p103 = scmp.eq.s32.totalorder %s23, 3
      %p104 = scmp.ne.s32.totalorder %s99, %s101
      %p105 = scmp.eq.s32.totalorder %s23, 0
      %p106 = por %p104, %p105
      %p107 = scmp.ne.s32.totalorder %s99, %s101
      %p108 = scmp.eq.s32.totalorder %s28, 3
      %p109 = por %p107, %p108
      %p110 = scmp.ne.s32.totalorder %s101, %s102
      %p111 = scmp.eq.s32.totalorder %s28, 0
      %p112 = por %p110, %p111
      %p113 = scmp.ne.s32.totalorder %s101, %s102
      %p114 = scmp.eq.s32.totalorder %s29, 3
      %p115 = por %p113, %p114
      %p117 = scmp.ne.s32.totalorder %s102, %s116
      %p118 = scmp.eq.s32.totalorder %s29, 0
      %p119 = por %p117, %p118
      %s121 = sadd.s32 %s120, 1
      %p124 = scmp.eq.s32.totalorder %s23, 3
      %p125 = scmp.ne.s32.totalorder %s120, %s122
      %p126 = scmp.eq.s32.totalorder %s23, 0
      %p127 = por %p125, %p126
      %p128 = scmp.ne.s32.totalorder %s120, %s122
      %p129 = scmp.eq.s32.totalorder %s28, 3
      %p130 = por %p128, %p129
      %p131 = scmp.ne.s32.totalorder %s122, %s123
      %p132 = scmp.eq.s32.totalorder %s28, 0
      %p133 = por %p131, %p132
      %p134 = scmp.ne.s32.totalorder %s122, %s123
      %p135 = scmp.eq.s32.totalorder %s29, 3
      %p136 = por %p134, %p135
      %p138 = scmp.ne.s32.totalorder %s123, %s137
      %p139 = scmp.eq.s32.totalorder %s29, 0
      %p140 = por %p138, %p139
      %s142 = sadd.s32 %s141, 1
      %p145 = scmp.eq.s32.totalorder %s23, 3
      %p146 = scmp.ne.s32.totalorder %s141, %s143
      %p147 = scmp.eq.s32.totalorder %s23, 0
      %p148 = por %p146, %p147
      %p149 = scmp.ne.s32.totalorder %s141, %s143
      %p150 = scmp.eq.s32.totalorder %s28, 3
      %p151 = por %p149, %p150
      %p152 = scmp.ne.s32.totalorder %s143, %s144
      %p153 = scmp.eq.s32.totalorder %s28, 0
      %p154 = por %p152, %p153
      %p155 = scmp.ne.s32.totalorder %s143, %s144
      %p156 = scmp.eq.s32.totalorder %s29, 3
      %p157 = por %p155, %p156
      %p159 = scmp.ne.s32.totalorder %s144, %s158
      %p160 = scmp.eq.s32.totalorder %s29, 0
      %p161 = por %p159, %p160
      %s163 = sadd.s32 %s162, 1
      %p166 = scmp.eq.s32.totalorder %s23, 3
      %p167 = scmp.ne.s32.totalorder %s162, %s164
      %p168 = scmp.eq.s32.totalorder %s23, 0
      %p169 = por %p167, %p168
      %p170 = scmp.ne.s32.totalorder %s162, %s164
      %p171 = scmp.eq.s32.totalorder %s28, 3
      %p172 = por %p170, %p171
      %p173 = scmp.ne.s32.totalorder %s164, %s165
      %p174 = scmp.eq.s32.totalorder %s28, 0
      %p175 = por %p173, %p174
      %p176 = scmp.ne.s32.totalorder %s164, %s165
      %p177 = scmp.eq.s32.totalorder %s29, 3
      %p178 = por %p176, %p177
      %p180 = scmp.ne.s32.totalorder %s165, %s179
      %p181 = scmp.eq.s32.totalorder %s29, 0
      %p182 = por %p180, %p181
      %s184 = sadd.s32 %s183, 1
      %p187 = scmp.eq.s32.totalorder %s23, 3
      %p188 = scmp.ne.s32.totalorder %s183, %s185
      %p189 = scmp.eq.s32.totalorder %s23, 0
      %p190 = por %p188, %p189
      %p191 = scmp.ne.s32.totalorder %s183, %s185
      %p192 = scmp.eq.s32.totalorder %s28, 3
      %p193 = por %p191, %p192
      %p194 = scmp.ne.s32.totalorder %s185, %s186
      %p195 = scmp.eq.s32.totalorder %s28, 0
      %p196 = por %p194, %p195
      %p197 = scmp.ne.s32.totalorder %s185, %s186
      %p198 = scmp.eq.s32.totalorder %s29, 3
      %p199 = por %p197, %p198
      %p201 = scmp.ne.s32.totalorder %s186, %s200
      %p202 = scmp.eq.s32.totalorder %s29, 0
      %p203 = por %p201, %p202
      %s205 = sadd.s32 %s204, 1
      %p208 = scmp.eq.s32.totalorder %s23, 3
      %p209 = scmp.ne.s32.totalorder %s204, %s206
      %p210 = scmp.eq.s32.totalorder %s23, 0
      %p211 = por %p209, %p210
      %p212 = scmp.ne.s32.totalorder %s204, %s206
      %p213 = scmp.eq.s32.totalorder %s28, 3
      %p214 = por %p212, %p213
      %p215 = scmp.ne.s32.totalorder %s206, %s207
      %p216 = scmp.eq.s32.totalorder %s28, 0
      %p217 = por %p215, %p216
      %p218 = scmp.ne.s32.totalorder %s206, %s207
      %p219 = scmp.eq.s32.totalorder %s29, 3
      %p220 = por %p218, %p219
      %p222 = scmp.ne.s32.totalorder %s207, %s221
      %p223 = scmp.eq.s32.totalorder %s29, 0
      %p224 = por %p222, %p223
      %s226 = sadd.s32 %s225, 1
      %p229 = scmp.eq.s32.totalorder %s23, 3
      %p230 = scmp.ne.s32.totalorder %s225, %s227
      %p231 = scmp.eq.s32.totalorder %s23, 0
      %p232 = por %p230, %p231
      %p233 = scmp.ne.s32.totalorder %s225, %s227
      %p234 = scmp.eq.s32.totalorder %s28, 3
      %p235 = por %p233, %p234
      %p236 = scmp.ne.s32.totalorder %s227, %s228
      %p237 = scmp.eq.s32.totalorder %s28, 0
      %p238 = por %p236, %p237
      %p239 = scmp.ne.s32.totalorder %s227, %s228
      %p240 = scmp.eq.s32.totalorder %s29, 3
      %p241 = por %p239, %p240
      %p243 = scmp.ne.s32.totalorder %s228, %s242
      %p244 = scmp.eq.s32.totalorder %s29, 0
      %p245 = por %p243, %p244
      %s246 = ssub.s32 %s23, %s30
      %p247 = scmp.eq.s32.totalorder %s246, 0
      %s249 = sadd.s32 %s248, 1
      %s250 = scalar_select %p247, %s248, %s249
      %p253 = pneg %p247
      %p254 = scmp.eq.s32.totalorder %s23, 3
      %p255 = por %p253, %p254
      %p256 = scmp.ne.s32.totalorder %s248, %s251
      %p257 = scmp.eq.s32.totalorder %s23, 0
      %p258 = por %p256, %p257
      %p259 = scmp.ne.s32.totalorder %s248, %s251
      %p260 = scmp.eq.s32.totalorder %s28, 3
      %p261 = por %p259, %p260
      %p262 = scmp.ne.s32.totalorder %s251, %s252
      %p263 = scmp.eq.s32.totalorder %s28, 0
      %p264 = por %p262, %p263
      %p265 = scmp.ne.s32.totalorder %s251, %s252
      %p266 = scmp.eq.s32.totalorder %s29, 3
      %p267 = por %p265, %p266
      %p269 = scmp.ne.s32.totalorder %s252, %s268
      %p270 = scmp.eq.s32.totalorder %s29, 0
      %p271 = por %p269, %p270
      %p272 = scmp.le.s32.totalorder 1, %s23
      %p273 = scmp.lt.s32.totalorder %s23, 5
      %p274 = pnand %p272, %p273
      %p275 = pneg %p274
      // Predicated region
      $region9: #{tpu_custom_call.1} parent=5 // pred_check
        _
      $region10: #{tpu_custom_call.1} parent=5 // pred_check_branch
        %277 = sbr.rel (%p274) target = $region12
      $region11: #{tpu_custom_call.1} parent=5 // pred_region
        %s278 = ssub.s32 %s23, 1
        // Predicated region
        $region13: #{tpu_custom_call.1} parent=11 // pred_check
          %p279 = pneg %p70
        $region14: #{tpu_custom_call.1} parent=11 // pred_check_branch
          %281 = sbr.rel (%p279) target = $region16
        $region15: #{tpu_custom_call.1} parent=11 // pred_region
          %s283 = ssub.s32 4096, 4096
          %284 = vsyncadd [#allocation6], %s283
          %s285 = sshll.u32 [#allocation5], 4
          %s286 = int_to_ptr.vmem [resolvable:$true] %s285
          %291 = dma.hbm_to_vmem [thread:$0]  %s1, 4096, %s286, [#allocation6], 256, 256, 16
        $region16: #{tpu_custom_call.1} parent=11 // pred_fallthru
          _
        // Predicated region
        $region17: #{tpu_custom_call.1} parent=11 // pred_check
          %p292 = pneg %p91
        $region18: #{tpu_custom_call.1} parent=11 // pred_check_branch
          %294 = sbr.rel (%p292) target = $region20
        $region19: #{tpu_custom_call.1} parent=11 // pred_region
          %s296 = ssub.s32 4096, 4096
          %297 = vsyncadd [#allocation6], %s296
          %s298 = sshll.u32 [#allocation7], 4
          %s299 = int_to_ptr.vmem [resolvable:$true] %s298
          %304 = dma.hbm_to_vmem [thread:$0]  %s2, 4096, %s299, [#allocation6], 256, 256, 16
        $region20: #{tpu_custom_call.1} parent=11 // pred_fallthru
          _
        // Predicated region
        $region21: #{tpu_custom_call.1} parent=11 // pred_check
          %p305 = pneg %p112
        $region22: #{tpu_custom_call.1} parent=11 // pred_check_branch
          %307 = sbr.rel (%p305) target = $region24
        $region23: #{tpu_custom_call.1} parent=11 // pred_region
          _
        $region24: #{tpu_custom_call.1} parent=11 // pred_fallthru
          _
        // Predicated region
        $region25: #{tpu_custom_call.1} parent=11 // pred_check
          %p308 = pneg %p133
        $region26: #{tpu_custom_call.1} parent=11 // pred_check_branch
          %310 = sbr.rel (%p308) target = $region28
        $region27: #{tpu_custom_call.1} parent=11 // pred_region
          _
        $region28: #{tpu_custom_call.1} parent=11 // pred_fallthru
          _
        // Predicated region
        $region29: #{tpu_custom_call.1} parent=11 // pred_check
          %p311 = pneg %p154
        $region30: #{tpu_custom_call.1} parent=11 // pred_check_branch
          %313 = sbr.rel (%p311) target = $region32
        $region31: #{tpu_custom_call.1} parent=11 // pred_region
          _
        $region32: #{tpu_custom_call.1} parent=11 // pred_fallthru
          _
        // Predicated region
        $region33: #{tpu_custom_call.1} parent=11 // pred_check
          %p314 = pneg %p175
        $region34: #{tpu_custom_call.1} parent=11 // pred_check_branch
          %316 = sbr.rel (%p314) target = $region36
        $region35: #{tpu_custom_call.1} parent=11 // pred_region
          _
        $region36: #{tpu_custom_call.1} parent=11 // pred_fallthru
          _
        // Predicated region
        $region37: #{tpu_custom_call.1} parent=11 // pred_check
          %p317 = pneg %p196
        $region38: #{tpu_custom_call.1} parent=11 // pred_check_branch
          %319 = sbr.rel (%p317) target = $region40
        $region39: #{tpu_custom_call.1} parent=11 // pred_region
          _
        $region40: #{tpu_custom_call.1} parent=11 // pred_fallthru
          _
        // Predicated region
        $region41: #{tpu_custom_call.1} parent=11 // pred_check
          %p320 = pneg %p217
        $region42: #{tpu_custom_call.1} parent=11 // pred_check_branch
          %322 = sbr.rel (%p320) target = $region44
        $region43: #{tpu_custom_call.1} parent=11 // pred_region
          _
        $region44: #{tpu_custom_call.1} parent=11 // pred_fallthru
          _
        // Predicated region
        $region45: #{tpu_custom_call.1} parent=11 // pred_check
          %p323 = pneg %p238
        $region46: #{tpu_custom_call.1} parent=11 // pred_check_branch
          %325 = sbr.rel (%p323) target = $region48
        $region47: #{tpu_custom_call.1} parent=11 // pred_region
          _
        $region48: #{tpu_custom_call.1} parent=11 // pred_fallthru
          _
      $region12: #{tpu_custom_call.1} parent=5 // pred_fallthru
        _
      %p326 = scmp.lt.s32.totalorder %s23, 4
      // Predicated region
      $region49: #{tpu_custom_call.1} parent=5 // pred_check
        %p327 = pneg %p326
      $region50: #{tpu_custom_call.1} parent=5 // pred_check_branch
        %329 = sbr.rel (%p327) target = $region52
      $region51: #{tpu_custom_call.1} parent=5 // pred_region
        // Predicated region
        $region53: #{tpu_custom_call.1} parent=51 // pred_check
          %p330 = pneg %p43
        $region54: #{tpu_custom_call.1} parent=51 // pred_check_branch
          %332 = sbr.rel (%p330) target = $region56
        $region55: #{tpu_custom_call.1} parent=51 // pred_region
          %s333 = sand.u32 %s33, 1
          %s334 = scalar_lea.sflag [#allocation3], %s333
          %s335 = sand.u32 %s33, 1
          %s336 = smul.addr %s335, 32
          %s337 = scalar_lea.vmem [#allocation2], %s336
          %s338 = smul.u32 2, %s23
          %s340 = ssub.s32 512, 512
          %341 = vsyncadd %s334, %s340
          %s342 = smul.addr %s338, 2
          %s343 = smul.addr %s342, 128
          %s344 = scalar_lea.hbm %s0, %s343
          %s345 = sshll.u32 %s337, 4
          %s346 = int_to_ptr.vmem [resolvable:$true] %s345
          %351 = dma.hbm_to_vmem [thread:$0]  %s344, 512, %s346, %s334, 128, 128, 8
        $region56: #{tpu_custom_call.1} parent=51 // pred_fallthru
          _
      $region52: #{tpu_custom_call.1} parent=5 // pred_fallthru
        _
      %p352 = scmp.le.s32.totalorder 1, %s23
      %p353 = scmp.lt.s32.totalorder %s23, 5
      %p354 = pnand %p352, %p353
      %p355 = pneg %p354
      // Predicated region
      $region57: #{tpu_custom_call.1} parent=5 // pred_check
        _
      $region58: #{tpu_custom_call.1} parent=5 // pred_check_branch
        %357 = sbr.rel (%p354) target = $region60
      $region59: #{tpu_custom_call.1} parent=5 // pred_region
        %s358 = ssub.s32 %s23, 1
        %s359 = sand.u32 %s36, 1
        %s360 = scalar_lea.sflag [#allocation3], %s359
        %s361 = sand.u32 %s36, 1
        %s362 = smul.addr %s361, 32
        %s363 = scalar_lea.vmem [#allocation2], %s362
        // Predicated region
        $region61: #{tpu_custom_call.1} parent=59 // pred_check
          %p364 = pneg %p49
        $region62: #{tpu_custom_call.1} parent=59 // pred_check_branch
          %366 = sbr.rel (%p364) target = $region64
        $region63: #{tpu_custom_call.1} parent=59 // pred_region
          %367 = dma.done %s360, 512
        $region64: #{tpu_custom_call.1} parent=59 // pred_fallthru
          _
        // Predicated region
        $region65: #{tpu_custom_call.1} parent=59 // pred_check
          %p368 = pneg %p70
        $region66: #{tpu_custom_call.1} parent=59 // pred_check_branch
          %370 = sbr.rel (%p368) target = $region68
        $region67: #{tpu_custom_call.1} parent=59 // pred_region
          %371 = dma.done [#allocation6], 4096
        $region68: #{tpu_custom_call.1} parent=59 // pred_fallthru
          _
        // Predicated region
        $region69: #{tpu_custom_call.1} parent=59 // pred_check
          %p372 = pneg %p91
        $region70: #{tpu_custom_call.1} parent=59 // pred_check_branch
          %374 = sbr.rel (%p372) target = $region72
        $region71: #{tpu_custom_call.1} parent=59 // pred_region
          %375 = dma.done [#allocation6], 4096
        $region72: #{tpu_custom_call.1} parent=59 // pred_fallthru
          _
        %s376 = sand.u32 %s36, 1
        %s377 = scalar_lea.sflag [#allocation3], %s376
        %s378 = sand.u32 %s36, 1
        %s379 = smul.addr %s378, 32
        %s380 = scalar_lea.vmem [#allocation2], %s379
        %p381 = pneg %p49
        %p382 = pneg %p46
        %p383 = pneg %p70
        %p384 = pneg %p67
        %p385 = pneg %p91
        %p386 = pneg %p88
        %p387 = pneg %p112
        %p388 = pneg %p109
        %p389 = pneg %p133
        %p390 = pneg %p130
        %p391 = pneg %p154
        %p392 = pneg %p151
        %p393 = pneg %p175
        %p394 = pneg %p172
        %p395 = pneg %p196
        %p396 = pneg %p193
        %p397 = pneg %p217
        %p398 = pneg %p214
        %p399 = pneg %p238
        %p400 = pneg %p235
        %p401 = pneg %p264
        %p402 = pneg %p261
        %s403 = sand.u32 %s251, 1
        %s404 = scalar_lea.sflag [#allocation4], %s403
        %s405 = sand.u32 %s251, 1
        %s406 = smul.addr %s405, 32
        %s407 = scalar_lea.vmem [#allocation8], %s406
        %s408 = smul.u32 2, %s28
        %s409 = smul.u32 2, %s28
        %v410 = vld [vmem:[%s363] sm:$0xff]
        %v411 = vld [vmem:[%s363 + $0x8] sm:$0xff]
        %v412 = vld [vmem:[%s363 + $0x10] sm:$0xff]
        %v413 = vld [vmem:[%s363 + $0x18] sm:$0xff]
        %v414 = vld [vmem:[%s5] sm:$0xff]
        %v415 = vld [vmem:[%s5 + $0x8] sm:$0xff]
        %v416 = vld [vmem:[%s5 + $0x10] sm:$0xff]
        %v417 = vld [vmem:[%s5 + $0x18] sm:$0xff]
        %v418 = vld [vmem:[%s6] sm:$0xff]
        %v419 = vld [vmem:[%s6 + $0x8] sm:$0xff]
        %v420 = vld [vmem:[%s6 + $0x10] sm:$0xff]
        %v421 = vld [vmem:[%s6 + $0x18] sm:$0xff]
        %423 = vset.pattern.permute.xlu0 0
        %424 = vperm.xlu0 %423, %v418
        %v425 = vpop.permute.xlu0 %424
        %428 = vset.pattern.permute.xlu0 0
        %429 = vperm.xlu0 %428, %v419
        %v430 = vpop.permute.xlu0 %429
        %433 = vset.pattern.permute.xlu0 0
        %434 = vperm.xlu0 %433, %v420
        %v435 = vpop.permute.xlu0 %434
        %438 = vset.pattern.permute.xlu0 0
        %439 = vperm.xlu0 %438, %v421
        %v440 = vpop.permute.xlu0 %439
        %vm442 = vcmask 261120
        %v444 = vsel %vm442, %v414, 0
        %v447 = vsel %vm442, %v415, 0
        %v450 = vsel %vm442, %v416, 0
        %v453 = vsel %vm442, %v417, 0
        %455 = vmatprep.subr.mxu0 0.0
        %456 = vmatpush1.msra.mxu0 %v410
        %457 = vmatprep.subr.mxu0 0.0
        %458 = vmatpush1.msra.mxu0 %v411
        %459 = vmatprep.subr.mxu0 0.0
        %460 = vmatpush1.msra.mxu0 %v412
        %461 = vmatprep.subr.mxu0 0.0
        %462 = vmatpush1.msra.mxu0 %v413
        %463 = vmatprep.subr.mxu0 0.0
        %464 = vmatpush1.msra.mxu0 0.0
        %465 = vmatprep.subr.mxu0 0.0
        %466 = vmatpush1.msra.mxu0 0.0
        %467 = vmatprep.subr.mxu0 0.0
        %468 = vmatpush1.msra.mxu0 0.0
        %469 = vmatprep.subr.mxu0 0.0
        %470 = vmatpush1.msra.mxu0 0.0
        %471 = vmatprep.subr.mxu0 0.0
        %472 = vmatpush1.msra.mxu0 0.0
        %473 = vmatprep.subr.mxu0 0.0
        %474 = vmatpush1.msra.mxu0 0.0
        %475 = vmatprep.subr.mxu0 0.0
        %476 = vmatpush1.msra.mxu0 0.0
        %477 = vmatprep.subr.mxu0 0.0
        %478 = vmatpush1.msra.mxu0 0.0
        %479 = vmatprep.subr.mxu0 0.0
        %480 = vmatpush1.msra.mxu0 0.0
        %481 = vmatprep.subr.mxu0 0.0
        %482 = vmatpush1.msra.mxu0 0.0
        %483 = vmatprep.subr.mxu0 0.0
        %484 = vmatpush1.msra.mxu0 0.0
        %485 = vmatprep.subr.mxu0 0.0
        %486 = vmatpush1.msra.mxu0 0.0
        %487 = vmatprep.subr.mxu0 0.0
        %488 = vmatpush1.msra.mxu0 0.0
        %489 = vmatprep.subr.mxu0 0.0
        %490 = vmatpush1.msra.mxu0 0.0
        %491 = vmatprep.subr.mxu0 0.0
        %492 = vmatpush1.msra.mxu0 0.0
        %493 = vmatprep.subr.mxu0 0.0
        %494 = vmatpush1.msra.mxu0 0.0
        %495 = vmatprep.subr.mxu0 0.0
        %496 = vmatpush1.msra.mxu0 0.0
        %497 = vmatprep.subr.mxu0 0.0
        %498 = vmatpush1.msra.mxu0 0.0
        %499 = vmatprep.subr.mxu0 0.0
        %500 = vmatpush1.msra.mxu0 0.0
        %501 = vmatprep.subr.mxu0 0.0
        %502 = vmatpush1.msra.mxu0 0.0
        %503 = vmatprep.subr.mxu0 0.0
        %504 = vmatpush1.msra.mxu0 0.0
        %505 = vmatprep.subr.mxu0 0.0
        %506 = vmatpush1.msra.mxu0 0.0
        %507 = vmatprep.subr.mxu0 0.0
        %508 = vmatpush1.msra.mxu0 0.0
        %509 = vmatprep.subr.mxu0 0.0
        %510 = vmatpush1.msra.mxu0 0.0
        %511 = vmatprep.subr.mxu0 0.0
        %512 = vmatpush1.msra.mxu0 0.0
        %513 = vmatprep.subr.mxu0 0.0
        %514 = vmatpush1.msra.mxu0 0.0
        %515 = vmatprep.subr.mxu0 0.0
        %516 = vmatpush1.msra.mxu0 0.0
        %517 = vmatprep.subr.mxu0 0.0
        %518 = vmatpush1.msra.mxu0 0.0
        %519 = vmatprep.mubr.f32.mxu0 0.0
        %520 = vmatmul.mubr.f32.gmra.mrb[0].mxu0 %v444
        %v521 = vpop.f32.mrb[0].mxu0
        %v522 = vadd.f32 %v425, %v521
        %v523 = vpop.f32.mrb[0].mxu0
        %524 = vmatprep.mubr.f32.mxu0 0.0
        %525 = vmatmul.mubr.f32.gmra.mrb[0].mxu0 %v447
        %v526 = vpop.f32.mrb[0].mxu0
        %v527 = vadd.f32 %v430, %v526
        %v528 = vpop.f32.mrb[0].mxu0
        %529 = vmatprep.mubr.f32.mxu0 0.0
        %530 = vmatmul.mubr.f32.gmra.mrb[0].mxu0 %v450
        %v531 = vpop.f32.mrb[0].mxu0
        %v532 = vadd.f32 %v435, %v531
        %v533 = vpop.f32.mrb[0].mxu0
        %534 = vmatprep.mubr.f32.mxu0 0.0
        %535 = vmatmul.mubr.f32.gmra.mrb[0].mxu0 %v453
        %v536 = vpop.f32.mrb[0].mxu0
        %v537 = vadd.f32 %v440, %v536
        %v538 = vpop.f32.mrb[0].mxu0
        %539 = vdwg.mxu0
        %v540 = vld [vmem:[%s3] sm:$0xff]
        %v542 = vsel %vm442, %v540, 0
        %544 = vmatprep.subr.mxu0 0.0
        %545 = vmatpush1.msra.mxu0 %v410
        %546 = vmatprep.subr.mxu0 0.0
        %547 = vmatpush1.msra.mxu0 %v411
        %548 = vmatprep.subr.mxu0 0.0
        %549 = vmatpush1.msra.mxu0 %v412
        %550 = vmatprep.subr.mxu0 0.0
        %551 = vmatpush1.msra.mxu0 %v413
        %552 = vmatprep.subr.mxu0 0.0
        %553 = vmatpush1.msra.mxu0 0.0
        %554 = vmatprep.subr.mxu0 0.0
        %555 = vmatpush1.msra.mxu0 0.0
        %556 = vmatprep.subr.mxu0 0.0
        %557 = vmatpush1.msra.mxu0 0.0
        %558 = vmatprep.subr.mxu0 0.0
        %559 = vmatpush1.msra.mxu0 0.0
        %560 = vmatprep.subr.mxu0 0.0
        %561 = vmatpush1.msra.mxu0 0.0
        %562 = vmatprep.subr.mxu0 0.0
        %563 = vmatpush1.msra.mxu0 0.0
        %564 = vmatprep.subr.mxu0 0.0
        %565 = vmatpush1.msra.mxu0 0.0
        %566 = vmatprep.subr.mxu0 0.0
        %567 = vmatpush1.msra.mxu0 0.0
        %568 = vmatprep.subr.mxu0 0.0
        %569 = vmatpush1.msra.mxu0 0.0
        %570 = vmatprep.subr.mxu0 0.0
        %571 = vmatpush1.msra.mxu0 0.0
        %572 = vmatprep.subr.mxu0 0.0
        %573 = vmatpush1.msra.mxu0 0.0
        %574 = vmatprep.subr.mxu0 0.0
        %575 = vmatpush1.msra.mxu0 0.0
        %576 = vmatprep.subr.mxu0 0.0
        %577 = vmatpush1.msra.mxu0 0.0
        %578 = vmatprep.subr.mxu0 0.0
        %579 = vmatpush1.msra.mxu0 0.0
        %580 = vmatprep.subr.mxu0 0.0
        %581 = vmatpush1.msra.mxu0 0.0
        %582 = vmatprep.subr.mxu0 0.0
        %583 = vmatpush1.msra.mxu0 0.0
        %584 = vmatprep.subr.mxu0 0.0
        %585 = vmatpush1.msra.mxu0 0.0
        %586 = vmatprep.subr.mxu0 0.0
        %587 = vmatpush1.msra.mxu0 0.0
        %588 = vmatprep.subr.mxu0 0.0
        %589 = vmatpush1.msra.mxu0 0.0
        %590 = vmatprep.subr.mxu0 0.0
        %591 = vmatpush1.msra.mxu0 0.0
        %592 = vmatprep.subr.mxu0 0.0
        %593 = vmatpush1.msra.mxu0 0.0
        %594 = vmatprep.subr.mxu0 0.0
        %595 = vmatpush1.msra.mxu0 0.0
        %596 = vmatprep.subr.mxu0 0.0
        %597 = vmatpush1.msra.mxu0 0.0
        %598 = vmatprep.subr.mxu0 0.0
        %599 = vmatpush1.msra.mxu0 0.0
        %600 = vmatprep.subr.mxu0 0.0
        %601 = vmatpush1.msra.mxu0 0.0
        %602 = vmatprep.subr.mxu0 0.0
        %603 = vmatpush1.msra.mxu0 0.0
        %604 = vmatprep.subr.mxu0 0.0
        %605 = vmatpush1.msra.mxu0 0.0
        %606 = vmatprep.subr.mxu0 0.0
        %607 = vmatpush1.msra.mxu0 0.0
        %608 = vmatprep.mubr.f32.mxu0 0.0
        %609 = vmatmul.mubr.f32.gmra.mrb[0].mxu0 %v542
        %v610 = vpop.f32.mrb[0].mxu0
        %v611 = vadd.f32 0.0, %v610
        %v612 = vpop.f32.mrb[0].mxu0
        %613 = vdwg.mxu0
        %v614 = vld [vmem:[#allocation5] sm:$0xff]
        %v615 = vld [vmem:[#allocation5 + $0x8] sm:$0xff]
        %v616 = vld [vmem:[#allocation5 + $0x10] sm:$0xff]
        %v617 = vld [vmem:[#allocation5 + $0x18] sm:$0xff]
        %v618 = vld [vmem:[#allocation5 + $0x20] sm:$0xff]
        %v619 = vld [vmem:[#allocation5 + $0x28] sm:$0xff]
        %v620 = vld [vmem:[#allocation5 + $0x30] sm:$0xff]
        %v621 = vld [vmem:[#allocation5 + $0x38] sm:$0xff]
        %v622 = vld [vmem:[#allocation5 + $0x40] sm:$0xff]
        %v623 = vld [vmem:[#allocation5 + $0x48] sm:$0xff]
        %v624 = vld [vmem:[#allocation5 + $0x50] sm:$0xff]
        %v625 = vld [vmem:[#allocation5 + $0x58] sm:$0xff]
        %v626 = vld [vmem:[#allocation5 + $0x60] sm:$0xff]
        %v627 = vld [vmem:[#allocation5 + $0x68] sm:$0xff]
        %v628 = vld [vmem:[#allocation5 + $0x70] sm:$0xff]
        %v629 = vld [vmem:[#allocation5 + $0x78] sm:$0xff]
        %v630 = vld [vmem:[#allocation5 + $0x80] sm:$0xff]
        %v631 = vld [vmem:[#allocation5 + $0x88] sm:$0xff]
        %v632 = vld [vmem:[#allocation5 + $0x90] sm:$0xff]
        %v633 = vld [vmem:[#allocation5 + $0x98] sm:$0xff]
        %v634 = vld [vmem:[#allocation5 + $0xa0] sm:$0xff]
        %v635 = vld [vmem:[#allocation5 + $0xa8] sm:$0xff]
        %v636 = vld [vmem:[#allocation5 + $0xb0] sm:$0xff]
        %v637 = vld [vmem:[#allocation5 + $0xb8] sm:$0xff]
        %v638 = vld [vmem:[#allocation5 + $0xc0] sm:$0xff]
        %v639 = vld [vmem:[#allocation5 + $0xc8] sm:$0xff]
        %v640 = vld [vmem:[#allocation5 + $0xd0] sm:$0xff]
        %v641 = vld [vmem:[#allocation5 + $0xd8] sm:$0xff]
        %v642 = vld [vmem:[#allocation5 + $0xe0] sm:$0xff]
        %v643 = vld [vmem:[#allocation5 + $0xe8] sm:$0xff]
        %v644 = vld [vmem:[#allocation5 + $0xf0] sm:$0xff]
        %v645 = vld [vmem:[#allocation5 + $0xf8] sm:$0xff]
        %646 = vmatprep.subr.mxu0 %v615
        %647 = vmatpush1.msra.mxu0 %v614
        %648 = vmatprep.subr.mxu0 %v617
        %649 = vmatpush1.msra.mxu0 %v616
        %650 = vmatprep.subr.mxu0 %v619
        %651 = vmatpush1.msra.mxu0 %v618
        %652 = vmatprep.subr.mxu0 %v621
        %653 = vmatpush1.msra.mxu0 %v620
        %654 = vmatprep.subr.mxu0 %v623
        %655 = vmatpush1.msra.mxu0 %v622
        %656 = vmatprep.subr.mxu0 %v625
        %657 = vmatpush1.msra.mxu0 %v624
        %658 = vmatprep.subr.mxu0 %v627
        %659 = vmatpush1.msra.mxu0 %v626
        %660 = vmatprep.subr.mxu0 %v629
        %661 = vmatpush1.msra.mxu0 %v628
        %662 = vmatprep.subr.mxu0 %v631
        %663 = vmatpush1.msra.mxu0 %v630
        %664 = vmatprep.subr.mxu0 %v633
        %665 = vmatpush1.msra.mxu0 %v632
        %666 = vmatprep.subr.mxu0 %v635
        %667 = vmatpush1.msra.mxu0 %v634
        %668 = vmatprep.subr.mxu0 %v637
        %669 = vmatpush1.msra.mxu0 %v636
        %670 = vmatprep.subr.mxu0 %v639
        %671 = vmatpush1.msra.mxu0 %v638
        %672 = vmatprep.subr.mxu0 %v641
        %673 = vmatpush1.msra.mxu0 %v640
        %674 = vmatprep.subr.mxu0 %v643
        %675 = vmatpush1.msra.mxu0 %v642
        %676 = vmatprep.subr.mxu0 %v645
        %677 = vmatpush1.msra.mxu0 %v644
        %678 = vmatprep.subr.mxu0 0.0
        %679 = vmatpush1.msra.mxu0 0.0
        %680 = vmatprep.subr.mxu0 0.0
        %681 = vmatpush1.msra.mxu0 0.0
        %682 = vmatprep.subr.mxu0 0.0
        %683 = vmatpush1.msra.mxu0 0.0
        %684 = vmatprep.subr.mxu0 0.0
        %685 = vmatpush1.msra.mxu0 0.0
        %686 = vmatprep.subr.mxu0 0.0
        %687 = vmatpush1.msra.mxu0 0.0
        %688 = vmatprep.subr.mxu0 0.0
        %689 = vmatpush1.msra.mxu0 0.0
        %690 = vmatprep.subr.mxu0 0.0
        %691 = vmatpush1.msra.mxu0 0.0
        %692 = vmatprep.subr.mxu0 0.0
        %693 = vmatpush1.msra.mxu0 0.0
        %694 = vmatprep.subr.mxu0 0.0
        %695 = vmatpush1.msra.mxu0 0.0
        %696 = vmatprep.subr.mxu0 0.0
        %697 = vmatpush1.msra.mxu0 0.0
        %698 = vmatprep.subr.mxu0 0.0
        %699 = vmatpush1.msra.mxu0 0.0
        %700 = vmatprep.subr.mxu0 0.0
        %701 = vmatpush1.msra.mxu0 0.0
        %702 = vmatprep.subr.mxu0 0.0
        %703 = vmatpush1.msra.mxu0 0.0
        %704 = vmatprep.subr.mxu0 0.0
        %705 = vmatpush1.msra.mxu0 0.0
        %706 = vmatprep.subr.mxu0 0.0
        %707 = vmatpush1.msra.mxu0 0.0
        %708 = vmatprep.subr.mxu0 0.0
        %709 = vmatpush1.msra.mxu0 0.0
        %710 = vmatprep.mubr.f32.mxu0 0.0
        %711 = vmatmul.mubr.f32.gmra.mrb[0].mxu0 %v611
        %v712 = vpop.f32.mrb[0].mxu0
        %v713 = vadd.f32 0.0, %v712
        %v714 = vpop.f32.mrb[0].mxu0
        %v715 = vadd.f32 0.0, %v714
        %716 = vdwg.mxu0
        %v717 = vld [vmem:[#allocation7] sm:$0xff]
        %v718 = vld [vmem:[#allocation7 + $0x8] sm:$0xff]
        %v719 = vld [vmem:[#allocation7 + $0x10] sm:$0xff]
        %v720 = vld [vmem:[#allocation7 + $0x18] sm:$0xff]
        %v721 = vld [vmem:[#allocation7 + $0x20] sm:$0xff]
        %v722 = vld [vmem:[#allocation7 + $0x28] sm:$0xff]
        %v723 = vld [vmem:[#allocation7 + $0x30] sm:$0xff]
        %v724 = vld [vmem:[#allocation7 + $0x38] sm:$0xff]
        %v725 = vld [vmem:[#allocation7 + $0x40] sm:$0xff]
        %v726 = vld [vmem:[#allocation7 + $0x48] sm:$0xff]
        %v727 = vld [vmem:[#allocation7 + $0x50] sm:$0xff]
        %v728 = vld [vmem:[#allocation7 + $0x58] sm:$0xff]
        %v729 = vld [vmem:[#allocation7 + $0x60] sm:$0xff]
        %v730 = vld [vmem:[#allocation7 + $0x68] sm:$0xff]
        %v731 = vld [vmem:[#allocation7 + $0x70] sm:$0xff]
        %v732 = vld [vmem:[#allocation7 + $0x78] sm:$0xff]
        %v733 = vld [vmem:[#allocation7 + $0x80] sm:$0xff]
        %v734 = vld [vmem:[#allocation7 + $0x88] sm:$0xff]
        %v735 = vld [vmem:[#allocation7 + $0x90] sm:$0xff]
        %v736 = vld [vmem:[#allocation7 + $0x98] sm:$0xff]
        %v737 = vld [vmem:[#allocation7 + $0xa0] sm:$0xff]
        %v738 = vld [vmem:[#allocation7 + $0xa8] sm:$0xff]
        %v739 = vld [vmem:[#allocation7 + $0xb0] sm:$0xff]
        %v740 = vld [vmem:[#allocation7 + $0xb8] sm:$0xff]
        %v741 = vld [vmem:[#allocation7 + $0xc0] sm:$0xff]
        %v742 = vld [vmem:[#allocation7 + $0xc8] sm:$0xff]
        %v743 = vld [vmem:[#allocation7 + $0xd0] sm:$0xff]
        %v744 = vld [vmem:[#allocation7 + $0xd8] sm:$0xff]
        %v745 = vld [vmem:[#allocation7 + $0xe0] sm:$0xff]
        %v746 = vld [vmem:[#allocation7 + $0xe8] sm:$0xff]
        %v747 = vld [vmem:[#allocation7 + $0xf0] sm:$0xff]
        %v748 = vld [vmem:[#allocation7 + $0xf8] sm:$0xff]
        %v750 = vrot.slane %v611, 4
        %752 = vmatprep.subr.mxu0 %v718
        %753 = vmatpush1.msra.mxu0 %v717
        %754 = vmatprep.subr.mxu0 %v720
        %755 = vmatpush1.msra.mxu0 %v719
        %756 = vmatprep.subr.mxu0 %v722
        %757 = vmatpush1.msra.mxu0 %v721
        %758 = vmatprep.subr.mxu0 %v724
        %759 = vmatpush1.msra.mxu0 %v723
        %760 = vmatprep.subr.mxu0 %v726
        %761 = vmatpush1.msra.mxu0 %v725
        %762 = vmatprep.subr.mxu0 %v728
        %763 = vmatpush1.msra.mxu0 %v727
        %764 = vmatprep.subr.mxu0 %v730
        %765 = vmatpush1.msra.mxu0 %v729
        %766 = vmatprep.subr.mxu0 %v732
        %767 = vmatpush1.msra.mxu0 %v731
        %768 = vmatprep.subr.mxu0 %v734
        %769 = vmatpush1.msra.mxu0 %v733
        %770 = vmatprep.subr.mxu0 %v736
        %771 = vmatpush1.msra.mxu0 %v735
        %772 = vmatprep.subr.mxu0 %v738
        %773 = vmatpush1.msra.mxu0 %v737
        %774 = vmatprep.subr.mxu0 %v740
        %775 = vmatpush1.msra.mxu0 %v739
        %776 = vmatprep.subr.mxu0 %v742
        %777 = vmatpush1.msra.mxu0 %v741
        %778 = vmatprep.subr.mxu0 %v744
        %779 = vmatpush1.msra.mxu0 %v743
        %780 = vmatprep.subr.mxu0 %v746
        %781 = vmatpush1.msra.mxu0 %v745
        %782 = vmatprep.subr.mxu0 %v748
        %783 = vmatpush1.msra.mxu0 %v747
        %784 = vmatprep.subr.mxu0 0.0
        %785 = vmatpush1.msra.mxu0 0.0
        %786 = vmatprep.subr.mxu0 0.0
        %787 = vmatpush1.msra.mxu0 0.0
        %788 = vmatprep.subr.mxu0 0.0
        %789 = vmatpush1.msra.mxu0 0.0
        %790 = vmatprep.subr.mxu0 0.0
        %791 = vmatpush1.msra.mxu0 0.0
        %792 = vmatprep.subr.mxu0 0.0
        %793 = vmatpush1.msra.mxu0 0.0
        %794 = vmatprep.subr.mxu0 0.0
        %795 = vmatpush1.msra.mxu0 0.0
        %796 = vmatprep.subr.mxu0 0.0
        %797 = vmatpush1.msra.mxu0 0.0
        %798 = vmatprep.subr.mxu0 0.0
        %799 = vmatpush1.msra.mxu0 0.0
        %800 = vmatprep.subr.mxu0 0.0
        %801 = vmatpush1.msra.mxu0 0.0
        %802 = vmatprep.subr.mxu0 0.0
        %803 = vmatpush1.msra.mxu0 0.0
        %804 = vmatprep.subr.mxu0 0.0
        %805 = vmatpush1.msra.mxu0 0.0
        %806 = vmatprep.subr.mxu0 0.0
        %807 = vmatpush1.msra.mxu0 0.0
        %808 = vmatprep.subr.mxu0 0.0
        %809 = vmatpush1.msra.mxu0 0.0
        %810 = vmatprep.subr.mxu0 0.0
        %811 = vmatpush1.msra.mxu0 0.0
        %812 = vmatprep.subr.mxu0 0.0
        %813 = vmatpush1.msra.mxu0 0.0
        %814 = vmatprep.subr.mxu0 0.0
        %815 = vmatpush1.msra.mxu0 0.0
        %816 = vmatprep.mubr.f32.mxu0 0.0
        %817 = vmatmul.mubr.f32.gmra.mrb[0].mxu0 %v750
        %v818 = vpop.f32.mrb[0].mxu0
        %v819 = vadd.f32 0.0, %v818
        %v820 = vpop.f32.mrb[0].mxu0
        %v821 = vadd.f32 0.0, %v820
        %822 = vdwg.mxu0
        %v823 = vsub.f32 %v713, %v819
        %v824 = vsub.f32 %v715, %v821
        %v825 = vld [vmem:[%s4] sm:$0xf]
        %827 = vset.pattern.permute.xlu0 0
        %828 = vperm.xlu0 %827, %v825
        %v829 = vpop.permute.xlu0 %828
        %v831 = vadd.f32 %v823, %v829
        %v832 = vadd.f32 %v824, %v829
        %v833 = vtanh.pop %v831
        %v834 = vtanh.pop %v832
        %v835 = vld [vmem:[%s7] sm:$0xff]
        %v836 = vld [vmem:[%s7 + $0x8] sm:$0xff]
        %v837 = vld [vmem:[%s7 + $0x10] sm:$0xff]
        %v838 = vld [vmem:[%s7 + $0x18] sm:$0xff]
        %v839 = vld [vmem:[%s8] sm:$0xff]
        %v840 = vld [vmem:[%s8 + $0x8] sm:$0xff]
        %v841 = vld [vmem:[%s8 + $0x10] sm:$0xff]
        %v842 = vld [vmem:[%s8 + $0x18] sm:$0xff]
        %844 = vset.pattern.permute.xlu0 0
        %845 = vperm.xlu0 %844, %v839
        %v846 = vpop.permute.xlu0 %845
        %849 = vset.pattern.permute.xlu0 0
        %850 = vperm.xlu0 %849, %v840
        %v851 = vpop.permute.xlu0 %850
        %854 = vset.pattern.permute.xlu0 0
        %855 = vperm.xlu0 %854, %v841
        %v856 = vpop.permute.xlu0 %855
        %859 = vset.pattern.permute.xlu0 0
        %860 = vperm.xlu0 %859, %v842
        %v861 = vpop.permute.xlu0 %860
        %vm863 = vcmask 31744
        %v865 = vsel %vm863, %v835, 0
        %v868 = vsel %vm863, %v836, 0
        %v871 = vsel %vm863, %v837, 0
        %v874 = vsel %vm863, %v838, 0
        %vm876 = vcmask 1043456
        %v878 = vsel %vm876, %v833, 0
        %v881 = vsel %vm876, %v834, 0
        %883 = vmatprep.subr.mxu0 %v881
        %884 = vmatpush1.msra.mxu0 %v878
        %885 = vmatprep.subr.mxu0 0.0
        %886 = vmatpush1.msra.mxu0 0.0
        %887 = vmatprep.subr.mxu0 0.0
        %888 = vmatpush1.msra.mxu0 0.0
        %889 = vmatprep.subr.mxu0 0.0
        %890 = vmatpush1.msra.mxu0 0.0
        %891 = vmatprep.subr.mxu0 0.0
        %892 = vmatpush1.msra.mxu0 0.0
        %893 = vmatprep.subr.mxu0 0.0
        %894 = vmatpush1.msra.mxu0 0.0
        %895 = vmatprep.subr.mxu0 0.0
        %896 = vmatpush1.msra.mxu0 0.0
        %897 = vmatprep.subr.mxu0 0.0
        %898 = vmatpush1.msra.mxu0 0.0
        %899 = vmatprep.subr.mxu0 0.0
        %900 = vmatpush1.msra.mxu0 0.0
        %901 = vmatprep.subr.mxu0 0.0
        %902 = vmatpush1.msra.mxu0 0.0
        %903 = vmatprep.subr.mxu0 0.0
        %904 = vmatpush1.msra.mxu0 0.0
        %905 = vmatprep.subr.mxu0 0.0
        %906 = vmatpush1.msra.mxu0 0.0
        %907 = vmatprep.subr.mxu0 0.0
        %908 = vmatpush1.msra.mxu0 0.0
        %909 = vmatprep.subr.mxu0 0.0
        %910 = vmatpush1.msra.mxu0 0.0
        %911 = vmatprep.subr.mxu0 0.0
        %912 = vmatpush1.msra.mxu0 0.0
        %913 = vmatprep.subr.mxu0 0.0
        %914 = vmatpush1.msra.mxu0 0.0
        %915 = vmatprep.subr.mxu0 0.0
        %916 = vmatpush1.msra.mxu0 0.0
        %917 = vmatprep.subr.mxu0 0.0
        %918 = vmatpush1.msra.mxu0 0.0
        %919 = vmatprep.subr.mxu0 0.0
        %920 = vmatpush1.msra.mxu0 0.0
        %921 = vmatprep.subr.mxu0 0.0
        %922 = vmatpush1.msra.mxu0 0.0
        %923 = vmatprep.subr.mxu0 0.0
        %924 = vmatpush1.msra.mxu0 0.0
        %925 = vmatprep.subr.mxu0 0.0
        %926 = vmatpush1.msra.mxu0 0.0
        %927 = vmatprep.subr.mxu0 0.0
        %928 = vmatpush1.msra.mxu0 0.0
        %929 = vmatprep.subr.mxu0 0.0
        %930 = vmatpush1.msra.mxu0 0.0
        %931 = vmatprep.subr.mxu0 0.0
        %932 = vmatpush1.msra.mxu0 0.0
        %933 = vmatprep.subr.mxu0 0.0
        %934 = vmatpush1.msra.mxu0 0.0
        %935 = vmatprep.subr.mxu0 0.0
        %936 = vmatpush1.msra.mxu0 0.0
        %937 = vmatprep.subr.mxu0 0.0
        %938 = vmatpush1.msra.mxu0 0.0
        %939 = vmatprep.subr.mxu0 0.0
        %940 = vmatpush1.msra.mxu0 0.0
        %941 = vmatprep.subr.mxu0 0.0
        %942 = vmatpush1.msra.mxu0 0.0
        %943 = vmatprep.subr.mxu0 0.0
        %944 = vmatpush1.msra.mxu0 0.0
        %945 = vmatprep.subr.mxu0 0.0
        %946 = vmatpush1.msra.mxu0 0.0
        %947 = vmatprep.mubr.f32.mxu0 0.0
        %948 = vmatmul.mubr.f32.gmra.mrb[0].mxu0 %v865
        %v949 = vpop.f32.mrb[0].mxu0
        %v950 = vadd.f32 %v846, %v949
        %v951 = vpop.f32.mrb[0].mxu0
        %v952 = vadd.f32 %v846, %v951
        %953 = vmatprep.mubr.f32.mxu0 0.0
        %954 = vmatmul.mubr.f32.gmra.mrb[0].mxu0 %v868
        %v955 = vpop.f32.mrb[0].mxu0
        %v956 = vadd.f32 %v851, %v955
        %v957 = vpop.f32.mrb[0].mxu0
        %v958 = vadd.f32 %v851, %v957
        %959 = vmatprep.mubr.f32.mxu0 0.0
        %960 = vmatmul.mubr.f32.gmra.mrb[0].mxu0 %v871
        %v961 = vpop.f32.mrb[0].mxu0
        %v962 = vadd.f32 %v856, %v961
        %v963 = vpop.f32.mrb[0].mxu0
        %v964 = vadd.f32 %v856, %v963
        %965 = vmatprep.mubr.f32.mxu0 0.0
        %966 = vmatmul.mubr.f32.gmra.mrb[0].mxu0 %v874
        %v967 = vpop.f32.mrb[0].mxu0
        %v968 = vadd.f32 %v861, %v967
        %v969 = vpop.f32.mrb[0].mxu0
        %v970 = vadd.f32 %v861, %v969
        %971 = vdwg.mxu0
        %v972 = vld [vmem:[%s9] sm:$0x3]
        %v974 = vlaneseq
        %v975 = vshrl.u32 %v974, 7
        %v976 = vsub.s32 0, %v975
        %v977 = vrot.slane %v972, %v976
        %v978 = vlaneseq
        %v979 = vshrl.u32 %v978, 7
        %v980 = vsub.s32 1, %v979
        %v981 = vrot.slane %v972, %v980
        %v984 = vadd.f32 %v950, %v977
        %v985 = vadd.f32 %v952, %v981
        %v986 = vadd.f32 %v956, %v977
        %v987 = vadd.f32 %v958, %v981
        %v988 = vadd.f32 %v962, %v977
        %v989 = vadd.f32 %v964, %v981
        %v990 = vadd.f32 %v968, %v977
        %v991 = vadd.f32 %v970, %v981
        %996 = vrot.lane.b32.xlu0 %v522, 112
        %v997 = vpop.permute.xlu0 %996
        %998 = vrot.lane.b32.xlu0 %v527, 112
        %v999 = vpop.permute.xlu0 %998
        %1000 = vrot.lane.b32.xlu0 %v532, 112
        %v1001 = vpop.permute.xlu0 %1000
        %1002 = vrot.lane.b32.xlu0 %v537, 112
        %v1003 = vpop.permute.xlu0 %1002
        %1008 = vrot.lane.b32.xlu0 %v522, 96
        %v1009 = vpop.permute.xlu0 %1008
        %1010 = vrot.lane.b32.xlu0 %v527, 96
        %v1011 = vpop.permute.xlu0 %1010
        %1012 = vrot.lane.b32.xlu0 %v532, 96
        %v1013 = vpop.permute.xlu0 %1012
        %1014 = vrot.lane.b32.xlu0 %v537, 96
        %v1015 = vpop.permute.xlu0 %1014
        %1020 = vrot.lane.b32.xlu0 %v522, 80
        %v1021 = vpop.permute.xlu0 %1020
        %1022 = vrot.lane.b32.xlu0 %v527, 80
        %v1023 = vpop.permute.xlu0 %1022
        %1024 = vrot.lane.b32.xlu0 %v532, 80
        %v1025 = vpop.permute.xlu0 %1024
        %1026 = vrot.lane.b32.xlu0 %v537, 80
        %v1027 = vpop.permute.xlu0 %1026
        %1032 = vrot.lane.b32.xlu0 %v522, 64
        %v1033 = vpop.permute.xlu0 %1032
        %1034 = vrot.lane.b32.xlu0 %v527, 64
        %v1035 = vpop.permute.xlu0 %1034
        %1036 = vrot.lane.b32.xlu0 %v532, 64
        %v1037 = vpop.permute.xlu0 %1036
        %1038 = vrot.lane.b32.xlu0 %v537, 64
        %v1039 = vpop.permute.xlu0 %1038
        %1044 = vrot.lane.b32.xlu0 %v522, 48
        %v1045 = vpop.permute.xlu0 %1044
        %1046 = vrot.lane.b32.xlu0 %v527, 48
        %v1047 = vpop.permute.xlu0 %1046
        %1048 = vrot.lane.b32.xlu0 %v532, 48
        %v1049 = vpop.permute.xlu0 %1048
        %1050 = vrot.lane.b32.xlu0 %v537, 48
        %v1051 = vpop.permute.xlu0 %1050
        %1056 = vrot.lane.b32.xlu0 %v522, 32
        %v1057 = vpop.permute.xlu0 %1056
        %1058 = vrot.lane.b32.xlu0 %v527, 32
        %v1059 = vpop.permute.xlu0 %1058
        %1060 = vrot.lane.b32.xlu0 %v532, 32
        %v1061 = vpop.permute.xlu0 %1060
        %1062 = vrot.lane.b32.xlu0 %v537, 32
        %v1063 = vpop.permute.xlu0 %1062
        %1068 = vrot.lane.b32.xlu0 %v522, 16
        %v1069 = vpop.permute.xlu0 %1068
        %1070 = vrot.lane.b32.xlu0 %v527, 16
        %v1071 = vpop.permute.xlu0 %1070
        %1072 = vrot.lane.b32.xlu0 %v532, 16
        %v1073 = vpop.permute.xlu0 %1072
        %1074 = vrot.lane.b32.xlu0 %v537, 16
        %v1075 = vpop.permute.xlu0 %1074
        %v1080 = vcombine.low %v522, %v1009
        %v1081 = vcombine.high %v522, %v1009
        %v1083 = vunpack.c.l.s4 1983009808
        %v1084 = vunpack.c.0.s8 %v1083
        %v1085 = vlaneseq
        %v1086 = vshrl.u32 %v1085, 7
        %v1087 = vsub.s32 %v1084, %v1086
        %v1088 = vrot.slane %v1080, %v1087
        %v1090 = vunpack.c.l.s4 1983009808
        %v1091 = vunpack.c.0.s8 %v1090
        %v1092 = vlaneseq
        %v1093 = vshrl.u32 %v1092, 7
        %v1094 = vsub.s32 %v1091, %v1093
        %v1095 = vrot.slane %v1081, %v1094
        %v1096 = vcombine.low %v997, %v1021
        %v1097 = vcombine.high %v997, %v1021
        %v1099 = vunpack.c.l.s4 1983009808
        %v1100 = vunpack.c.0.s8 %v1099
        %v1101 = vlaneseq
        %v1102 = vshrl.u32 %v1101, 7
        %v1103 = vsub.s32 %v1100, %v1102
        %v1104 = vrot.slane %v1096, %v1103
        %v1106 = vunpack.c.l.s4 1983009808
        %v1107 = vunpack.c.0.s8 %v1106
        %v1108 = vlaneseq
        %v1109 = vshrl.u32 %v1108, 7
        %v1110 = vsub.s32 %v1107, %v1109
        %v1111 = vrot.slane %v1097, %v1110
        %v1112 = vcombine.low %v1033, %v1057
        %v1113 = vcombine.high %v1033, %v1057
        %v1115 = vunpack.c.l.s4 1983009808
        %v1116 = vunpack.c.0.s8 %v1115
        %v1117 = vlaneseq
        %v1118 = vshrl.u32 %v1117, 7
        %v1119 = vsub.s32 %v1116, %v1118
        %v1120 = vrot.slane %v1112, %v1119
        %v1122 = vunpack.c.l.s4 1983009808
        %v1123 = vunpack.c.0.s8 %v1122
        %v1124 = vlaneseq
        %v1125 = vshrl.u32 %v1124, 7
        %v1126 = vsub.s32 %v1123, %v1125
        %v1127 = vrot.slane %v1113, %v1126
        %v1128 = vcombine.low %v1045, %v1069
        %v1129 = vcombine.high %v1045, %v1069
        %v1131 = vunpack.c.l.s4 1983009808
        %v1132 = vunpack.c.0.s8 %v1131
        %v1133 = vlaneseq
        %v1134 = vshrl.u32 %v1133, 7
        %v1135 = vsub.s32 %v1132, %v1134
        %v1136 = vrot.slane %v1128, %v1135
        %v1138 = vunpack.c.l.s4 1983009808
        %v1139 = vunpack.c.0.s8 %v1138
        %v1140 = vlaneseq
        %v1141 = vshrl.u32 %v1140, 7
        %v1142 = vsub.s32 %v1139, %v1141
        %v1143 = vrot.slane %v1129, %v1142
        %v1144 = vcombine.low %v1088, %v1104
        %v1145 = vcombine.high %v1088, %v1104
        %v1147 = vunpack.c.l.s4 1934713408
        %v1148 = vunpack.c.0.s8 %v1147
        %v1149 = vlaneseq
        %v1150 = vshrl.u32 %v1149, 7
        %v1151 = vsub.s32 %v1148, %v1150
        %v1152 = vrot.slane %v1144, %v1151
        %v1154 = vunpack.c.l.s4 1934713408
        %v1155 = vunpack.c.0.s8 %v1154
        %v1156 = vlaneseq
        %v1157 = vshrl.u32 %v1156, 7
        %v1158 = vsub.s32 %v1155, %v1157
        %v1159 = vrot.slane %v1145, %v1158
        %v1160 = vcombine.low %v1095, %v1111
        %v1161 = vcombine.high %v1095, %v1111
        %v1163 = vunpack.c.l.s4 1934713408
        %v1164 = vunpack.c.0.s8 %v1163
        %v1165 = vlaneseq
        %v1166 = vshrl.u32 %v1165, 7
        %v1167 = vsub.s32 %v1164, %v1166
        %v1168 = vrot.slane %v1160, %v1167
        %v1170 = vunpack.c.l.s4 1934713408
        %v1171 = vunpack.c.0.s8 %v1170
        %v1172 = vlaneseq
        %v1173 = vshrl.u32 %v1172, 7
        %v1174 = vsub.s32 %v1171, %v1173
        %v1175 = vrot.slane %v1161, %v1174
        %v1176 = vcombine.low %v1120, %v1136
        %v1177 = vcombine.high %v1120, %v1136
        %v1179 = vunpack.c.l.s4 1934713408
        %v1180 = vunpack.c.0.s8 %v1179
        %v1181 = vlaneseq
        %v1182 = vshrl.u32 %v1181, 7
        %v1183 = vsub.s32 %v1180, %v1182
        %v1184 = vrot.slane %v1176, %v1183
        %v1186 = vunpack.c.l.s4 1934713408
        %v1187 = vunpack.c.0.s8 %v1186
        %v1188 = vlaneseq
        %v1189 = vshrl.u32 %v1188, 7
        %v1190 = vsub.s32 %v1187, %v1189
        %v1191 = vrot.slane %v1177, %v1190
        %v1192 = vcombine.low %v1127, %v1143
        %v1193 = vcombine.high %v1127, %v1143
        %v1195 = vunpack.c.l.s4 1934713408
        %v1196 = vunpack.c.0.s8 %v1195
        %v1197 = vlaneseq
        %v1198 = vshrl.u32 %v1197, 7
        %v1199 = vsub.s32 %v1196, %v1198
        %v1200 = vrot.slane %v1192, %v1199
        %v1202 = vunpack.c.l.s4 1934713408
        %v1203 = vunpack.c.0.s8 %v1202
        %v1204 = vlaneseq
        %v1205 = vshrl.u32 %v1204, 7
        %v1206 = vsub.s32 %v1203, %v1205
        %v1207 = vrot.slane %v1193, %v1206
        %v1208 = vcombine.low %v1152, %v1184
        %v1209 = vcombine.high %v1152, %v1184
        %v1210 = vcombine.low %v1159, %v1191
        %v1211 = vcombine.high %v1159, %v1191
        %v1212 = vcombine.low %v1168, %v1200
        %v1213 = vcombine.high %v1168, %v1200
        %v1214 = vcombine.low %v1175, %v1207
        %v1215 = vcombine.high %v1175, %v1207
        %v1216 = vcombine.low %v527, %v1011
        %v1217 = vcombine.high %v527, %v1011
        %v1219 = vunpack.c.l.s4 1983009808
        %v1220 = vunpack.c.0.s8 %v1219
        %v1221 = vlaneseq
        %v1222 = vshrl.u32 %v1221, 7
        %v1223 = vsub.s32 %v1220, %v1222
        %v1224 = vrot.slane %v1216, %v1223
        %v1226 = vunpack.c.l.s4 1983009808
        %v1227 = vunpack.c.0.s8 %v1226
        %v1228 = vlaneseq
        %v1229 = vshrl.u32 %v1228, 7
        %v1230 = vsub.s32 %v1227, %v1229
        %v1231 = vrot.slane %v1217, %v1230
        %v1232 = vcombine.low %v999, %v1023
        %v1233 = vcombine.high %v999, %v1023
        %v1235 = vunpack.c.l.s4 1983009808
        %v1236 = vunpack.c.0.s8 %v1235
        %v1237 = vlaneseq
        %v1238 = vshrl.u32 %v1237, 7
        %v1239 = vsub.s32 %v1236, %v1238
        %v1240 = vrot.slane %v1232, %v1239
        %v1242 = vunpack.c.l.s4 1983009808
        %v1243 = vunpack.c.0.s8 %v1242
        %v1244 = vlaneseq
        %v1245 = vshrl.u32 %v1244, 7
        %v1246 = vsub.s32 %v1243, %v1245
        %v1247 = vrot.slane %v1233, %v1246
        %v1248 = vcombine.low %v1035, %v1059
        %v1249 = vcombine.high %v1035, %v1059
        %v1251 = vunpack.c.l.s4 1983009808
        %v1252 = vunpack.c.0.s8 %v1251
        %v1253 = vlaneseq
        %v1254 = vshrl.u32 %v1253, 7
        %v1255 = vsub.s32 %v1252, %v1254
        %v1256 = vrot.slane %v1248, %v1255
        %v1258 = vunpack.c.l.s4 1983009808
        %v1259 = vunpack.c.0.s8 %v1258
        %v1260 = vlaneseq
        %v1261 = vshrl.u32 %v1260, 7
        %v1262 = vsub.s32 %v1259, %v1261
        %v1263 = vrot.slane %v1249, %v1262
        %v1264 = vcombine.low %v1047, %v1071
        %v1265 = vcombine.high %v1047, %v1071
        %v1267 = vunpack.c.l.s4 1983009808
        %v1268 = vunpack.c.0.s8 %v1267
        %v1269 = vlaneseq
        %v1270 = vshrl.u32 %v1269, 7
        %v1271 = vsub.s32 %v1268, %v1270
        %v1272 = vrot.slane %v1264, %v1271
        %v1274 = vunpack.c.l.s4 1983009808
        %v1275 = vunpack.c.0.s8 %v1274
        %v1276 = vlaneseq
        %v1277 = vshrl.u32 %v1276, 7
        %v1278 = vsub.s32 %v1275, %v1277
        %v1279 = vrot.slane %v1265, %v1278
        %v1280 = vcombine.low %v1224, %v1240
        %v1281 = vcombine.high %v1224, %v1240
        %v1283 = vunpack.c.l.s4 1934713408
        %v1284 = vunpack.c.0.s8 %v1283
        %v1285 = vlaneseq
        %v1286 = vshrl.u32 %v1285, 7
        %v1287 = vsub.s32 %v1284, %v1286
        %v1288 = vrot.slane %v1280, %v1287
        %v1290 = vunpack.c.l.s4 1934713408
        %v1291 = vunpack.c.0.s8 %v1290
        %v1292 = vlaneseq
        %v1293 = vshrl.u32 %v1292, 7
        %v1294 = vsub.s32 %v1291, %v1293
        %v1295 = vrot.slane %v1281, %v1294
        %v1296 = vcombine.low %v1231, %v1247
        %v1297 = vcombine.high %v1231, %v1247
        %v1299 = vunpack.c.l.s4 1934713408
        %v1300 = vunpack.c.0.s8 %v1299
        %v1301 = vlaneseq
        %v1302 = vshrl.u32 %v1301, 7
        %v1303 = vsub.s32 %v1300, %v1302
        %v1304 = vrot.slane %v1296, %v1303
        %v1306 = vunpack.c.l.s4 1934713408
        %v1307 = vunpack.c.0.s8 %v1306
        %v1308 = vlaneseq
        %v1309 = vshrl.u32 %v1308, 7
        %v1310 = vsub.s32 %v1307, %v1309
        %v1311 = vrot.slane %v1297, %v1310
        %v1312 = vcombine.low %v1256, %v1272
        %v1313 = vcombine.high %v1256, %v1272
        %v1315 = vunpack.c.l.s4 1934713408
        %v1316 = vunpack.c.0.s8 %v1315
        %v1317 = vlaneseq
        %v1318 = vshrl.u32 %v1317, 7
        %v1319 = vsub.s32 %v1316, %v1318
        %v1320 = vrot.slane %v1312, %v1319
        %v1322 = vunpack.c.l.s4 1934713408
        %v1323 = vunpack.c.0.s8 %v1322
        %v1324 = vlaneseq
        %v1325 = vshrl.u32 %v1324, 7
        %v1326 = vsub.s32 %v1323, %v1325
        %v1327 = vrot.slane %v1313, %v1326
        %v1328 = vcombine.low %v1263, %v1279
        %v1329 = vcombine.high %v1263, %v1279
        %v1331 = vunpack.c.l.s4 1934713408
        %v1332 = vunpack.c.0.s8 %v1331
        %v1333 = vlaneseq
        %v1334 = vshrl.u32 %v1333, 7
        %v1335 = vsub.s32 %v1332, %v1334
        %v1336 = vrot.slane %v1328, %v1335
        %v1338 = vunpack.c.l.s4 1934713408
        %v1339 = vunpack.c.0.s8 %v1338
        %v1340 = vlaneseq
        %v1341 = vshrl.u32 %v1340, 7
        %v1342 = vsub.s32 %v1339, %v1341
        %v1343 = vrot.slane %v1329, %v1342
        %v1344 = vcombine.low %v1288, %v1320
        %v1345 = vcombine.high %v1288, %v1320
        %v1346 = vcombine.low %v1295, %v1327
        %v1347 = vcombine.high %v1295, %v1327
        %v1348 = vcombine.low %v1304, %v1336
        %v1349 = vcombine.high %v1304, %v1336
        %v1350 = vcombine.low %v1311, %v1343
        %v1351 = vcombine.high %v1311, %v1343
        %v1352 = vcombine.low %v532, %v1013
        %v1353 = vcombine.high %v532, %v1013
        %v1355 = vunpack.c.l.s4 1983009808
        %v1356 = vunpack.c.0.s8 %v1355
        %v1357 = vlaneseq
        %v1358 = vshrl.u32 %v1357, 7
        %v1359 = vsub.s32 %v1356, %v1358
        %v1360 = vrot.slane %v1352, %v1359
        %v1362 = vunpack.c.l.s4 1983009808
        %v1363 = vunpack.c.0.s8 %v1362
        %v1364 = vlaneseq
        %v1365 = vshrl.u32 %v1364, 7
        %v1366 = vsub.s32 %v1363, %v1365
        %v1367 = vrot.slane %v1353, %v1366
        %v1368 = vcombine.low %v1001, %v1025
        %v1369 = vcombine.high %v1001, %v1025
        %v1371 = vunpack.c.l.s4 1983009808
        %v1372 = vunpack.c.0.s8 %v1371
        %v1373 = vlaneseq
        %v1374 = vshrl.u32 %v1373, 7
        %v1375 = vsub.s32 %v1372, %v1374
        %v1376 = vrot.slane %v1368, %v1375
        %v1378 = vunpack.c.l.s4 1983009808
        %v1379 = vunpack.c.0.s8 %v1378
        %v1380 = vlaneseq
        %v1381 = vshrl.u32 %v1380, 7
        %v1382 = vsub.s32 %v1379, %v1381
        %v1383 = vrot.slane %v1369, %v1382
        %v1384 = vcombine.low %v1037, %v1061
        %v1385 = vcombine.high %v1037, %v1061
        %v1387 = vunpack.c.l.s4 1983009808
        %v1388 = vunpack.c.0.s8 %v1387
        %v1389 = vlaneseq
        %v1390 = vshrl.u32 %v1389, 7
        %v1391 = vsub.s32 %v1388, %v1390
        %v1392 = vrot.slane %v1384, %v1391
        %v1394 = vunpack.c.l.s4 1983009808
        %v1395 = vunpack.c.0.s8 %v1394
        %v1396 = vlaneseq
        %v1397 = vshrl.u32 %v1396, 7
        %v1398 = vsub.s32 %v1395, %v1397
        %v1399 = vrot.slane %v1385, %v1398
        %v1400 = vcombine.low %v1049, %v1073
        %v1401 = vcombine.high %v1049, %v1073
        %v1403 = vunpack.c.l.s4 1983009808
        %v1404 = vunpack.c.0.s8 %v1403
        %v1405 = vlaneseq
        %v1406 = vshrl.u32 %v1405, 7
        %v1407 = vsub.s32 %v1404, %v1406
        %v1408 = vrot.slane %v1400, %v1407
        %v1410 = vunpack.c.l.s4 1983009808
        %v1411 = vunpack.c.0.s8 %v1410
        %v1412 = vlaneseq
        %v1413 = vshrl.u32 %v1412, 7
        %v1414 = vsub.s32 %v1411, %v1413
        %v1415 = vrot.slane %v1401, %v1414
        %v1416 = vcombine.low %v1360, %v1376
        %v1417 = vcombine.high %v1360, %v1376
        %v1419 = vunpack.c.l.s4 1934713408
        %v1420 = vunpack.c.0.s8 %v1419
        %v1421 = vlaneseq
        %v1422 = vshrl.u32 %v1421, 7
        %v1423 = vsub.s32 %v1420, %v1422
        %v1424 = vrot.slane %v1416, %v1423
        %v1426 = vunpack.c.l.s4 1934713408
        %v1427 = vunpack.c.0.s8 %v1426
        %v1428 = vlaneseq
        %v1429 = vshrl.u32 %v1428, 7
        %v1430 = vsub.s32 %v1427, %v1429
        %v1431 = vrot.slane %v1417, %v1430
        %v1432 = vcombine.low %v1367, %v1383
        %v1433 = vcombine.high %v1367, %v1383
        %v1435 = vunpack.c.l.s4 1934713408
        %v1436 = vunpack.c.0.s8 %v1435
        %v1437 = vlaneseq
        %v1438 = vshrl.u32 %v1437, 7
        %v1439 = vsub.s32 %v1436, %v1438
        %v1440 = vrot.slane %v1432, %v1439
        %v1442 = vunpack.c.l.s4 1934713408
        %v1443 = vunpack.c.0.s8 %v1442
        %v1444 = vlaneseq
        %v1445 = vshrl.u32 %v1444, 7
        %v1446 = vsub.s32 %v1443, %v1445
        %v1447 = vrot.slane %v1433, %v1446
        %v1448 = vcombine.low %v1392, %v1408
        %v1449 = vcombine.high %v1392, %v1408
        %v1451 = vunpack.c.l.s4 1934713408
        %v1452 = vunpack.c.0.s8 %v1451
        %v1453 = vlaneseq
        %v1454 = vshrl.u32 %v1453, 7
        %v1455 = vsub.s32 %v1452, %v1454
        %v1456 = vrot.slane %v1448, %v1455
        %v1458 = vunpack.c.l.s4 1934713408
        %v1459 = vunpack.c.0.s8 %v1458
        %v1460 = vlaneseq
        %v1461 = vshrl.u32 %v1460, 7
        %v1462 = vsub.s32 %v1459, %v1461
        %v1463 = vrot.slane %v1449, %v1462
        %v1464 = vcombine.low %v1399, %v1415
        %v1465 = vcombine.high %v1399, %v1415
        %v1467 = vunpack.c.l.s4 1934713408
        %v1468 = vunpack.c.0.s8 %v1467
        %v1469 = vlaneseq
        %v1470 = vshrl.u32 %v1469, 7
        %v1471 = vsub.s32 %v1468, %v1470
        %v1472 = vrot.slane %v1464, %v1471
        %v1474 = vunpack.c.l.s4 1934713408
        %v1475 = vunpack.c.0.s8 %v1474
        %v1476 = vlaneseq
        %v1477 = vshrl.u32 %v1476, 7
        %v1478 = vsub.s32 %v1475, %v1477
        %v1479 = vrot.slane %v1465, %v1478
        %v1480 = vcombine.low %v1424, %v1456
        %v1481 = vcombine.high %v1424, %v1456
        %v1482 = vcombine.low %v1431, %v1463
        %v1483 = vcombine.high %v1431, %v1463
        %v1484 = vcombine.low %v1440, %v1472
        %v1485 = vcombine.high %v1440, %v1472
        %v1486 = vcombine.low %v1447, %v1479
        %v1487 = vcombine.high %v1447, %v1479
        %v1488 = vcombine.low %v537, %v1015
        %v1489 = vcombine.high %v537, %v1015
        %v1491 = vunpack.c.l.s4 1983009808
        %v1492 = vunpack.c.0.s8 %v1491
        %v1493 = vlaneseq
        %v1494 = vshrl.u32 %v1493, 7
        %v1495 = vsub.s32 %v1492, %v1494
        %v1496 = vrot.slane %v1488, %v1495
        %v1498 = vunpack.c.l.s4 1983009808
        %v1499 = vunpack.c.0.s8 %v1498
        %v1500 = vlaneseq
        %v1501 = vshrl.u32 %v1500, 7
        %v1502 = vsub.s32 %v1499, %v1501
        %v1503 = vrot.slane %v1489, %v1502
        %v1504 = vcombine.low %v1003, %v1027
        %v1505 = vcombine.high %v1003, %v1027
        %v1507 = vunpack.c.l.s4 1983009808
        %v1508 = vunpack.c.0.s8 %v1507
        %v1509 = vlaneseq
        %v1510 = vshrl.u32 %v1509, 7
        %v1511 = vsub.s32 %v1508, %v1510
        %v1512 = vrot.slane %v1504, %v1511
        %v1514 = vunpack.c.l.s4 1983009808
        %v1515 = vunpack.c.0.s8 %v1514
        %v1516 = vlaneseq
        %v1517 = vshrl.u32 %v1516, 7
        %v1518 = vsub.s32 %v1515, %v1517
        %v1519 = vrot.slane %v1505, %v1518
        %v1520 = vcombine.low %v1039, %v1063
        %v1521 = vcombine.high %v1039, %v1063
        %v1523 = vunpack.c.l.s4 1983009808
        %v1524 = vunpack.c.0.s8 %v1523
        %v1525 = vlaneseq
        %v1526 = vshrl.u32 %v1525, 7
        %v1527 = vsub.s32 %v1524, %v1526
        %v1528 = vrot.slane %v1520, %v1527
        %v1530 = vunpack.c.l.s4 1983009808
        %v1531 = vunpack.c.0.s8 %v1530
        %v1532 = vlaneseq
        %v1533 = vshrl.u32 %v1532, 7
        %v1534 = vsub.s32 %v1531, %v1533
        %v1535 = vrot.slane %v1521, %v1534
        %v1536 = vcombine.low %v1051, %v1075
        %v1537 = vcombine.high %v1051, %v1075
        %v1539 = vunpack.c.l.s4 1983009808
        %v1540 = vunpack.c.0.s8 %v1539
        %v1541 = vlaneseq
        %v1542 = vshrl.u32 %v1541, 7
        %v1543 = vsub.s32 %v1540, %v1542
        %v1544 = vrot.slane %v1536, %v1543
        %v1546 = vunpack.c.l.s4 1983009808
        %v1547 = vunpack.c.0.s8 %v1546
        %v1548 = vlaneseq
        %v1549 = vshrl.u32 %v1548, 7
        %v1550 = vsub.s32 %v1547, %v1549
        %v1551 = vrot.slane %v1537, %v1550
        %v1552 = vcombine.low %v1496, %v1512
        %v1553 = vcombine.high %v1496, %v1512
        %v1555 = vunpack.c.l.s4 1934713408
        %v1556 = vunpack.c.0.s8 %v1555
        %v1557 = vlaneseq
        %v1558 = vshrl.u32 %v1557, 7
        %v1559 = vsub.s32 %v1556, %v1558
        %v1560 = vrot.slane %v1552, %v1559
        %v1562 = vunpack.c.l.s4 1934713408
        %v1563 = vunpack.c.0.s8 %v1562
        %v1564 = vlaneseq
        %v1565 = vshrl.u32 %v1564, 7
        %v1566 = vsub.s32 %v1563, %v1565
        %v1567 = vrot.slane %v1553, %v1566
        %v1568 = vcombine.low %v1503, %v1519
        %v1569 = vcombine.high %v1503, %v1519
        %v1571 = vunpack.c.l.s4 1934713408
        %v1572 = vunpack.c.0.s8 %v1571
        %v1573 = vlaneseq
        %v1574 = vshrl.u32 %v1573, 7
        %v1575 = vsub.s32 %v1572, %v1574
        %v1576 = vrot.slane %v1568, %v1575
        %v1578 = vunpack.c.l.s4 1934713408
        %v1579 = vunpack.c.0.s8 %v1578
        %v1580 = vlaneseq
        %v1581 = vshrl.u32 %v1580, 7
        %v1582 = vsub.s32 %v1579, %v1581
        %v1583 = vrot.slane %v1569, %v1582
        %v1584 = vcombine.low %v1528, %v1544
        %v1585 = vcombine.high %v1528, %v1544
        %v1587 = vunpack.c.l.s4 1934713408
        %v1588 = vunpack.c.0.s8 %v1587
        %v1589 = vlaneseq
        %v1590 = vshrl.u32 %v1589, 7
        %v1591 = vsub.s32 %v1588, %v1590
        %v1592 = vrot.slane %v1584, %v1591
        %v1594 = vunpack.c.l.s4 1934713408
        %v1595 = vunpack.c.0.s8 %v1594
        %v1596 = vlaneseq
        %v1597 = vshrl.u32 %v1596, 7
        %v1598 = vsub.s32 %v1595, %v1597
        %v1599 = vrot.slane %v1585, %v1598
        %v1600 = vcombine.low %v1535, %v1551
        %v1601 = vcombine.high %v1535, %v1551
        %v1603 = vunpack.c.l.s4 1934713408
        %v1604 = vunpack.c.0.s8 %v1603
        %v1605 = vlaneseq
        %v1606 = vshrl.u32 %v1605, 7
        %v1607 = vsub.s32 %v1604, %v1606
        %v1608 = vrot.slane %v1600, %v1607
        %v1610 = vunpack.c.l.s4 1934713408
        %v1611 = vunpack.c.0.s8 %v1610
        %v1612 = vlaneseq
        %v1613 = vshrl.u32 %v1612, 7
        %v1614 = vsub.s32 %v1611, %v1613
        %v1615 = vrot.slane %v1601, %v1614
        %v1616 = vcombine.low %v1560, %v1592
        %v1617 = vcombine.high %v1560, %v1592
        %v1618 = vcombine.low %v1567, %v1599
        %v1619 = vcombine.high %v1567, %v1599
        %v1620 = vcombine.low %v1576, %v1608
        %v1621 = vcombine.high %v1576, %v1608
        %v1622 = vcombine.low %v1583, %v1615
        %v1623 = vcombine.high %v1583, %v1615
        %1628 = vrot.lane.b32.xlu0 %v984, 112
        %v1629 = vpop.permute.xlu0 %1628
        %1630 = vrot.lane.b32.xlu0 %v986, 112
        %v1631 = vpop.permute.xlu0 %1630
        %1632 = vrot.lane.b32.xlu0 %v988, 112
        %v1633 = vpop.permute.xlu0 %1632
        %1634 = vrot.lane.b32.xlu0 %v990, 112
        %v1635 = vpop.permute.xlu0 %1634
        %1640 = vrot.lane.b32.xlu0 %v984, 96
        %v1641 = vpop.permute.xlu0 %1640
        %1642 = vrot.lane.b32.xlu0 %v986, 96
        %v1643 = vpop.permute.xlu0 %1642
        %1644 = vrot.lane.b32.xlu0 %v988, 96
        %v1645 = vpop.permute.xlu0 %1644
        %1646 = vrot.lane.b32.xlu0 %v990, 96
        %v1647 = vpop.permute.xlu0 %1646
        %1652 = vrot.lane.b32.xlu0 %v984, 80
        %v1653 = vpop.permute.xlu0 %1652
        %1654 = vrot.lane.b32.xlu0 %v986, 80
        %v1655 = vpop.permute.xlu0 %1654
        %1656 = vrot.lane.b32.xlu0 %v988, 80
        %v1657 = vpop.permute.xlu0 %1656
        %1658 = vrot.lane.b32.xlu0 %v990, 80
        %v1659 = vpop.permute.xlu0 %1658
        %1664 = vrot.lane.b32.xlu0 %v984, 64
        %v1665 = vpop.permute.xlu0 %1664
        %1666 = vrot.lane.b32.xlu0 %v986, 64
        %v1667 = vpop.permute.xlu0 %1666
        %1668 = vrot.lane.b32.xlu0 %v988, 64
        %v1669 = vpop.permute.xlu0 %1668
        %1670 = vrot.lane.b32.xlu0 %v990, 64
        %v1671 = vpop.permute.xlu0 %1670
        %1676 = vrot.lane.b32.xlu0 %v984, 48
        %v1677 = vpop.permute.xlu0 %1676
        %1678 = vrot.lane.b32.xlu0 %v986, 48
        %v1679 = vpop.permute.xlu0 %1678
        %1680 = vrot.lane.b32.xlu0 %v988, 48
        %v1681 = vpop.permute.xlu0 %1680
        %1682 = vrot.lane.b32.xlu0 %v990, 48
        %v1683 = vpop.permute.xlu0 %1682
        %1688 = vrot.lane.b32.xlu0 %v984, 32
        %v1689 = vpop.permute.xlu0 %1688
        %1690 = vrot.lane.b32.xlu0 %v986, 32
        %v1691 = vpop.permute.xlu0 %1690
        %1692 = vrot.lane.b32.xlu0 %v988, 32
        %v1693 = vpop.permute.xlu0 %1692
        %1694 = vrot.lane.b32.xlu0 %v990, 32
        %v1695 = vpop.permute.xlu0 %1694
        %1700 = vrot.lane.b32.xlu0 %v984, 16
        %v1701 = vpop.permute.xlu0 %1700
        %1702 = vrot.lane.b32.xlu0 %v986, 16
        %v1703 = vpop.permute.xlu0 %1702
        %1704 = vrot.lane.b32.xlu0 %v988, 16
        %v1705 = vpop.permute.xlu0 %1704
        %1706 = vrot.lane.b32.xlu0 %v990, 16
        %v1707 = vpop.permute.xlu0 %1706
        %1716 = vrot.lane.b32.xlu0 %v985, 112
        %v1717 = vpop.permute.xlu0 %1716
        %1718 = vrot.lane.b32.xlu0 %v987, 112
        %v1719 = vpop.permute.xlu0 %1718
        %1720 = vrot.lane.b32.xlu0 %v989, 112
        %v1721 = vpop.permute.xlu0 %1720
        %1722 = vrot.lane.b32.xlu0 %v991, 112
        %v1723 = vpop.permute.xlu0 %1722
        %1728 = vrot.lane.b32.xlu0 %v985, 96
        %v1729 = vpop.permute.xlu0 %1728
        %1730 = vrot.lane.b32.xlu0 %v987, 96
        %v1731 = vpop.permute.xlu0 %1730
        %1732 = vrot.lane.b32.xlu0 %v989, 96
        %v1733 = vpop.permute.xlu0 %1732
        %1734 = vrot.lane.b32.xlu0 %v991, 96
        %v1735 = vpop.permute.xlu0 %1734
        %1740 = vrot.lane.b32.xlu0 %v985, 80
        %v1741 = vpop.permute.xlu0 %1740
        %1742 = vrot.lane.b32.xlu0 %v987, 80
        %v1743 = vpop.permute.xlu0 %1742
        %1744 = vrot.lane.b32.xlu0 %v989, 80
        %v1745 = vpop.permute.xlu0 %1744
        %1746 = vrot.lane.b32.xlu0 %v991, 80
        %v1747 = vpop.permute.xlu0 %1746
        %1752 = vrot.lane.b32.xlu0 %v985, 64
        %v1753 = vpop.permute.xlu0 %1752
        %1754 = vrot.lane.b32.xlu0 %v987, 64
        %v1755 = vpop.permute.xlu0 %1754
        %1756 = vrot.lane.b32.xlu0 %v989, 64
        %v1757 = vpop.permute.xlu0 %1756
        %1758 = vrot.lane.b32.xlu0 %v991, 64
        %v1759 = vpop.permute.xlu0 %1758
        %1764 = vrot.lane.b32.xlu0 %v985, 48
        %v1765 = vpop.permute.xlu0 %1764
        %1766 = vrot.lane.b32.xlu0 %v987, 48
        %v1767 = vpop.permute.xlu0 %1766
        %1768 = vrot.lane.b32.xlu0 %v989, 48
        %v1769 = vpop.permute.xlu0 %1768
        %1770 = vrot.lane.b32.xlu0 %v991, 48
        %v1771 = vpop.permute.xlu0 %1770
        %1776 = vrot.lane.b32.xlu0 %v985, 32
        %v1777 = vpop.permute.xlu0 %1776
        %1778 = vrot.lane.b32.xlu0 %v987, 32
        %v1779 = vpop.permute.xlu0 %1778
        %1780 = vrot.lane.b32.xlu0 %v989, 32
        %v1781 = vpop.permute.xlu0 %1780
        %1782 = vrot.lane.b32.xlu0 %v991, 32
        %v1783 = vpop.permute.xlu0 %1782
        %1788 = vrot.lane.b32.xlu0 %v985, 16
        %v1789 = vpop.permute.xlu0 %1788
        %1790 = vrot.lane.b32.xlu0 %v987, 16
        %v1791 = vpop.permute.xlu0 %1790
        %1792 = vrot.lane.b32.xlu0 %v989, 16
        %v1793 = vpop.permute.xlu0 %1792
        %1794 = vrot.lane.b32.xlu0 %v991, 16
        %v1795 = vpop.permute.xlu0 %1794
        %v1800 = vcombine.low %v984, %v1641
        %v1801 = vcombine.high %v984, %v1641
        %v1803 = vunpack.c.l.s4 1983009808
        %v1804 = vunpack.c.0.s8 %v1803
        %v1805 = vlaneseq
        %v1806 = vshrl.u32 %v1805, 7
        %v1807 = vsub.s32 %v1804, %v1806
        %v1808 = vrot.slane %v1800, %v1807
        %v1810 = vunpack.c.l.s4 1983009808
        %v1811 = vunpack.c.0.s8 %v1810
        %v1812 = vlaneseq
        %v1813 = vshrl.u32 %v1812, 7
        %v1814 = vsub.s32 %v1811, %v1813
        %v1815 = vrot.slane %v1801, %v1814
        %v1816 = vcombine.low %v1629, %v1653
        %v1817 = vcombine.high %v1629, %v1653
        %v1819 = vunpack.c.l.s4 1983009808
        %v1820 = vunpack.c.0.s8 %v1819
        %v1821 = vlaneseq
        %v1822 = vshrl.u32 %v1821, 7
        %v1823 = vsub.s32 %v1820, %v1822
        %v1824 = vrot.slane %v1816, %v1823
        %v1826 = vunpack.c.l.s4 1983009808
        %v1827 = vunpack.c.0.s8 %v1826
        %v1828 = vlaneseq
        %v1829 = vshrl.u32 %v1828, 7
        %v1830 = vsub.s32 %v1827, %v1829
        %v1831 = vrot.slane %v1817, %v1830
        %v1832 = vcombine.low %v1665, %v1689
        %v1833 = vcombine.high %v1665, %v1689
        %v1835 = vunpack.c.l.s4 1983009808
        %v1836 = vunpack.c.0.s8 %v1835
        %v1837 = vlaneseq
        %v1838 = vshrl.u32 %v1837, 7
        %v1839 = vsub.s32 %v1836, %v1838
        %v1840 = vrot.slane %v1832, %v1839
        %v1842 = vunpack.c.l.s4 1983009808
        %v1843 = vunpack.c.0.s8 %v1842
        %v1844 = vlaneseq
        %v1845 = vshrl.u32 %v1844, 7
        %v1846 = vsub.s32 %v1843, %v1845
        %v1847 = vrot.slane %v1833, %v1846
        %v1848 = vcombine.low %v1677, %v1701
        %v1849 = vcombine.high %v1677, %v1701
        %v1851 = vunpack.c.l.s4 1983009808
        %v1852 = vunpack.c.0.s8 %v1851
        %v1853 = vlaneseq
        %v1854 = vshrl.u32 %v1853, 7
        %v1855 = vsub.s32 %v1852, %v1854
        %v1856 = vrot.slane %v1848, %v1855
        %v1858 = vunpack.c.l.s4 1983009808
        %v1859 = vunpack.c.0.s8 %v1858
        %v1860 = vlaneseq
        %v1861 = vshrl.u32 %v1860, 7
        %v1862 = vsub.s32 %v1859, %v1861
        %v1863 = vrot.slane %v1849, %v1862
        %v1864 = vcombine.low %v1808, %v1824
        %v1865 = vcombine.high %v1808, %v1824
        %v1867 = vunpack.c.l.s4 1934713408
        %v1868 = vunpack.c.0.s8 %v1867
        %v1869 = vlaneseq
        %v1870 = vshrl.u32 %v1869, 7
        %v1871 = vsub.s32 %v1868, %v1870
        %v1872 = vrot.slane %v1864, %v1871
        %v1874 = vunpack.c.l.s4 1934713408
        %v1875 = vunpack.c.0.s8 %v1874
        %v1876 = vlaneseq
        %v1877 = vshrl.u32 %v1876, 7
        %v1878 = vsub.s32 %v1875, %v1877
        %v1879 = vrot.slane %v1865, %v1878
        %v1880 = vcombine.low %v1815, %v1831
        %v1881 = vcombine.high %v1815, %v1831
        %v1883 = vunpack.c.l.s4 1934713408
        %v1884 = vunpack.c.0.s8 %v1883
        %v1885 = vlaneseq
        %v1886 = vshrl.u32 %v1885, 7
        %v1887 = vsub.s32 %v1884, %v1886
        %v1888 = vrot.slane %v1880, %v1887
        %v1890 = vunpack.c.l.s4 1934713408
        %v1891 = vunpack.c.0.s8 %v1890
        %v1892 = vlaneseq
        %v1893 = vshrl.u32 %v1892, 7
        %v1894 = vsub.s32 %v1891, %v1893
        %v1895 = vrot.slane %v1881, %v1894
        %v1896 = vcombine.low %v1840, %v1856
        %v1897 = vcombine.high %v1840, %v1856
        %v1899 = vunpack.c.l.s4 1934713408
        %v1900 = vunpack.c.0.s8 %v1899
        %v1901 = vlaneseq
        %v1902 = vshrl.u32 %v1901, 7
        %v1903 = vsub.s32 %v1900, %v1902
        %v1904 = vrot.slane %v1896, %v1903
        %v1906 = vunpack.c.l.s4 1934713408
        %v1907 = vunpack.c.0.s8 %v1906
        %v1908 = vlaneseq
        %v1909 = vshrl.u32 %v1908, 7
        %v1910 = vsub.s32 %v1907, %v1909
        %v1911 = vrot.slane %v1897, %v1910
        %v1912 = vcombine.low %v1847, %v1863
        %v1913 = vcombine.high %v1847, %v1863
        %v1915 = vunpack.c.l.s4 1934713408
        %v1916 = vunpack.c.0.s8 %v1915
        %v1917 = vlaneseq
        %v1918 = vshrl.u32 %v1917, 7
        %v1919 = vsub.s32 %v1916, %v1918
        %v1920 = vrot.slane %v1912, %v1919
        %v1922 = vunpack.c.l.s4 1934713408
        %v1923 = vunpack.c.0.s8 %v1922
        %v1924 = vlaneseq
        %v1925 = vshrl.u32 %v1924, 7
        %v1926 = vsub.s32 %v1923, %v1925
        %v1927 = vrot.slane %v1913, %v1926
        %v1928 = vcombine.low %v1872, %v1904
        %v1929 = vcombine.high %v1872, %v1904
        %v1930 = vcombine.low %v1879, %v1911
        %v1931 = vcombine.high %v1879, %v1911
        %v1932 = vcombine.low %v1888, %v1920
        %v1933 = vcombine.high %v1888, %v1920
        %v1934 = vcombine.low %v1895, %v1927
        %v1935 = vcombine.high %v1895, %v1927
        %v1936 = vcombine.low %v985, %v1729
        %v1937 = vcombine.high %v985, %v1729
        %v1939 = vunpack.c.l.s4 1983009808
        %v1940 = vunpack.c.0.s8 %v1939
        %v1941 = vlaneseq
        %v1942 = vshrl.u32 %v1941, 7
        %v1943 = vsub.s32 %v1940, %v1942
        %v1944 = vrot.slane %v1936, %v1943
        %v1946 = vunpack.c.l.s4 1983009808
        %v1947 = vunpack.c.0.s8 %v1946
        %v1948 = vlaneseq
        %v1949 = vshrl.u32 %v1948, 7
        %v1950 = vsub.s32 %v1947, %v1949
        %v1951 = vrot.slane %v1937, %v1950
        %v1952 = vcombine.low %v1717, %v1741
        %v1953 = vcombine.high %v1717, %v1741
        %v1955 = vunpack.c.l.s4 1983009808
        %v1956 = vunpack.c.0.s8 %v1955
        %v1957 = vlaneseq
        %v1958 = vshrl.u32 %v1957, 7
        %v1959 = vsub.s32 %v1956, %v1958
        %v1960 = vrot.slane %v1952, %v1959
        %v1962 = vunpack.c.l.s4 1983009808
        %v1963 = vunpack.c.0.s8 %v1962
        %v1964 = vlaneseq
        %v1965 = vshrl.u32 %v1964, 7
        %v1966 = vsub.s32 %v1963, %v1965
        %v1967 = vrot.slane %v1953, %v1966
        %v1968 = vcombine.low %v1753, %v1777
        %v1969 = vcombine.high %v1753, %v1777
        %v1971 = vunpack.c.l.s4 1983009808
        %v1972 = vunpack.c.0.s8 %v1971
        %v1973 = vlaneseq
        %v1974 = vshrl.u32 %v1973, 7
        %v1975 = vsub.s32 %v1972, %v1974
        %v1976 = vrot.slane %v1968, %v1975
        %v1978 = vunpack.c.l.s4 1983009808
        %v1979 = vunpack.c.0.s8 %v1978
        %v1980 = vlaneseq
        %v1981 = vshrl.u32 %v1980, 7
        %v1982 = vsub.s32 %v1979, %v1981
        %v1983 = vrot.slane %v1969, %v1982
        %v1984 = vcombine.low %v1765, %v1789
        %v1985 = vcombine.high %v1765, %v1789
        %v1987 = vunpack.c.l.s4 1983009808
        %v1988 = vunpack.c.0.s8 %v1987
        %v1989 = vlaneseq
        %v1990 = vshrl.u32 %v1989, 7
        %v1991 = vsub.s32 %v1988, %v1990
        %v1992 = vrot.slane %v1984, %v1991
        %v1994 = vunpack.c.l.s4 1983009808
        %v1995 = vunpack.c.0.s8 %v1994
        %v1996 = vlaneseq
        %v1997 = vshrl.u32 %v1996, 7
        %v1998 = vsub.s32 %v1995, %v1997
        %v1999 = vrot.slane %v1985, %v1998
        %v2000 = vcombine.low %v1944, %v1960
        %v2001 = vcombine.high %v1944, %v1960
        %v2003 = vunpack.c.l.s4 1934713408
        %v2004 = vunpack.c.0.s8 %v2003
        %v2005 = vlaneseq
        %v2006 = vshrl.u32 %v2005, 7
        %v2007 = vsub.s32 %v2004, %v2006
        %v2008 = vrot.slane %v2000, %v2007
        %v2010 = vunpack.c.l.s4 1934713408
        %v2011 = vunpack.c.0.s8 %v2010
        %v2012 = vlaneseq
        %v2013 = vshrl.u32 %v2012, 7
        %v2014 = vsub.s32 %v2011, %v2013
        %v2015 = vrot.slane %v2001, %v2014
        %v2016 = vcombine.low %v1951, %v1967
        %v2017 = vcombine.high %v1951, %v1967
        %v2019 = vunpack.c.l.s4 1934713408
        %v2020 = vunpack.c.0.s8 %v2019
        %v2021 = vlaneseq
        %v2022 = vshrl.u32 %v2021, 7
        %v2023 = vsub.s32 %v2020, %v2022
        %v2024 = vrot.slane %v2016, %v2023
        %v2026 = vunpack.c.l.s4 1934713408
        %v2027 = vunpack.c.0.s8 %v2026
        %v2028 = vlaneseq
        %v2029 = vshrl.u32 %v2028, 7
        %v2030 = vsub.s32 %v2027, %v2029
        %v2031 = vrot.slane %v2017, %v2030
        %v2032 = vcombine.low %v1976, %v1992
        %v2033 = vcombine.high %v1976, %v1992
        %v2035 = vunpack.c.l.s4 1934713408
        %v2036 = vunpack.c.0.s8 %v2035
        %v2037 = vlaneseq
        %v2038 = vshrl.u32 %v2037, 7
        %v2039 = vsub.s32 %v2036, %v2038
        %v2040 = vrot.slane %v2032, %v2039
        %v2042 = vunpack.c.l.s4 1934713408
        %v2043 = vunpack.c.0.s8 %v2042
        %v2044 = vlaneseq
        %v2045 = vshrl.u32 %v2044, 7
        %v2046 = vsub.s32 %v2043, %v2045
        %v2047 = vrot.slane %v2033, %v2046
        %v2048 = vcombine.low %v1983, %v1999
        %v2049 = vcombine.high %v1983, %v1999
        %v2051 = vunpack.c.l.s4 1934713408
        %v2052 = vunpack.c.0.s8 %v2051
        %v2053 = vlaneseq
        %v2054 = vshrl.u32 %v2053, 7
        %v2055 = vsub.s32 %v2052, %v2054
        %v2056 = vrot.slane %v2048, %v2055
        %v2058 = vunpack.c.l.s4 1934713408
        %v2059 = vunpack.c.0.s8 %v2058
        %v2060 = vlaneseq
        %v2061 = vshrl.u32 %v2060, 7
        %v2062 = vsub.s32 %v2059, %v2061
        %v2063 = vrot.slane %v2049, %v2062
        %v2064 = vcombine.low %v2008, %v2040
        %v2065 = vcombine.high %v2008, %v2040
        %v2066 = vcombine.low %v2015, %v2047
        %v2067 = vcombine.high %v2015, %v2047
        %v2068 = vcombine.low %v2024, %v2056
        %v2069 = vcombine.high %v2024, %v2056
        %v2070 = vcombine.low %v2031, %v2063
        %v2071 = vcombine.high %v2031, %v2063
        %v2072 = vcombine.low %v986, %v1643
        %v2073 = vcombine.high %v986, %v1643
        %v2075 = vunpack.c.l.s4 1983009808
        %v2076 = vunpack.c.0.s8 %v2075
        %v2077 = vlaneseq
        %v2078 = vshrl.u32 %v2077, 7
        %v2079 = vsub.s32 %v2076, %v2078
        %v2080 = vrot.slane %v2072, %v2079
        %v2082 = vunpack.c.l.s4 1983009808
        %v2083 = vunpack.c.0.s8 %v2082
        %v2084 = vlaneseq
        %v2085 = vshrl.u32 %v2084, 7
        %v2086 = vsub.s32 %v2083, %v2085
        %v2087 = vrot.slane %v2073, %v2086
        %v2088 = vcombine.low %v1631, %v1655
        %v2089 = vcombine.high %v1631, %v1655
        %v2091 = vunpack.c.l.s4 1983009808
        %v2092 = vunpack.c.0.s8 %v2091
        %v2093 = vlaneseq
        %v2094 = vshrl.u32 %v2093, 7
        %v2095 = vsub.s32 %v2092, %v2094
        %v2096 = vrot.slane %v2088, %v2095
        %v2098 = vunpack.c.l.s4 1983009808
        %v2099 = vunpack.c.0.s8 %v2098
        %v2100 = vlaneseq
        %v2101 = vshrl.u32 %v2100, 7
        %v2102 = vsub.s32 %v2099, %v2101
        %v2103 = vrot.slane %v2089, %v2102
        %v2104 = vcombine.low %v1667, %v1691
        %v2105 = vcombine.high %v1667, %v1691
        %v2107 = vunpack.c.l.s4 1983009808
        %v2108 = vunpack.c.0.s8 %v2107
        %v2109 = vlaneseq
        %v2110 = vshrl.u32 %v2109, 7
        %v2111 = vsub.s32 %v2108, %v2110
        %v2112 = vrot.slane %v2104, %v2111
        %v2114 = vunpack.c.l.s4 1983009808
        %v2115 = vunpack.c.0.s8 %v2114
        %v2116 = vlaneseq
        %v2117 = vshrl.u32 %v2116, 7
        %v2118 = vsub.s32 %v2115, %v2117
        %v2119 = vrot.slane %v2105, %v2118
        %v2120 = vcombine.low %v1679, %v1703
        %v2121 = vcombine.high %v1679, %v1703
        %v2123 = vunpack.c.l.s4 1983009808
        %v2124 = vunpack.c.0.s8 %v2123
        %v2125 = vlaneseq
        %v2126 = vshrl.u32 %v2125, 7
        %v2127 = vsub.s32 %v2124, %v2126
        %v2128 = vrot.slane %v2120, %v2127
        %v2130 = vunpack.c.l.s4 1983009808
        %v2131 = vunpack.c.0.s8 %v2130
        %v2132 = vlaneseq
        %v2133 = vshrl.u32 %v2132, 7
        %v2134 = vsub.s32 %v2131, %v2133
        %v2135 = vrot.slane %v2121, %v2134
        %v2136 = vcombine.low %v2080, %v2096
        %v2137 = vcombine.high %v2080, %v2096
        %v2139 = vunpack.c.l.s4 1934713408
        %v2140 = vunpack.c.0.s8 %v2139
        %v2141 = vlaneseq
        %v2142 = vshrl.u32 %v2141, 7
        %v2143 = vsub.s32 %v2140, %v2142
        %v2144 = vrot.slane %v2136, %v2143
        %v2146 = vunpack.c.l.s4 1934713408
        %v2147 = vunpack.c.0.s8 %v2146
        %v2148 = vlaneseq
        %v2149 = vshrl.u32 %v2148, 7
        %v2150 = vsub.s32 %v2147, %v2149
        %v2151 = vrot.slane %v2137, %v2150
        %v2152 = vcombine.low %v2087, %v2103
        %v2153 = vcombine.high %v2087, %v2103
        %v2155 = vunpack.c.l.s4 1934713408
        %v2156 = vunpack.c.0.s8 %v2155
        %v2157 = vlaneseq
        %v2158 = vshrl.u32 %v2157, 7
        %v2159 = vsub.s32 %v2156, %v2158
        %v2160 = vrot.slane %v2152, %v2159
        %v2162 = vunpack.c.l.s4 1934713408
        %v2163 = vunpack.c.0.s8 %v2162
        %v2164 = vlaneseq
        %v2165 = vshrl.u32 %v2164, 7
        %v2166 = vsub.s32 %v2163, %v2165
        %v2167 = vrot.slane %v2153, %v2166
        %v2168 = vcombine.low %v2112, %v2128
        %v2169 = vcombine.high %v2112, %v2128
        %v2171 = vunpack.c.l.s4 1934713408
        %v2172 = vunpack.c.0.s8 %v2171
        %v2173 = vlaneseq
        %v2174 = vshrl.u32 %v2173, 7
        %v2175 = vsub.s32 %v2172, %v2174
        %v2176 = vrot.slane %v2168, %v2175
        %v2178 = vunpack.c.l.s4 1934713408
        %v2179 = vunpack.c.0.s8 %v2178
        %v2180 = vlaneseq
        %v2181 = vshrl.u32 %v2180, 7
        %v2182 = vsub.s32 %v2179, %v2181
        %v2183 = vrot.slane %v2169, %v2182
        %v2184 = vcombine.low %v2119, %v2135
        %v2185 = vcombine.high %v2119, %v2135
        %v2187 = vunpack.c.l.s4 1934713408
        %v2188 = vunpack.c.0.s8 %v2187
        %v2189 = vlaneseq
        %v2190 = vshrl.u32 %v2189, 7
        %v2191 = vsub.s32 %v2188, %v2190
        %v2192 = vrot.slane %v2184, %v2191
        %v2194 = vunpack.c.l.s4 1934713408
        %v2195 = vunpack.c.0.s8 %v2194
        %v2196 = vlaneseq
        %v2197 = vshrl.u32 %v2196, 7
        %v2198 = vsub.s32 %v2195, %v2197
        %v2199 = vrot.slane %v2185, %v2198
        %v2200 = vcombine.low %v2144, %v2176
        %v2201 = vcombine.high %v2144, %v2176
        %v2202 = vcombine.low %v2151, %v2183
        %v2203 = vcombine.high %v2151, %v2183
        %v2204 = vcombine.low %v2160, %v2192
        %v2205 = vcombine.high %v2160, %v2192
        %v2206 = vcombine.low %v2167, %v2199
        %v2207 = vcombine.high %v2167, %v2199
        %v2208 = vcombine.low %v987, %v1731
        %v2209 = vcombine.high %v987, %v1731
        %v2211 = vunpack.c.l.s4 1983009808
        %v2212 = vunpack.c.0.s8 %v2211
        %v2213 = vlaneseq
        %v2214 = vshrl.u32 %v2213, 7
        %v2215 = vsub.s32 %v2212, %v2214
        %v2216 = vrot.slane %v2208, %v2215
        %v2218 = vunpack.c.l.s4 1983009808
        %v2219 = vunpack.c.0.s8 %v2218
        %v2220 = vlaneseq
        %v2221 = vshrl.u32 %v2220, 7
        %v2222 = vsub.s32 %v2219, %v2221
        %v2223 = vrot.slane %v2209, %v2222
        %v2224 = vcombine.low %v1719, %v1743
        %v2225 = vcombine.high %v1719, %v1743
        %v2227 = vunpack.c.l.s4 1983009808
        %v2228 = vunpack.c.0.s8 %v2227
        %v2229 = vlaneseq
        %v2230 = vshrl.u32 %v2229, 7
        %v2231 = vsub.s32 %v2228, %v2230
        %v2232 = vrot.slane %v2224, %v2231
        %v2234 = vunpack.c.l.s4 1983009808
        %v2235 = vunpack.c.0.s8 %v2234
        %v2236 = vlaneseq
        %v2237 = vshrl.u32 %v2236, 7
        %v2238 = vsub.s32 %v2235, %v2237
        %v2239 = vrot.slane %v2225, %v2238
        %v2240 = vcombine.low %v1755, %v1779
        %v2241 = vcombine.high %v1755, %v1779
        %v2243 = vunpack.c.l.s4 1983009808
        %v2244 = vunpack.c.0.s8 %v2243
        %v2245 = vlaneseq
        %v2246 = vshrl.u32 %v2245, 7
        %v2247 = vsub.s32 %v2244, %v2246
        %v2248 = vrot.slane %v2240, %v2247
        %v2250 = vunpack.c.l.s4 1983009808
        %v2251 = vunpack.c.0.s8 %v2250
        %v2252 = vlaneseq
        %v2253 = vshrl.u32 %v2252, 7
        %v2254 = vsub.s32 %v2251, %v2253
        %v2255 = vrot.slane %v2241, %v2254
        %v2256 = vcombine.low %v1767, %v1791
        %v2257 = vcombine.high %v1767, %v1791
        %v2259 = vunpack.c.l.s4 1983009808
        %v2260 = vunpack.c.0.s8 %v2259
        %v2261 = vlaneseq
        %v2262 = vshrl.u32 %v2261, 7
        %v2263 = vsub.s32 %v2260, %v2262
        %v2264 = vrot.slane %v2256, %v2263
        %v2266 = vunpack.c.l.s4 1983009808
        %v2267 = vunpack.c.0.s8 %v2266
        %v2268 = vlaneseq
        %v2269 = vshrl.u32 %v2268, 7
        %v2270 = vsub.s32 %v2267, %v2269
        %v2271 = vrot.slane %v2257, %v2270
        %v2272 = vcombine.low %v2216, %v2232
        %v2273 = vcombine.high %v2216, %v2232
        %v2275 = vunpack.c.l.s4 1934713408
        %v2276 = vunpack.c.0.s8 %v2275
        %v2277 = vlaneseq
        %v2278 = vshrl.u32 %v2277, 7
        %v2279 = vsub.s32 %v2276, %v2278
        %v2280 = vrot.slane %v2272, %v2279
        %v2282 = vunpack.c.l.s4 1934713408
        %v2283 = vunpack.c.0.s8 %v2282
        %v2284 = vlaneseq
        %v2285 = vshrl.u32 %v2284, 7
        %v2286 = vsub.s32 %v2283, %v2285
        %v2287 = vrot.slane %v2273, %v2286
        %v2288 = vcombine.low %v2223, %v2239
        %v2289 = vcombine.high %v2223, %v2239
        %v2291 = vunpack.c.l.s4 1934713408
        %v2292 = vunpack.c.0.s8 %v2291
        %v2293 = vlaneseq
        %v2294 = vshrl.u32 %v2293, 7
        %v2295 = vsub.s32 %v2292, %v2294
        %v2296 = vrot.slane %v2288, %v2295
        %v2298 = vunpack.c.l.s4 1934713408
        %v2299 = vunpack.c.0.s8 %v2298
        %v2300 = vlaneseq
        %v2301 = vshrl.u32 %v2300, 7
        %v2302 = vsub.s32 %v2299, %v2301
        %v2303 = vrot.slane %v2289, %v2302
        %v2304 = vcombine.low %v2248, %v2264
        %v2305 = vcombine.high %v2248, %v2264
        %v2307 = vunpack.c.l.s4 1934713408
        %v2308 = vunpack.c.0.s8 %v2307
        %v2309 = vlaneseq
        %v2310 = vshrl.u32 %v2309, 7
        %v2311 = vsub.s32 %v2308, %v2310
        %v2312 = vrot.slane %v2304, %v2311
        %v2314 = vunpack.c.l.s4 1934713408
        %v2315 = vunpack.c.0.s8 %v2314
        %v2316 = vlaneseq
        %v2317 = vshrl.u32 %v2316, 7
        %v2318 = vsub.s32 %v2315, %v2317
        %v2319 = vrot.slane %v2305, %v2318
        %v2320 = vcombine.low %v2255, %v2271
        %v2321 = vcombine.high %v2255, %v2271
        %v2323 = vunpack.c.l.s4 1934713408
        %v2324 = vunpack.c.0.s8 %v2323
        %v2325 = vlaneseq
        %v2326 = vshrl.u32 %v2325, 7
        %v2327 = vsub.s32 %v2324, %v2326
        %v2328 = vrot.slane %v2320, %v2327
        %v2330 = vunpack.c.l.s4 1934713408
        %v2331 = vunpack.c.0.s8 %v2330
        %v2332 = vlaneseq
        %v2333 = vshrl.u32 %v2332, 7
        %v2334 = vsub.s32 %v2331, %v2333
        %v2335 = vrot.slane %v2321, %v2334
        %v2336 = vcombine.low %v2280, %v2312
        %v2337 = vcombine.high %v2280, %v2312
        %v2338 = vcombine.low %v2287, %v2319
        %v2339 = vcombine.high %v2287, %v2319
        %v2340 = vcombine.low %v2296, %v2328
        %v2341 = vcombine.high %v2296, %v2328
        %v2342 = vcombine.low %v2303, %v2335
        %v2343 = vcombine.high %v2303, %v2335
        %v2344 = vcombine.low %v988, %v1645
        %v2345 = vcombine.high %v988, %v1645
        %v2347 = vunpack.c.l.s4 1983009808
        %v2348 = vunpack.c.0.s8 %v2347
        %v2349 = vlaneseq
        %v2350 = vshrl.u32 %v2349, 7
        %v2351 = vsub.s32 %v2348, %v2350
        %v2352 = vrot.slane %v2344, %v2351
        %v2354 = vunpack.c.l.s4 1983009808
        %v2355 = vunpack.c.0.s8 %v2354
        %v2356 = vlaneseq
        %v2357 = vshrl.u32 %v2356, 7
        %v2358 = vsub.s32 %v2355, %v2357
        %v2359 = vrot.slane %v2345, %v2358
        %v2360 = vcombine.low %v1633, %v1657
        %v2361 = vcombine.high %v1633, %v1657
        %v2363 = vunpack.c.l.s4 1983009808
        %v2364 = vunpack.c.0.s8 %v2363
        %v2365 = vlaneseq
        %v2366 = vshrl.u32 %v2365, 7
        %v2367 = vsub.s32 %v2364, %v2366
        %v2368 = vrot.slane %v2360, %v2367
        %v2370 = vunpack.c.l.s4 1983009808
        %v2371 = vunpack.c.0.s8 %v2370
        %v2372 = vlaneseq
        %v2373 = vshrl.u32 %v2372, 7
        %v2374 = vsub.s32 %v2371, %v2373
        %v2375 = vrot.slane %v2361, %v2374
        %v2376 = vcombine.low %v1669, %v1693
        %v2377 = vcombine.high %v1669, %v1693
        %v2379 = vunpack.c.l.s4 1983009808
        %v2380 = vunpack.c.0.s8 %v2379
        %v2381 = vlaneseq
        %v2382 = vshrl.u32 %v2381, 7
        %v2383 = vsub.s32 %v2380, %v2382
        %v2384 = vrot.slane %v2376, %v2383
        %v2386 = vunpack.c.l.s4 1983009808
        %v2387 = vunpack.c.0.s8 %v2386
        %v2388 = vlaneseq
        %v2389 = vshrl.u32 %v2388, 7
        %v2390 = vsub.s32 %v2387, %v2389
        %v2391 = vrot.slane %v2377, %v2390
        %v2392 = vcombine.low %v1681, %v1705
        %v2393 = vcombine.high %v1681, %v1705
        %v2395 = vunpack.c.l.s4 1983009808
        %v2396 = vunpack.c.0.s8 %v2395
        %v2397 = vlaneseq
        %v2398 = vshrl.u32 %v2397, 7
        %v2399 = vsub.s32 %v2396, %v2398
        %v2400 = vrot.slane %v2392, %v2399
        %v2402 = vunpack.c.l.s4 1983009808
        %v2403 = vunpack.c.0.s8 %v2402
        %v2404 = vlaneseq
        %v2405 = vshrl.u32 %v2404, 7
        %v2406 = vsub.s32 %v2403, %v2405
        %v2407 = vrot.slane %v2393, %v2406
        %v2408 = vcombine.low %v2352, %v2368
        %v2409 = vcombine.high %v2352, %v2368
        %v2411 = vunpack.c.l.s4 1934713408
        %v2412 = vunpack.c.0.s8 %v2411
        %v2413 = vlaneseq
        %v2414 = vshrl.u32 %v2413, 7
        %v2415 = vsub.s32 %v2412, %v2414
        %v2416 = vrot.slane %v2408, %v2415
        %v2418 = vunpack.c.l.s4 1934713408
        %v2419 = vunpack.c.0.s8 %v2418
        %v2420 = vlaneseq
        %v2421 = vshrl.u32 %v2420, 7
        %v2422 = vsub.s32 %v2419, %v2421
        %v2423 = vrot.slane %v2409, %v2422
        %v2424 = vcombine.low %v2359, %v2375
        %v2425 = vcombine.high %v2359, %v2375
        %v2427 = vunpack.c.l.s4 1934713408
        %v2428 = vunpack.c.0.s8 %v2427
        %v2429 = vlaneseq
        %v2430 = vshrl.u32 %v2429, 7
        %v2431 = vsub.s32 %v2428, %v2430
        %v2432 = vrot.slane %v2424, %v2431
        %v2434 = vunpack.c.l.s4 1934713408
        %v2435 = vunpack.c.0.s8 %v2434
        %v2436 = vlaneseq
        %v2437 = vshrl.u32 %v2436, 7
        %v2438 = vsub.s32 %v2435, %v2437
        %v2439 = vrot.slane %v2425, %v2438
        %v2440 = vcombine.low %v2384, %v2400
        %v2441 = vcombine.high %v2384, %v2400
        %v2443 = vunpack.c.l.s4 1934713408
        %v2444 = vunpack.c.0.s8 %v2443
        %v2445 = vlaneseq
        %v2446 = vshrl.u32 %v2445, 7
        %v2447 = vsub.s32 %v2444, %v2446
        %v2448 = vrot.slane %v2440, %v2447
        %v2450 = vunpack.c.l.s4 1934713408
        %v2451 = vunpack.c.0.s8 %v2450
        %v2452 = vlaneseq
        %v2453 = vshrl.u32 %v2452, 7
        %v2454 = vsub.s32 %v2451, %v2453
        %v2455 = vrot.slane %v2441, %v2454
        %v2456 = vcombine.low %v2391, %v2407
        %v2457 = vcombine.high %v2391, %v2407
        %v2459 = vunpack.c.l.s4 1934713408
        %v2460 = vunpack.c.0.s8 %v2459
        %v2461 = vlaneseq
        %v2462 = vshrl.u32 %v2461, 7
        %v2463 = vsub.s32 %v2460, %v2462
        %v2464 = vrot.slane %v2456, %v2463
        %v2466 = vunpack.c.l.s4 1934713408
        %v2467 = vunpack.c.0.s8 %v2466
        %v2468 = vlaneseq
        %v2469 = vshrl.u32 %v2468, 7
        %v2470 = vsub.s32 %v2467, %v2469
        %v2471 = vrot.slane %v2457, %v2470
        %v2472 = vcombine.low %v2416, %v2448
        %v2473 = vcombine.high %v2416, %v2448
        %v2474 = vcombine.low %v2423, %v2455
        %v2475 = vcombine.high %v2423, %v2455
        %v2476 = vcombine.low %v2432, %v2464
        %v2477 = vcombine.high %v2432, %v2464
        %v2478 = vcombine.low %v2439, %v2471
        %v2479 = vcombine.high %v2439, %v2471
        %v2480 = vcombine.low %v989, %v1733
        %v2481 = vcombine.high %v989, %v1733
        %v2483 = vunpack.c.l.s4 1983009808
        %v2484 = vunpack.c.0.s8 %v2483
        %v2485 = vlaneseq
        %v2486 = vshrl.u32 %v2485, 7
        %v2487 = vsub.s32 %v2484, %v2486
        %v2488 = vrot.slane %v2480, %v2487
        %v2490 = vunpack.c.l.s4 1983009808
        %v2491 = vunpack.c.0.s8 %v2490
        %v2492 = vlaneseq
        %v2493 = vshrl.u32 %v2492, 7
        %v2494 = vsub.s32 %v2491, %v2493
        %v2495 = vrot.slane %v2481, %v2494
        %v2496 = vcombine.low %v1721, %v1745
        %v2497 = vcombine.high %v1721, %v1745
        %v2499 = vunpack.c.l.s4 1983009808
        %v2500 = vunpack.c.0.s8 %v2499
        %v2501 = vlaneseq
        %v2502 = vshrl.u32 %v2501, 7
        %v2503 = vsub.s32 %v2500, %v2502
        %v2504 = vrot.slane %v2496, %v2503
        %v2506 = vunpack.c.l.s4 1983009808
        %v2507 = vunpack.c.0.s8 %v2506
        %v2508 = vlaneseq
        %v2509 = vshrl.u32 %v2508, 7
        %v2510 = vsub.s32 %v2507, %v2509
        %v2511 = vrot.slane %v2497, %v2510
        %v2512 = vcombine.low %v1757, %v1781
        %v2513 = vcombine.high %v1757, %v1781
        %v2515 = vunpack.c.l.s4 1983009808
        %v2516 = vunpack.c.0.s8 %v2515
        %v2517 = vlaneseq
        %v2518 = vshrl.u32 %v2517, 7
        %v2519 = vsub.s32 %v2516, %v2518
        %v2520 = vrot.slane %v2512, %v2519
        %v2522 = vunpack.c.l.s4 1983009808
        %v2523 = vunpack.c.0.s8 %v2522
        %v2524 = vlaneseq
        %v2525 = vshrl.u32 %v2524, 7
        %v2526 = vsub.s32 %v2523, %v2525
        %v2527 = vrot.slane %v2513, %v2526
        %v2528 = vcombine.low %v1769, %v1793
        %v2529 = vcombine.high %v1769, %v1793
        %v2531 = vunpack.c.l.s4 1983009808
        %v2532 = vunpack.c.0.s8 %v2531
        %v2533 = vlaneseq
        %v2534 = vshrl.u32 %v2533, 7
        %v2535 = vsub.s32 %v2532, %v2534
        %v2536 = vrot.slane %v2528, %v2535
        %v2538 = vunpack.c.l.s4 1983009808
        %v2539 = vunpack.c.0.s8 %v2538
        %v2540 = vlaneseq
        %v2541 = vshrl.u32 %v2540, 7
        %v2542 = vsub.s32 %v2539, %v2541
        %v2543 = vrot.slane %v2529, %v2542
        %v2544 = vcombine.low %v2488, %v2504
        %v2545 = vcombine.high %v2488, %v2504
        %v2547 = vunpack.c.l.s4 1934713408
        %v2548 = vunpack.c.0.s8 %v2547
        %v2549 = vlaneseq
        %v2550 = vshrl.u32 %v2549, 7
        %v2551 = vsub.s32 %v2548, %v2550
        %v2552 = vrot.slane %v2544, %v2551
        %v2554 = vunpack.c.l.s4 1934713408
        %v2555 = vunpack.c.0.s8 %v2554
        %v2556 = vlaneseq
        %v2557 = vshrl.u32 %v2556, 7
        %v2558 = vsub.s32 %v2555, %v2557
        %v2559 = vrot.slane %v2545, %v2558
        %v2560 = vcombine.low %v2495, %v2511
        %v2561 = vcombine.high %v2495, %v2511
        %v2563 = vunpack.c.l.s4 1934713408
        %v2564 = vunpack.c.0.s8 %v2563
        %v2565 = vlaneseq
        %v2566 = vshrl.u32 %v2565, 7
        %v2567 = vsub.s32 %v2564, %v2566
        %v2568 = vrot.slane %v2560, %v2567
        %v2570 = vunpack.c.l.s4 1934713408
        %v2571 = vunpack.c.0.s8 %v2570
        %v2572 = vlaneseq
        %v2573 = vshrl.u32 %v2572, 7
        %v2574 = vsub.s32 %v2571, %v2573
        %v2575 = vrot.slane %v2561, %v2574
        %v2576 = vcombine.low %v2520, %v2536
        %v2577 = vcombine.high %v2520, %v2536
        %v2579 = vunpack.c.l.s4 1934713408
        %v2580 = vunpack.c.0.s8 %v2579
        %v2581 = vlaneseq
        %v2582 = vshrl.u32 %v2581, 7
        %v2583 = vsub.s32 %v2580, %v2582
        %v2584 = vrot.slane %v2576, %v2583
        %v2586 = vunpack.c.l.s4 1934713408
        %v2587 = vunpack.c.0.s8 %v2586
        %v2588 = vlaneseq
        %v2589 = vshrl.u32 %v2588, 7
        %v2590 = vsub.s32 %v2587, %v2589
        %v2591 = vrot.slane %v2577, %v2590
        %v2592 = vcombine.low %v2527, %v2543
        %v2593 = vcombine.high %v2527, %v2543
        %v2595 = vunpack.c.l.s4 1934713408
        %v2596 = vunpack.c.0.s8 %v2595
        %v2597 = vlaneseq
        %v2598 = vshrl.u32 %v2597, 7
        %v2599 = vsub.s32 %v2596, %v2598
        %v2600 = vrot.slane %v2592, %v2599
        %v2602 = vunpack.c.l.s4 1934713408
        %v2603 = vunpack.c.0.s8 %v2602
        %v2604 = vlaneseq
        %v2605 = vshrl.u32 %v2604, 7
        %v2606 = vsub.s32 %v2603, %v2605
        %v2607 = vrot.slane %v2593, %v2606
        %v2608 = vcombine.low %v2552, %v2584
        %v2609 = vcombine.high %v2552, %v2584
        %v2610 = vcombine.low %v2559, %v2591
        %v2611 = vcombine.high %v2559, %v2591
        %v2612 = vcombine.low %v2568, %v2600
        %v2613 = vcombine.high %v2568, %v2600
        %v2614 = vcombine.low %v2575, %v2607
        %v2615 = vcombine.high %v2575, %v2607
        %v2616 = vcombine.low %v990, %v1647
        %v2617 = vcombine.high %v990, %v1647
        %v2619 = vunpack.c.l.s4 1983009808
        %v2620 = vunpack.c.0.s8 %v2619
        %v2621 = vlaneseq
        %v2622 = vshrl.u32 %v2621, 7
        %v2623 = vsub.s32 %v2620, %v2622
        %v2624 = vrot.slane %v2616, %v2623
        %v2626 = vunpack.c.l.s4 1983009808
        %v2627 = vunpack.c.0.s8 %v2626
        %v2628 = vlaneseq
        %v2629 = vshrl.u32 %v2628, 7
        %v2630 = vsub.s32 %v2627, %v2629
        %v2631 = vrot.slane %v2617, %v2630
        %v2632 = vcombine.low %v1635, %v1659
        %v2633 = vcombine.high %v1635, %v1659
        %v2635 = vunpack.c.l.s4 1983009808
        %v2636 = vunpack.c.0.s8 %v2635
        %v2637 = vlaneseq
        %v2638 = vshrl.u32 %v2637, 7
        %v2639 = vsub.s32 %v2636, %v2638
        %v2640 = vrot.slane %v2632, %v2639
        %v2642 = vunpack.c.l.s4 1983009808
        %v2643 = vunpack.c.0.s8 %v2642
        %v2644 = vlaneseq
        %v2645 = vshrl.u32 %v2644, 7
        %v2646 = vsub.s32 %v2643, %v2645
        %v2647 = vrot.slane %v2633, %v2646
        %v2648 = vcombine.low %v1671, %v1695
        %v2649 = vcombine.high %v1671, %v1695
        %v2651 = vunpack.c.l.s4 1983009808
        %v2652 = vunpack.c.0.s8 %v2651
        %v2653 = vlaneseq
        %v2654 = vshrl.u32 %v2653, 7
        %v2655 = vsub.s32 %v2652, %v2654
        %v2656 = vrot.slane %v2648, %v2655
        %v2658 = vunpack.c.l.s4 1983009808
        %v2659 = vunpack.c.0.s8 %v2658
        %v2660 = vlaneseq
        %v2661 = vshrl.u32 %v2660, 7
        %v2662 = vsub.s32 %v2659, %v2661
        %v2663 = vrot.slane %v2649, %v2662
        %v2664 = vcombine.low %v1683, %v1707
        %v2665 = vcombine.high %v1683, %v1707
        %v2667 = vunpack.c.l.s4 1983009808
        %v2668 = vunpack.c.0.s8 %v2667
        %v2669 = vlaneseq
        %v2670 = vshrl.u32 %v2669, 7
        %v2671 = vsub.s32 %v2668, %v2670
        %v2672 = vrot.slane %v2664, %v2671
        %v2674 = vunpack.c.l.s4 1983009808
        %v2675 = vunpack.c.0.s8 %v2674
        %v2676 = vlaneseq
        %v2677 = vshrl.u32 %v2676, 7
        %v2678 = vsub.s32 %v2675, %v2677
        %v2679 = vrot.slane %v2665, %v2678
        %v2680 = vcombine.low %v2624, %v2640
        %v2681 = vcombine.high %v2624, %v2640
        %v2683 = vunpack.c.l.s4 1934713408
        %v2684 = vunpack.c.0.s8 %v2683
        %v2685 = vlaneseq
        %v2686 = vshrl.u32 %v2685, 7
        %v2687 = vsub.s32 %v2684, %v2686
        %v2688 = vrot.slane %v2680, %v2687
        %v2690 = vunpack.c.l.s4 1934713408
        %v2691 = vunpack.c.0.s8 %v2690
        %v2692 = vlaneseq
        %v2693 = vshrl.u32 %v2692, 7
        %v2694 = vsub.s32 %v2691, %v2693
        %v2695 = vrot.slane %v2681, %v2694
        %v2696 = vcombine.low %v2631, %v2647
        %v2697 = vcombine.high %v2631, %v2647
        %v2699 = vunpack.c.l.s4 1934713408
        %v2700 = vunpack.c.0.s8 %v2699
        %v2701 = vlaneseq
        %v2702 = vshrl.u32 %v2701, 7
        %v2703 = vsub.s32 %v2700, %v2702
        %v2704 = vrot.slane %v2696, %v2703
        %v2706 = vunpack.c.l.s4 1934713408
        %v2707 = vunpack.c.0.s8 %v2706
        %v2708 = vlaneseq
        %v2709 = vshrl.u32 %v2708, 7
        %v2710 = vsub.s32 %v2707, %v2709
        %v2711 = vrot.slane %v2697, %v2710
        %v2712 = vcombine.low %v2656, %v2672
        %v2713 = vcombine.high %v2656, %v2672
        %v2715 = vunpack.c.l.s4 1934713408
        %v2716 = vunpack.c.0.s8 %v2715
        %v2717 = vlaneseq
        %v2718 = vshrl.u32 %v2717, 7
        %v2719 = vsub.s32 %v2716, %v2718
        %v2720 = vrot.slane %v2712, %v2719
        %v2722 = vunpack.c.l.s4 1934713408
        %v2723 = vunpack.c.0.s8 %v2722
        %v2724 = vlaneseq
        %v2725 = vshrl.u32 %v2724, 7
        %v2726 = vsub.s32 %v2723, %v2725
        %v2727 = vrot.slane %v2713, %v2726
        %v2728 = vcombine.low %v2663, %v2679
        %v2729 = vcombine.high %v2663, %v2679
        %v2731 = vunpack.c.l.s4 1934713408
        %v2732 = vunpack.c.0.s8 %v2731
        %v2733 = vlaneseq
        %v2734 = vshrl.u32 %v2733, 7
        %v2735 = vsub.s32 %v2732, %v2734
        %v2736 = vrot.slane %v2728, %v2735
        %v2738 = vunpack.c.l.s4 1934713408
        %v2739 = vunpack.c.0.s8 %v2738
        %v2740 = vlaneseq
        %v2741 = vshrl.u32 %v2740, 7
        %v2742 = vsub.s32 %v2739, %v2741
        %v2743 = vrot.slane %v2729, %v2742
        %v2744 = vcombine.low %v2688, %v2720
        %v2745 = vcombine.high %v2688, %v2720
        %v2746 = vcombine.low %v2695, %v2727
        %v2747 = vcombine.high %v2695, %v2727
        %v2748 = vcombine.low %v2704, %v2736
        %v2749 = vcombine.high %v2704, %v2736
        %v2750 = vcombine.low %v2711, %v2743
        %v2751 = vcombine.high %v2711, %v2743
        %v2752 = vcombine.low %v991, %v1735
        %v2753 = vcombine.high %v991, %v1735
        %v2755 = vunpack.c.l.s4 1983009808
        %v2756 = vunpack.c.0.s8 %v2755
        %v2757 = vlaneseq
        %v2758 = vshrl.u32 %v2757, 7
        %v2759 = vsub.s32 %v2756, %v2758
        %v2760 = vrot.slane %v2752, %v2759
        %v2762 = vunpack.c.l.s4 1983009808
        %v2763 = vunpack.c.0.s8 %v2762
        %v2764 = vlaneseq
        %v2765 = vshrl.u32 %v2764, 7
        %v2766 = vsub.s32 %v2763, %v2765
        %v2767 = vrot.slane %v2753, %v2766
        %v2768 = vcombine.low %v1723, %v1747
        %v2769 = vcombine.high %v1723, %v1747
        %v2771 = vunpack.c.l.s4 1983009808
        %v2772 = vunpack.c.0.s8 %v2771
        %v2773 = vlaneseq
        %v2774 = vshrl.u32 %v2773, 7
        %v2775 = vsub.s32 %v2772, %v2774
        %v2776 = vrot.slane %v2768, %v2775
        %v2778 = vunpack.c.l.s4 1983009808
        %v2779 = vunpack.c.0.s8 %v2778
        %v2780 = vlaneseq
        %v2781 = vshrl.u32 %v2780, 7
        %v2782 = vsub.s32 %v2779, %v2781
        %v2783 = vrot.slane %v2769, %v2782
        %v2784 = vcombine.low %v1759, %v1783
        %v2785 = vcombine.high %v1759, %v1783
        %v2787 = vunpack.c.l.s4 1983009808
        %v2788 = vunpack.c.0.s8 %v2787
        %v2789 = vlaneseq
        %v2790 = vshrl.u32 %v2789, 7
        %v2791 = vsub.s32 %v2788, %v2790
        %v2792 = vrot.slane %v2784, %v2791
        %v2794 = vunpack.c.l.s4 1983009808
        %v2795 = vunpack.c.0.s8 %v2794
        %v2796 = vlaneseq
        %v2797 = vshrl.u32 %v2796, 7
        %v2798 = vsub.s32 %v2795, %v2797
        %v2799 = vrot.slane %v2785, %v2798
        %v2800 = vcombine.low %v1771, %v1795
        %v2801 = vcombine.high %v1771, %v1795
        %v2803 = vunpack.c.l.s4 1983009808
        %v2804 = vunpack.c.0.s8 %v2803
        %v2805 = vlaneseq
        %v2806 = vshrl.u32 %v2805, 7
        %v2807 = vsub.s32 %v2804, %v2806
        %v2808 = vrot.slane %v2800, %v2807
        %v2810 = vunpack.c.l.s4 1983009808
        %v2811 = vunpack.c.0.s8 %v2810
        %v2812 = vlaneseq
        %v2813 = vshrl.u32 %v2812, 7
        %v2814 = vsub.s32 %v2811, %v2813
        %v2815 = vrot.slane %v2801, %v2814
        %v2816 = vcombine.low %v2760, %v2776
        %v2817 = vcombine.high %v2760, %v2776
        %v2819 = vunpack.c.l.s4 1934713408
        %v2820 = vunpack.c.0.s8 %v2819
        %v2821 = vlaneseq
        %v2822 = vshrl.u32 %v2821, 7
        %v2823 = vsub.s32 %v2820, %v2822
        %v2824 = vrot.slane %v2816, %v2823
        %v2826 = vunpack.c.l.s4 1934713408
        %v2827 = vunpack.c.0.s8 %v2826
        %v2828 = vlaneseq
        %v2829 = vshrl.u32 %v2828, 7
        %v2830 = vsub.s32 %v2827, %v2829
        %v2831 = vrot.slane %v2817, %v2830
        %v2832 = vcombine.low %v2767, %v2783
        %v2833 = vcombine.high %v2767, %v2783
        %v2835 = vunpack.c.l.s4 1934713408
        %v2836 = vunpack.c.0.s8 %v2835
        %v2837 = vlaneseq
        %v2838 = vshrl.u32 %v2837, 7
        %v2839 = vsub.s32 %v2836, %v2838
        %v2840 = vrot.slane %v2832, %v2839
        %v2842 = vunpack.c.l.s4 1934713408
        %v2843 = vunpack.c.0.s8 %v2842
        %v2844 = vlaneseq
        %v2845 = vshrl.u32 %v2844, 7
        %v2846 = vsub.s32 %v2843, %v2845
        %v2847 = vrot.slane %v2833, %v2846
        %v2848 = vcombine.low %v2792, %v2808
        %v2849 = vcombine.high %v2792, %v2808
        %v2851 = vunpack.c.l.s4 1934713408
        %v2852 = vunpack.c.0.s8 %v2851
        %v2853 = vlaneseq
        %v2854 = vshrl.u32 %v2853, 7
        %v2855 = vsub.s32 %v2852, %v2854
        %v2856 = vrot.slane %v2848, %v2855
        %v2858 = vunpack.c.l.s4 1934713408
        %v2859 = vunpack.c.0.s8 %v2858
        %v2860 = vlaneseq
        %v2861 = vshrl.u32 %v2860, 7
        %v2862 = vsub.s32 %v2859, %v2861
        %v2863 = vrot.slane %v2849, %v2862
        %v2864 = vcombine.low %v2799, %v2815
        %v2865 = vcombine.high %v2799, %v2815
        %v2867 = vunpack.c.l.s4 1934713408
        %v2868 = vunpack.c.0.s8 %v2867
        %v2869 = vlaneseq
        %v2870 = vshrl.u32 %v2869, 7
        %v2871 = vsub.s32 %v2868, %v2870
        %v2872 = vrot.slane %v2864, %v2871
        %v2874 = vunpack.c.l.s4 1934713408
        %v2875 = vunpack.c.0.s8 %v2874
        %v2876 = vlaneseq
        %v2877 = vshrl.u32 %v2876, 7
        %v2878 = vsub.s32 %v2875, %v2877
        %v2879 = vrot.slane %v2865, %v2878
        %v2880 = vcombine.low %v2824, %v2856
        %v2881 = vcombine.high %v2824, %v2856
        %v2882 = vcombine.low %v2831, %v2863
        %v2883 = vcombine.high %v2831, %v2863
        %v2884 = vcombine.low %v2840, %v2872
        %v2885 = vcombine.high %v2840, %v2872
        %v2886 = vcombine.low %v2847, %v2879
        %v2887 = vcombine.high %v2847, %v2879
        %vm2888 = vcmask 130048
        %v2890 = vsel %vm2888, %v1208, 0
        %2892 = vmatprep.subr.mxu0 0.0
        %2893 = vmatpush1.msra.mxu0 %v1928
        %2894 = vmatprep.subr.mxu0 0.0
        %2895 = vmatpush1.msra.mxu0 %v2064
        %2896 = vmatprep.subr.mxu0 0.0
        %2897 = vmatpush1.msra.mxu0 0.0
        %2898 = vmatprep.subr.mxu0 0.0
        %2899 = vmatpush1.msra.mxu0 0.0
        %2900 = vmatprep.subr.mxu0 0.0
        %2901 = vmatpush1.msra.mxu0 0.0
        %2902 = vmatprep.subr.mxu0 0.0
        %2903 = vmatpush1.msra.mxu0 0.0
        %2904 = vmatprep.subr.mxu0 0.0
        %2905 = vmatpush1.msra.mxu0 0.0
        %2906 = vmatprep.subr.mxu0 0.0
        %2907 = vmatpush1.msra.mxu0 0.0
        %2908 = vmatprep.subr.mxu0 0.0
        %2909 = vmatpush1.msra.mxu0 0.0
        %2910 = vmatprep.subr.mxu0 0.0
        %2911 = vmatpush1.msra.mxu0 0.0
        %2912 = vmatprep.subr.mxu0 0.0
        %2913 = vmatpush1.msra.mxu0 0.0
        %2914 = vmatprep.subr.mxu0 0.0
        %2915 = vmatpush1.msra.mxu0 0.0
        %2916 = vmatprep.subr.mxu0 0.0
        %2917 = vmatpush1.msra.mxu0 0.0
        %2918 = vmatprep.subr.mxu0 0.0
        %2919 = vmatpush1.msra.mxu0 0.0
        %2920 = vmatprep.subr.mxu0 0.0
        %2921 = vmatpush1.msra.mxu0 0.0
        %2922 = vmatprep.subr.mxu0 0.0
        %2923 = vmatpush1.msra.mxu0 0.0
        %2924 = vmatprep.subr.mxu0 0.0
        %2925 = vmatpush1.msra.mxu0 0.0
        %2926 = vmatprep.subr.mxu0 0.0
        %2927 = vmatpush1.msra.mxu0 0.0
        %2928 = vmatprep.subr.mxu0 0.0
        %2929 = vmatpush1.msra.mxu0 0.0
        %2930 = vmatprep.subr.mxu0 0.0
        %2931 = vmatpush1.msra.mxu0 0.0
        %2932 = vmatprep.subr.mxu0 0.0
        %2933 = vmatpush1.msra.mxu0 0.0
        %2934 = vmatprep.subr.mxu0 0.0
        %2935 = vmatpush1.msra.mxu0 0.0
        %2936 = vmatprep.subr.mxu0 0.0
        %2937 = vmatpush1.msra.mxu0 0.0
        %2938 = vmatprep.subr.mxu0 0.0
        %2939 = vmatpush1.msra.mxu0 0.0
        %2940 = vmatprep.subr.mxu0 0.0
        %2941 = vmatpush1.msra.mxu0 0.0
        %2942 = vmatprep.subr.mxu0 0.0
        %2943 = vmatpush1.msra.mxu0 0.0
        %2944 = vmatprep.subr.mxu0 0.0
        %2945 = vmatpush1.msra.mxu0 0.0
        %2946 = vmatprep.subr.mxu0 0.0
        %2947 = vmatpush1.msra.mxu0 0.0
        %2948 = vmatprep.subr.mxu0 0.0
        %2949 = vmatpush1.msra.mxu0 0.0
        %2950 = vmatprep.subr.mxu0 0.0
        %2951 = vmatpush1.msra.mxu0 0.0
        %2952 = vmatprep.subr.mxu0 0.0
        %2953 = vmatpush1.msra.mxu0 0.0
        %2954 = vmatprep.subr.mxu0 0.0
        %2955 = vmatpush1.msra.mxu0 0.0
        %2956 = vmatprep.mubr.f32.mxu0 0.0
        %2957 = vmatmul.mubr.f32.gmra.mrb[0].mxu0 %v2890
        %v2958 = vpop.f32.mrb[0].mxu0
        %v2959 = vadd.f32 0.0, %v2958
        %v2960 = vpop.f32.mrb[0].mxu0
        %2961 = vdwg.mxu0
        %v2963 = vsel %vm2888, %v1209, 0
        %2965 = vmatprep.subr.mxu0 0.0
        %2966 = vmatpush1.msra.mxu0 %v1929
        %2967 = vmatprep.subr.mxu0 0.0
        %2968 = vmatpush1.msra.mxu0 %v2065
        %2969 = vmatprep.subr.mxu0 0.0
        %2970 = vmatpush1.msra.mxu0 0.0
        %2971 = vmatprep.subr.mxu0 0.0
        %2972 = vmatpush1.msra.mxu0 0.0
        %2973 = vmatprep.subr.mxu0 0.0
        %2974 = vmatpush1.msra.mxu0 0.0
        %2975 = vmatprep.subr.mxu0 0.0
        %2976 = vmatpush1.msra.mxu0 0.0
        %2977 = vmatprep.subr.mxu0 0.0
        %2978 = vmatpush1.msra.mxu0 0.0
        %2979 = vmatprep.subr.mxu0 0.0
        %2980 = vmatpush1.msra.mxu0 0.0
        %2981 = vmatprep.subr.mxu0 0.0
        %2982 = vmatpush1.msra.mxu0 0.0
        %2983 = vmatprep.subr.mxu0 0.0
        %2984 = vmatpush1.msra.mxu0 0.0
        %2985 = vmatprep.subr.mxu0 0.0
        %2986 = vmatpush1.msra.mxu0 0.0
        %2987 = vmatprep.subr.mxu0 0.0
        %2988 = vmatpush1.msra.mxu0 0.0
        %2989 = vmatprep.subr.mxu0 0.0
        %2990 = vmatpush1.msra.mxu0 0.0
        %2991 = vmatprep.subr.mxu0 0.0
        %2992 = vmatpush1.msra.mxu0 0.0
        %2993 = vmatprep.subr.mxu0 0.0
        %2994 = vmatpush1.msra.mxu0 0.0
        %2995 = vmatprep.subr.mxu0 0.0
        %2996 = vmatpush1.msra.mxu0 0.0
        %2997 = vmatprep.subr.mxu0 0.0
        %2998 = vmatpush1.msra.mxu0 0.0
        %2999 = vmatprep.subr.mxu0 0.0
        %3000 = vmatpush1.msra.mxu0 0.0
        %3001 = vmatprep.subr.mxu0 0.0
        %3002 = vmatpush1.msra.mxu0 0.0
        %3003 = vmatprep.subr.mxu0 0.0
        %3004 = vmatpush1.msra.mxu0 0.0
        %3005 = vmatprep.subr.mxu0 0.0
        %3006 = vmatpush1.msra.mxu0 0.0
        %3007 = vmatprep.subr.mxu0 0.0
        %3008 = vmatpush1.msra.mxu0 0.0
        %3009 = vmatprep.subr.mxu0 0.0
        %3010 = vmatpush1.msra.mxu0 0.0
        %3011 = vmatprep.subr.mxu0 0.0
        %3012 = vmatpush1.msra.mxu0 0.0
        %3013 = vmatprep.subr.mxu0 0.0
        %3014 = vmatpush1.msra.mxu0 0.0
        %3015 = vmatprep.subr.mxu0 0.0
        %3016 = vmatpush1.msra.mxu0 0.0
        %3017 = vmatprep.subr.mxu0 0.0
        %3018 = vmatpush1.msra.mxu0 0.0
        %3019 = vmatprep.subr.mxu0 0.0
        %3020 = vmatpush1.msra.mxu0 0.0
        %3021 = vmatprep.subr.mxu0 0.0
        %3022 = vmatpush1.msra.mxu0 0.0
        %3023 = vmatprep.subr.mxu0 0.0
        %3024 = vmatpush1.msra.mxu0 0.0
        %3025 = vmatprep.subr.mxu0 0.0
        %3026 = vmatpush1.msra.mxu0 0.0
        %3027 = vmatprep.subr.mxu0 0.0
        %3028 = vmatpush1.msra.mxu0 0.0
        %3029 = vmatprep.mubr.f32.mxu0 0.0
        %3030 = vmatmul.mubr.f32.gmra.mrb[0].mxu0 %v2963
        %v3031 = vpop.f32.mrb[0].mxu0
        %v3032 = vadd.f32 0.0, %v3031
        %v3033 = vpop.f32.mrb[0].mxu0
        %3034 = vdwg.mxu0
        %v3036 = vsel %vm2888, %v1210, 0
        %3038 = vmatprep.subr.mxu0 0.0
        %3039 = vmatpush1.msra.mxu0 %v1930
        %3040 = vmatprep.subr.mxu0 0.0
        %3041 = vmatpush1.msra.mxu0 %v2066
        %3042 = vmatprep.subr.mxu0 0.0
        %3043 = vmatpush1.msra.mxu0 0.0
        %3044 = vmatprep.subr.mxu0 0.0
        %3045 = vmatpush1.msra.mxu0 0.0
        %3046 = vmatprep.subr.mxu0 0.0
        %3047 = vmatpush1.msra.mxu0 0.0
        %3048 = vmatprep.subr.mxu0 0.0
        %3049 = vmatpush1.msra.mxu0 0.0
        %3050 = vmatprep.subr.mxu0 0.0
        %3051 = vmatpush1.msra.mxu0 0.0
        %3052 = vmatprep.subr.mxu0 0.0
        %3053 = vmatpush1.msra.mxu0 0.0
        %3054 = vmatprep.subr.mxu0 0.0
        %3055 = vmatpush1.msra.mxu0 0.0
        %3056 = vmatprep.subr.mxu0 0.0
        %3057 = vmatpush1.msra.mxu0 0.0
        %3058 = vmatprep.subr.mxu0 0.0
        %3059 = vmatpush1.msra.mxu0 0.0
        %3060 = vmatprep.subr.mxu0 0.0
        %3061 = vmatpush1.msra.mxu0 0.0
        %3062 = vmatprep.subr.mxu0 0.0
        %3063 = vmatpush1.msra.mxu0 0.0
        %3064 = vmatprep.subr.mxu0 0.0
        %3065 = vmatpush1.msra.mxu0 0.0
        %3066 = vmatprep.subr.mxu0 0.0
        %3067 = vmatpush1.msra.mxu0 0.0
        %3068 = vmatprep.subr.mxu0 0.0
        %3069 = vmatpush1.msra.mxu0 0.0
        %3070 = vmatprep.subr.mxu0 0.0
        %3071 = vmatpush1.msra.mxu0 0.0
        %3072 = vmatprep.subr.mxu0 0.0
        %3073 = vmatpush1.msra.mxu0 0.0
        %3074 = vmatprep.subr.mxu0 0.0
        %3075 = vmatpush1.msra.mxu0 0.0
        %3076 = vmatprep.subr.mxu0 0.0
        %3077 = vmatpush1.msra.mxu0 0.0
        %3078 = vmatprep.subr.mxu0 0.0
        %3079 = vmatpush1.msra.mxu0 0.0
        %3080 = vmatprep.subr.mxu0 0.0
        %3081 = vmatpush1.msra.mxu0 0.0
        %3082 = vmatprep.subr.mxu0 0.0
        %3083 = vmatpush1.msra.mxu0 0.0
        %3084 = vmatprep.subr.mxu0 0.0
        %3085 = vmatpush1.msra.mxu0 0.0
        %3086 = vmatprep.subr.mxu0 0.0
        %3087 = vmatpush1.msra.mxu0 0.0
        %3088 = vmatprep.subr.mxu0 0.0
        %3089 = vmatpush1.msra.mxu0 0.0
        %3090 = vmatprep.subr.mxu0 0.0
        %3091 = vmatpush1.msra.mxu0 0.0
        %3092 = vmatprep.subr.mxu0 0.0
        %3093 = vmatpush1.msra.mxu0 0.0
        %3094 = vmatprep.subr.mxu0 0.0
        %3095 = vmatpush1.msra.mxu0 0.0
        %3096 = vmatprep.subr.mxu0 0.0
        %3097 = vmatpush1.msra.mxu0 0.0
        %3098 = vmatprep.subr.mxu0 0.0
        %3099 = vmatpush1.msra.mxu0 0.0
        %3100 = vmatprep.subr.mxu0 0.0
        %3101 = vmatpush1.msra.mxu0 0.0
        %3102 = vmatprep.mubr.f32.mxu0 0.0
        %3103 = vmatmul.mubr.f32.gmra.mrb[0].mxu0 %v3036
        %v3104 = vpop.f32.mrb[0].mxu0
        %v3105 = vadd.f32 0.0, %v3104
        %v3106 = vpop.f32.mrb[0].mxu0
        %3107 = vdwg.mxu0
        %v3109 = vsel %vm2888, %v1211, 0
        %3111 = vmatprep.subr.mxu0 0.0
        %3112 = vmatpush1.msra.mxu0 %v1931
        %3113 = vmatprep.subr.mxu0 0.0
        %3114 = vmatpush1.msra.mxu0 %v2067
        %3115 = vmatprep.subr.mxu0 0.0
        %3116 = vmatpush1.msra.mxu0 0.0
        %3117 = vmatprep.subr.mxu0 0.0
        %3118 = vmatpush1.msra.mxu0 0.0
        %3119 = vmatprep.subr.mxu0 0.0
        %3120 = vmatpush1.msra.mxu0 0.0
        %3121 = vmatprep.subr.mxu0 0.0
        %3122 = vmatpush1.msra.mxu0 0.0
        %3123 = vmatprep.subr.mxu0 0.0
        %3124 = vmatpush1.msra.mxu0 0.0
        %3125 = vmatprep.subr.mxu0 0.0
        %3126 = vmatpush1.msra.mxu0 0.0
        %3127 = vmatprep.subr.mxu0 0.0
        %3128 = vmatpush1.msra.mxu0 0.0
        %3129 = vmatprep.subr.mxu0 0.0
        %3130 = vmatpush1.msra.mxu0 0.0
        %3131 = vmatprep.subr.mxu0 0.0
        %3132 = vmatpush1.msra.mxu0 0.0
        %3133 = vmatprep.subr.mxu0 0.0
        %3134 = vmatpush1.msra.mxu0 0.0
        %3135 = vmatprep.subr.mxu0 0.0
        %3136 = vmatpush1.msra.mxu0 0.0
        %3137 = vmatprep.subr.mxu0 0.0
        %3138 = vmatpush1.msra.mxu0 0.0
        %3139 = vmatprep.subr.mxu0 0.0
        %3140 = vmatpush1.msra.mxu0 0.0
        %3141 = vmatprep.subr.mxu0 0.0
        %3142 = vmatpush1.msra.mxu0 0.0
        %3143 = vmatprep.subr.mxu0 0.0
        %3144 = vmatpush1.msra.mxu0 0.0
        %3145 = vmatprep.subr.mxu0 0.0
        %3146 = vmatpush1.msra.mxu0 0.0
        %3147 = vmatprep.subr.mxu0 0.0
        %3148 = vmatpush1.msra.mxu0 0.0
        %3149 = vmatprep.subr.mxu0 0.0
        %3150 = vmatpush1.msra.mxu0 0.0
        %3151 = vmatprep.subr.mxu0 0.0
        %3152 = vmatpush1.msra.mxu0 0.0
        %3153 = vmatprep.subr.mxu0 0.0
        %3154 = vmatpush1.msra.mxu0 0.0
        %3155 = vmatprep.subr.mxu0 0.0
        %3156 = vmatpush1.msra.mxu0 0.0
        %3157 = vmatprep.subr.mxu0 0.0
        %3158 = vmatpush1.msra.mxu0 0.0
        %3159 = vmatprep.subr.mxu0 0.0
        %3160 = vmatpush1.msra.mxu0 0.0
        %3161 = vmatprep.subr.mxu0 0.0
        %3162 = vmatpush1.msra.mxu0 0.0
        %3163 = vmatprep.subr.mxu0 0.0
        %3164 = vmatpush1.msra.mxu0 0.0
        %3165 = vmatprep.subr.mxu0 0.0
        %3166 = vmatpush1.msra.mxu0 0.0
        %3167 = vmatprep.subr.mxu0 0.0
        %3168 = vmatpush1.msra.mxu0 0.0
        %3169 = vmatprep.subr.mxu0 0.0
        %3170 = vmatpush1.msra.mxu0 0.0
        %3171 = vmatprep.subr.mxu0 0.0
        %3172 = vmatpush1.msra.mxu0 0.0
        %3173 = vmatprep.subr.mxu0 0.0
        %3174 = vmatpush1.msra.mxu0 0.0
        %3175 = vmatprep.mubr.f32.mxu0 0.0
        %3176 = vmatmul.mubr.f32.gmra.mrb[0].mxu0 %v3109
        %v3177 = vpop.f32.mrb[0].mxu0
        %v3178 = vadd.f32 0.0, %v3177
        %v3179 = vpop.f32.mrb[0].mxu0
        %3180 = vdwg.mxu0
        %v3182 = vsel %vm2888, %v1212, 0
        %3184 = vmatprep.subr.mxu0 0.0
        %3185 = vmatpush1.msra.mxu0 %v1932
        %3186 = vmatprep.subr.mxu0 0.0
        %3187 = vmatpush1.msra.mxu0 %v2068
        %3188 = vmatprep.subr.mxu0 0.0
        %3189 = vmatpush1.msra.mxu0 0.0
        %3190 = vmatprep.subr.mxu0 0.0
        %3191 = vmatpush1.msra.mxu0 0.0
        %3192 = vmatprep.subr.mxu0 0.0
        %3193 = vmatpush1.msra.mxu0 0.0
        %3194 = vmatprep.subr.mxu0 0.0
        %3195 = vmatpush1.msra.mxu0 0.0
        %3196 = vmatprep.subr.mxu0 0.0
        %3197 = vmatpush1.msra.mxu0 0.0
        %3198 = vmatprep.subr.mxu0 0.0
        %3199 = vmatpush1.msra.mxu0 0.0
        %3200 = vmatprep.subr.mxu0 0.0
        %3201 = vmatpush1.msra.mxu0 0.0
        %3202 = vmatprep.subr.mxu0 0.0
        %3203 = vmatpush1.msra.mxu0 0.0
        %3204 = vmatprep.subr.mxu0 0.0
        %3205 = vmatpush1.msra.mxu0 0.0
        %3206 = vmatprep.subr.mxu0 0.0
        %3207 = vmatpush1.msra.mxu0 0.0
        %3208 = vmatprep.subr.mxu0 0.0
        %3209 = vmatpush1.msra.mxu0 0.0
        %3210 = vmatprep.subr.mxu0 0.0
        %3211 = vmatpush1.msra.mxu0 0.0
        %3212 = vmatprep.subr.mxu0 0.0
        %3213 = vmatpush1.msra.mxu0 0.0
        %3214 = vmatprep.subr.mxu0 0.0
        %3215 = vmatpush1.msra.mxu0 0.0
        %3216 = vmatprep.subr.mxu0 0.0
        %3217 = vmatpush1.msra.mxu0 0.0
        %3218 = vmatprep.subr.mxu0 0.0
        %3219 = vmatpush1.msra.mxu0 0.0
        %3220 = vmatprep.subr.mxu0 0.0
        %3221 = vmatpush1.msra.mxu0 0.0
        %3222 = vmatprep.subr.mxu0 0.0
        %3223 = vmatpush1.msra.mxu0 0.0
        %3224 = vmatprep.subr.mxu0 0.0
        %3225 = vmatpush1.msra.mxu0 0.0
        %3226 = vmatprep.subr.mxu0 0.0
        %3227 = vmatpush1.msra.mxu0 0.0
        %3228 = vmatprep.subr.mxu0 0.0
        %3229 = vmatpush1.msra.mxu0 0.0
        %3230 = vmatprep.subr.mxu0 0.0
        %3231 = vmatpush1.msra.mxu0 0.0
        %3232 = vmatprep.subr.mxu0 0.0
        %3233 = vmatpush1.msra.mxu0 0.0
        %3234 = vmatprep.subr.mxu0 0.0
        %3235 = vmatpush1.msra.mxu0 0.0
        %3236 = vmatprep.subr.mxu0 0.0
        %3237 = vmatpush1.msra.mxu0 0.0
        %3238 = vmatprep.subr.mxu0 0.0
        %3239 = vmatpush1.msra.mxu0 0.0
        %3240 = vmatprep.subr.mxu0 0.0
        %3241 = vmatpush1.msra.mxu0 0.0
        %3242 = vmatprep.subr.mxu0 0.0
        %3243 = vmatpush1.msra.mxu0 0.0
        %3244 = vmatprep.subr.mxu0 0.0
        %3245 = vmatpush1.msra.mxu0 0.0
        %3246 = vmatprep.subr.mxu0 0.0
        %3247 = vmatpush1.msra.mxu0 0.0
        %3248 = vmatprep.mubr.f32.mxu0 0.0
        %3249 = vmatmul.mubr.f32.gmra.mrb[0].mxu0 %v3182
        %v3250 = vpop.f32.mrb[0].mxu0
        %v3251 = vadd.f32 0.0, %v3250
        %v3252 = vpop.f32.mrb[0].mxu0
        %3253 = vdwg.mxu0
        %v3255 = vsel %vm2888, %v1213, 0
        %3257 = vmatprep.subr.mxu0 0.0
        %3258 = vmatpush1.msra.mxu0 %v1933
        %3259 = vmatprep.subr.mxu0 0.0
        %3260 = vmatpush1.msra.mxu0 %v2069
        %3261 = vmatprep.subr.mxu0 0.0
        %3262 = vmatpush1.msra.mxu0 0.0
        %3263 = vmatprep.subr.mxu0 0.0
        %3264 = vmatpush1.msra.mxu0 0.0
        %3265 = vmatprep.subr.mxu0 0.0
        %3266 = vmatpush1.msra.mxu0 0.0
        %3267 = vmatprep.subr.mxu0 0.0
        %3268 = vmatpush1.msra.mxu0 0.0
        %3269 = vmatprep.subr.mxu0 0.0
        %3270 = vmatpush1.msra.mxu0 0.0
        %3271 = vmatprep.subr.mxu0 0.0
        %3272 = vmatpush1.msra.mxu0 0.0
        %3273 = vmatprep.subr.mxu0 0.0
        %3274 = vmatpush1.msra.mxu0 0.0
        %3275 = vmatprep.subr.mxu0 0.0
        %3276 = vmatpush1.msra.mxu0 0.0
        %3277 = vmatprep.subr.mxu0 0.0
        %3278 = vmatpush1.msra.mxu0 0.0
        %3279 = vmatprep.subr.mxu0 0.0
        %3280 = vmatpush1.msra.mxu0 0.0
        %3281 = vmatprep.subr.mxu0 0.0
        %3282 = vmatpush1.msra.mxu0 0.0
        %3283 = vmatprep.subr.mxu0 0.0
        %3284 = vmatpush1.msra.mxu0 0.0
        %3285 = vmatprep.subr.mxu0 0.0
        %3286 = vmatpush1.msra.mxu0 0.0
        %3287 = vmatprep.subr.mxu0 0.0
        %3288 = vmatpush1.msra.mxu0 0.0
        %3289 = vmatprep.subr.mxu0 0.0
        %3290 = vmatpush1.msra.mxu0 0.0
        %3291 = vmatprep.subr.mxu0 0.0
        %3292 = vmatpush1.msra.mxu0 0.0
        %3293 = vmatprep.subr.mxu0 0.0
        %3294 = vmatpush1.msra.mxu0 0.0
        %3295 = vmatprep.subr.mxu0 0.0
        %3296 = vmatpush1.msra.mxu0 0.0
        %3297 = vmatprep.subr.mxu0 0.0
        %3298 = vmatpush1.msra.mxu0 0.0
        %3299 = vmatprep.subr.mxu0 0.0
        %3300 = vmatpush1.msra.mxu0 0.0
        %3301 = vmatprep.subr.mxu0 0.0
        %3302 = vmatpush1.msra.mxu0 0.0
        %3303 = vmatprep.subr.mxu0 0.0
        %3304 = vmatpush1.msra.mxu0 0.0
        %3305 = vmatprep.subr.mxu0 0.0
        %3306 = vmatpush1.msra.mxu0 0.0
        %3307 = vmatprep.subr.mxu0 0.0
        %3308 = vmatpush1.msra.mxu0 0.0
        %3309 = vmatprep.subr.mxu0 0.0
        %3310 = vmatpush1.msra.mxu0 0.0
        %3311 = vmatprep.subr.mxu0 0.0
        %3312 = vmatpush1.msra.mxu0 0.0
        %3313 = vmatprep.subr.mxu0 0.0
        %3314 = vmatpush1.msra.mxu0 0.0
        %3315 = vmatprep.subr.mxu0 0.0
        %3316 = vmatpush1.msra.mxu0 0.0
        %3317 = vmatprep.subr.mxu0 0.0
        %3318 = vmatpush1.msra.mxu0 0.0
        %3319 = vmatprep.subr.mxu0 0.0
        %3320 = vmatpush1.msra.mxu0 0.0
        %3321 = vmatprep.mubr.f32.mxu0 0.0
        %3322 = vmatmul.mubr.f32.gmra.mrb[0].mxu0 %v3255
        %v3323 = vpop.f32.mrb[0].mxu0
        %v3324 = vadd.f32 0.0, %v3323
        %v3325 = vpop.f32.mrb[0].mxu0
        %3326 = vdwg.mxu0
        %v3328 = vsel %vm2888, %v1214, 0
        %3330 = vmatprep.subr.mxu0 0.0
        %3331 = vmatpush1.msra.mxu0 %v1934
        %3332 = vmatprep.subr.mxu0 0.0
        %3333 = vmatpush1.msra.mxu0 %v2070
        %3334 = vmatprep.subr.mxu0 0.0
        %3335 = vmatpush1.msra.mxu0 0.0
        %3336 = vmatprep.subr.mxu0 0.0
        %3337 = vmatpush1.msra.mxu0 0.0
        %3338 = vmatprep.subr.mxu0 0.0
        %3339 = vmatpush1.msra.mxu0 0.0
        %3340 = vmatprep.subr.mxu0 0.0
        %3341 = vmatpush1.msra.mxu0 0.0
        %3342 = vmatprep.subr.mxu0 0.0
        %3343 = vmatpush1.msra.mxu0 0.0
        %3344 = vmatprep.subr.mxu0 0.0
        %3345 = vmatpush1.msra.mxu0 0.0
        %3346 = vmatprep.subr.mxu0 0.0
        %3347 = vmatpush1.msra.mxu0 0.0
        %3348 = vmatprep.subr.mxu0 0.0
        %3349 = vmatpush1.msra.mxu0 0.0
        %3350 = vmatprep.subr.mxu0 0.0
        %3351 = vmatpush1.msra.mxu0 0.0
        %3352 = vmatprep.subr.mxu0 0.0
        %3353 = vmatpush1.msra.mxu0 0.0
        %3354 = vmatprep.subr.mxu0 0.0
        %3355 = vmatpush1.msra.mxu0 0.0
        %3356 = vmatprep.subr.mxu0 0.0
        %3357 = vmatpush1.msra.mxu0 0.0
        %3358 = vmatprep.subr.mxu0 0.0
        %3359 = vmatpush1.msra.mxu0 0.0
        %3360 = vmatprep.subr.mxu0 0.0
        %3361 = vmatpush1.msra.mxu0 0.0
        %3362 = vmatprep.subr.mxu0 0.0
        %3363 = vmatpush1.msra.mxu0 0.0
        %3364 = vmatprep.subr.mxu0 0.0
        %3365 = vmatpush1.msra.mxu0 0.0
        %3366 = vmatprep.subr.mxu0 0.0
        %3367 = vmatpush1.msra.mxu0 0.0
        %3368 = vmatprep.subr.mxu0 0.0
        %3369 = vmatpush1.msra.mxu0 0.0
        %3370 = vmatprep.subr.mxu0 0.0
        %3371 = vmatpush1.msra.mxu0 0.0
        %3372 = vmatprep.subr.mxu0 0.0
        %3373 = vmatpush1.msra.mxu0 0.0
        %3374 = vmatprep.subr.mxu0 0.0
        %3375 = vmatpush1.msra.mxu0 0.0
        %3376 = vmatprep.subr.mxu0 0.0
        %3377 = vmatpush1.msra.mxu0 0.0
        %3378 = vmatprep.subr.mxu0 0.0
        %3379 = vmatpush1.msra.mxu0 0.0
        %3380 = vmatprep.subr.mxu0 0.0
        %3381 = vmatpush1.msra.mxu0 0.0
        %3382 = vmatprep.subr.mxu0 0.0
        %3383 = vmatpush1.msra.mxu0 0.0
        %3384 = vmatprep.subr.mxu0 0.0
        %3385 = vmatpush1.msra.mxu0 0.0
        %3386 = vmatprep.subr.mxu0 0.0
        %3387 = vmatpush1.msra.mxu0 0.0
        %3388 = vmatprep.subr.mxu0 0.0
        %3389 = vmatpush1.msra.mxu0 0.0
        %3390 = vmatprep.subr.mxu0 0.0
        %3391 = vmatpush1.msra.mxu0 0.0
        %3392 = vmatprep.subr.mxu0 0.0
        %3393 = vmatpush1.msra.mxu0 0.0
        %3394 = vmatprep.mubr.f32.mxu0 0.0
        %3395 = vmatmul.mubr.f32.gmra.mrb[0].mxu0 %v3328
        %v3396 = vpop.f32.mrb[0].mxu0
        %v3397 = vadd.f32 0.0, %v3396
        %v3398 = vpop.f32.mrb[0].mxu0
        %3399 = vdwg.mxu0
        %v3401 = vsel %vm2888, %v1215, 0
        %3403 = vmatprep.subr.mxu0 0.0
        %3404 = vmatpush1.msra.mxu0 %v1935
        %3405 = vmatprep.subr.mxu0 0.0
        %3406 = vmatpush1.msra.mxu0 %v2071
        %3407 = vmatprep.subr.mxu0 0.0
        %3408 = vmatpush1.msra.mxu0 0.0
        %3409 = vmatprep.subr.mxu0 0.0
        %3410 = vmatpush1.msra.mxu0 0.0
        %3411 = vmatprep.subr.mxu0 0.0
        %3412 = vmatpush1.msra.mxu0 0.0
        %3413 = vmatprep.subr.mxu0 0.0
        %3414 = vmatpush1.msra.mxu0 0.0
        %3415 = vmatprep.subr.mxu0 0.0
        %3416 = vmatpush1.msra.mxu0 0.0
        %3417 = vmatprep.subr.mxu0 0.0
        %3418 = vmatpush1.msra.mxu0 0.0
        %3419 = vmatprep.subr.mxu0 0.0
        %3420 = vmatpush1.msra.mxu0 0.0
        %3421 = vmatprep.subr.mxu0 0.0
        %3422 = vmatpush1.msra.mxu0 0.0
        %3423 = vmatprep.subr.mxu0 0.0
        %3424 = vmatpush1.msra.mxu0 0.0
        %3425 = vmatprep.subr.mxu0 0.0
        %3426 = vmatpush1.msra.mxu0 0.0
        %3427 = vmatprep.subr.mxu0 0.0
        %3428 = vmatpush1.msra.mxu0 0.0
        %3429 = vmatprep.subr.mxu0 0.0
        %3430 = vmatpush1.msra.mxu0 0.0
        %3431 = vmatprep.subr.mxu0 0.0
        %3432 = vmatpush1.msra.mxu0 0.0
        %3433 = vmatprep.subr.mxu0 0.0
        %3434 = vmatpush1.msra.mxu0 0.0
        %3435 = vmatprep.subr.mxu0 0.0
        %3436 = vmatpush1.msra.mxu0 0.0
        %3437 = vmatprep.subr.mxu0 0.0
        %3438 = vmatpush1.msra.mxu0 0.0
        %3439 = vmatprep.subr.mxu0 0.0
        %3440 = vmatpush1.msra.mxu0 0.0
        %3441 = vmatprep.subr.mxu0 0.0
        %3442 = vmatpush1.msra.mxu0 0.0
        %3443 = vmatprep.subr.mxu0 0.0
        %3444 = vmatpush1.msra.mxu0 0.0
        %3445 = vmatprep.subr.mxu0 0.0
        %3446 = vmatpush1.msra.mxu0 0.0
        %3447 = vmatprep.subr.mxu0 0.0
        %3448 = vmatpush1.msra.mxu0 0.0
        %3449 = vmatprep.subr.mxu0 0.0
        %3450 = vmatpush1.msra.mxu0 0.0
        %3451 = vmatprep.subr.mxu0 0.0
        %3452 = vmatpush1.msra.mxu0 0.0
        %3453 = vmatprep.subr.mxu0 0.0
        %3454 = vmatpush1.msra.mxu0 0.0
        %3455 = vmatprep.subr.mxu0 0.0
        %3456 = vmatpush1.msra.mxu0 0.0
        %3457 = vmatprep.subr.mxu0 0.0
        %3458 = vmatpush1.msra.mxu0 0.0
        %3459 = vmatprep.subr.mxu0 0.0
        %3460 = vmatpush1.msra.mxu0 0.0
        %3461 = vmatprep.subr.mxu0 0.0
        %3462 = vmatpush1.msra.mxu0 0.0
        %3463 = vmatprep.subr.mxu0 0.0
        %3464 = vmatpush1.msra.mxu0 0.0
        %3465 = vmatprep.subr.mxu0 0.0
        %3466 = vmatpush1.msra.mxu0 0.0
        %3467 = vmatprep.mubr.f32.mxu0 0.0
        %3468 = vmatmul.mubr.f32.gmra.mrb[0].mxu0 %v3401
        %v3469 = vpop.f32.mrb[0].mxu0
        %v3470 = vadd.f32 0.0, %v3469
        %v3471 = vpop.f32.mrb[0].mxu0
        %3472 = vdwg.mxu0
        %v3474 = vsel %vm2888, %v1344, 0
        %3476 = vmatprep.subr.mxu0 0.0
        %3477 = vmatpush1.msra.mxu0 %v2200
        %3478 = vmatprep.subr.mxu0 0.0
        %3479 = vmatpush1.msra.mxu0 %v2336
        %3480 = vmatprep.subr.mxu0 0.0
        %3481 = vmatpush1.msra.mxu0 0.0
        %3482 = vmatprep.subr.mxu0 0.0
        %3483 = vmatpush1.msra.mxu0 0.0
        %3484 = vmatprep.subr.mxu0 0.0
        %3485 = vmatpush1.msra.mxu0 0.0
        %3486 = vmatprep.subr.mxu0 0.0
        %3487 = vmatpush1.msra.mxu0 0.0
        %3488 = vmatprep.subr.mxu0 0.0
        %3489 = vmatpush1.msra.mxu0 0.0
        %3490 = vmatprep.subr.mxu0 0.0
        %3491 = vmatpush1.msra.mxu0 0.0
        %3492 = vmatprep.subr.mxu0 0.0
        %3493 = vmatpush1.msra.mxu0 0.0
        %3494 = vmatprep.subr.mxu0 0.0
        %3495 = vmatpush1.msra.mxu0 0.0
        %3496 = vmatprep.subr.mxu0 0.0
        %3497 = vmatpush1.msra.mxu0 0.0
        %3498 = vmatprep.subr.mxu0 0.0
        %3499 = vmatpush1.msra.mxu0 0.0
        %3500 = vmatprep.subr.mxu0 0.0
        %3501 = vmatpush1.msra.mxu0 0.0
        %3502 = vmatprep.subr.mxu0 0.0
        %3503 = vmatpush1.msra.mxu0 0.0
        %3504 = vmatprep.subr.mxu0 0.0
        %3505 = vmatpush1.msra.mxu0 0.0
        %3506 = vmatprep.subr.mxu0 0.0
        %3507 = vmatpush1.msra.mxu0 0.0
        %3508 = vmatprep.subr.mxu0 0.0
        %3509 = vmatpush1.msra.mxu0 0.0
        %3510 = vmatprep.subr.mxu0 0.0
        %3511 = vmatpush1.msra.mxu0 0.0
        %3512 = vmatprep.subr.mxu0 0.0
        %3513 = vmatpush1.msra.mxu0 0.0
        %3514 = vmatprep.subr.mxu0 0.0
        %3515 = vmatpush1.msra.mxu0 0.0
        %3516 = vmatprep.subr.mxu0 0.0
        %3517 = vmatpush1.msra.mxu0 0.0
        %3518 = vmatprep.subr.mxu0 0.0
        %3519 = vmatpush1.msra.mxu0 0.0
        %3520 = vmatprep.subr.mxu0 0.0
        %3521 = vmatpush1.msra.mxu0 0.0
        %3522 = vmatprep.subr.mxu0 0.0
        %3523 = vmatpush1.msra.mxu0 0.0
        %3524 = vmatprep.subr.mxu0 0.0
        %3525 = vmatpush1.msra.mxu0 0.0
        %3526 = vmatprep.subr.mxu0 0.0
        %3527 = vmatpush1.msra.mxu0 0.0
        %3528 = vmatprep.subr.mxu0 0.0
        %3529 = vmatpush1.msra.mxu0 0.0
        %3530 = vmatprep.subr.mxu0 0.0
        %3531 = vmatpush1.msra.mxu0 0.0
        %3532 = vmatprep.subr.mxu0 0.0
        %3533 = vmatpush1.msra.mxu0 0.0
        %3534 = vmatprep.subr.mxu0 0.0
        %3535 = vmatpush1.msra.mxu0 0.0
        %3536 = vmatprep.subr.mxu0 0.0
        %3537 = vmatpush1.msra.mxu0 0.0
        %3538 = vmatprep.subr.mxu0 0.0
        %3539 = vmatpush1.msra.mxu0 0.0
        %3540 = vmatprep.mubr.f32.mxu0 0.0
        %3541 = vmatmul.mubr.f32.gmra.mrb[0].mxu0 %v3474
        %v3542 = vpop.f32.mrb[0].mxu0
        %v3543 = vadd.f32 0.0, %v3542
        %v3544 = vpop.f32.mrb[0].mxu0
        %3545 = vdwg.mxu0
        %v3547 = vsel %vm2888, %v1345, 0
        %3549 = vmatprep.subr.mxu0 0.0
        %3550 = vmatpush1.msra.mxu0 %v2201
        %3551 = vmatprep.subr.mxu0 0.0
        %3552 = vmatpush1.msra.mxu0 %v2337
        %3553 = vmatprep.subr.mxu0 0.0
        %3554 = vmatpush1.msra.mxu0 0.0
        %3555 = vmatprep.subr.mxu0 0.0
        %3556 = vmatpush1.msra.mxu0 0.0
        %3557 = vmatprep.subr.mxu0 0.0
        %3558 = vmatpush1.msra.mxu0 0.0
        %3559 = vmatprep.subr.mxu0 0.0
        %3560 = vmatpush1.msra.mxu0 0.0
        %3561 = vmatprep.subr.mxu0 0.0
        %3562 = vmatpush1.msra.mxu0 0.0
        %3563 = vmatprep.subr.mxu0 0.0
        %3564 = vmatpush1.msra.mxu0 0.0
        %3565 = vmatprep.subr.mxu0 0.0
        %3566 = vmatpush1.msra.mxu0 0.0
        %3567 = vmatprep.subr.mxu0 0.0
        %3568 = vmatpush1.msra.mxu0 0.0
        %3569 = vmatprep.subr.mxu0 0.0
        %3570 = vmatpush1.msra.mxu0 0.0
        %3571 = vmatprep.subr.mxu0 0.0
        %3572 = vmatpush1.msra.mxu0 0.0
        %3573 = vmatprep.subr.mxu0 0.0
        %3574 = vmatpush1.msra.mxu0 0.0
        %3575 = vmatprep.subr.mxu0 0.0
        %3576 = vmatpush1.msra.mxu0 0.0
        %3577 = vmatprep.subr.mxu0 0.0
        %3578 = vmatpush1.msra.mxu0 0.0
        %3579 = vmatprep.subr.mxu0 0.0
        %3580 = vmatpush1.msra.mxu0 0.0
        %3581 = vmatprep.subr.mxu0 0.0
        %3582 = vmatpush1.msra.mxu0 0.0
        %3583 = vmatprep.subr.mxu0 0.0
        %3584 = vmatpush1.msra.mxu0 0.0
        %3585 = vmatprep.subr.mxu0 0.0
        %3586 = vmatpush1.msra.mxu0 0.0
        %3587 = vmatprep.subr.mxu0 0.0
        %3588 = vmatpush1.msra.mxu0 0.0
        %3589 = vmatprep.subr.mxu0 0.0
        %3590 = vmatpush1.msra.mxu0 0.0
        %3591 = vmatprep.subr.mxu0 0.0
        %3592 = vmatpush1.msra.mxu0 0.0
        %3593 = vmatprep.subr.mxu0 0.0
        %3594 = vmatpush1.msra.mxu0 0.0
        %3595 = vmatprep.subr.mxu0 0.0
        %3596 = vmatpush1.msra.mxu0 0.0
        %3597 = vmatprep.subr.mxu0 0.0
        %3598 = vmatpush1.msra.mxu0 0.0
        %3599 = vmatprep.subr.mxu0 0.0
        %3600 = vmatpush1.msra.mxu0 0.0
        %3601 = vmatprep.subr.mxu0 0.0
        %3602 = vmatpush1.msra.mxu0 0.0
        %3603 = vmatprep.subr.mxu0 0.0
        %3604 = vmatpush1.msra.mxu0 0.0
        %3605 = vmatprep.subr.mxu0 0.0
        %3606 = vmatpush1.msra.mxu0 0.0
        %3607 = vmatprep.subr.mxu0 0.0
        %3608 = vmatpush1.msra.mxu0 0.0
        %3609 = vmatprep.subr.mxu0 0.0
        %3610 = vmatpush1.msra.mxu0 0.0
        %3611 = vmatprep.subr.mxu0 0.0
        %3612 = vmatpush1.msra.mxu0 0.0
        %3613 = vmatprep.mubr.f32.mxu0 0.0
        %3614 = vmatmul.mubr.f32.gmra.mrb[0].mxu0 %v3547
        %v3615 = vpop.f32.mrb[0].mxu0
        %v3616 = vadd.f32 0.0, %v3615
        %v3617 = vpop.f32.mrb[0].mxu0
        %3618 = vdwg.mxu0
        %v3620 = vsel %vm2888, %v1346, 0
        %3622 = vmatprep.subr.mxu0 0.0
        %3623 = vmatpush1.msra.mxu0 %v2202
        %3624 = vmatprep.subr.mxu0 0.0
        %3625 = vmatpush1.msra.mxu0 %v2338
        %3626 = vmatprep.subr.mxu0 0.0
        %3627 = vmatpush1.msra.mxu0 0.0
        %3628 = vmatprep.subr.mxu0 0.0
        %3629 = vmatpush1.msra.mxu0 0.0
        %3630 = vmatprep.subr.mxu0 0.0
        %3631 = vmatpush1.msra.mxu0 0.0
        %3632 = vmatprep.subr.mxu0 0.0
        %3633 = vmatpush1.msra.mxu0 0.0
        %3634 = vmatprep.subr.mxu0 0.0
        %3635 = vmatpush1.msra.mxu0 0.0
        %3636 = vmatprep.subr.mxu0 0.0
        %3637 = vmatpush1.msra.mxu0 0.0
        %3638 = vmatprep.subr.mxu0 0.0
        %3639 = vmatpush1.msra.mxu0 0.0
        %3640 = vmatprep.subr.mxu0 0.0
        %3641 = vmatpush1.msra.mxu0 0.0
        %3642 = vmatprep.subr.mxu0 0.0
        %3643 = vmatpush1.msra.mxu0 0.0
        %3644 = vmatprep.subr.mxu0 0.0
        %3645 = vmatpush1.msra.mxu0 0.0
        %3646 = vmatprep.subr.mxu0 0.0
        %3647 = vmatpush1.msra.mxu0 0.0
        %3648 = vmatprep.subr.mxu0 0.0
        %3649 = vmatpush1.msra.mxu0 0.0
        %3650 = vmatprep.subr.mxu0 0.0
        %3651 = vmatpush1.msra.mxu0 0.0
        %3652 = vmatprep.subr.mxu0 0.0
        %3653 = vmatpush1.msra.mxu0 0.0
        %3654 = vmatprep.subr.mxu0 0.0
        %3655 = vmatpush1.msra.mxu0 0.0
        %3656 = vmatprep.subr.mxu0 0.0
        %3657 = vmatpush1.msra.mxu0 0.0
        %3658 = vmatprep.subr.mxu0 0.0
        %3659 = vmatpush1.msra.mxu0 0.0
        %3660 = vmatprep.subr.mxu0 0.0
        %3661 = vmatpush1.msra.mxu0 0.0
        %3662 = vmatprep.subr.mxu0 0.0
        %3663 = vmatpush1.msra.mxu0 0.0
        %3664 = vmatprep.subr.mxu0 0.0
        %3665 = vmatpush1.msra.mxu0 0.0
        %3666 = vmatprep.subr.mxu0 0.0
        %3667 = vmatpush1.msra.mxu0 0.0
        %3668 = vmatprep.subr.mxu0 0.0
        %3669 = vmatpush1.msra.mxu0 0.0
        %3670 = vmatprep.subr.mxu0 0.0
        %3671 = vmatpush1.msra.mxu0 0.0
        %3672 = vmatprep.subr.mxu0 0.0
        %3673 = vmatpush1.msra.mxu0 0.0
        %3674 = vmatprep.subr.mxu0 0.0
        %3675 = vmatpush1.msra.mxu0 0.0
        %3676 = vmatprep.subr.mxu0 0.0
        %3677 = vmatpush1.msra.mxu0 0.0
        %3678 = vmatprep.subr.mxu0 0.0
        %3679 = vmatpush1.msra.mxu0 0.0
        %3680 = vmatprep.subr.mxu0 0.0
        %3681 = vmatpush1.msra.mxu0 0.0
        %3682 = vmatprep.subr.mxu0 0.0
        %3683 = vmatpush1.msra.mxu0 0.0
        %3684 = vmatprep.subr.mxu0 0.0
        %3685 = vmatpush1.msra.mxu0 0.0
        %3686 = vmatprep.mubr.f32.mxu0 0.0
        %3687 = vmatmul.mubr.f32.gmra.mrb[0].mxu0 %v3620
        %v3688 = vpop.f32.mrb[0].mxu0
        %v3689 = vadd.f32 0.0, %v3688
        %v3690 = vpop.f32.mrb[0].mxu0
        %3691 = vdwg.mxu0
        %v3693 = vsel %vm2888, %v1347, 0
        %3695 = vmatprep.subr.mxu0 0.0
        %3696 = vmatpush1.msra.mxu0 %v2203
        %3697 = vmatprep.subr.mxu0 0.0
        %3698 = vmatpush1.msra.mxu0 %v2339
        %3699 = vmatprep.subr.mxu0 0.0
        %3700 = vmatpush1.msra.mxu0 0.0
        %3701 = vmatprep.subr.mxu0 0.0
        %3702 = vmatpush1.msra.mxu0 0.0
        %3703 = vmatprep.subr.mxu0 0.0
        %3704 = vmatpush1.msra.mxu0 0.0
        %3705 = vmatprep.subr.mxu0 0.0
        %3706 = vmatpush1.msra.mxu0 0.0
        %3707 = vmatprep.subr.mxu0 0.0
        %3708 = vmatpush1.msra.mxu0 0.0
        %3709 = vmatprep.subr.mxu0 0.0
        %3710 = vmatpush1.msra.mxu0 0.0
        %3711 = vmatprep.subr.mxu0 0.0
        %3712 = vmatpush1.msra.mxu0 0.0
        %3713 = vmatprep.subr.mxu0 0.0
        %3714 = vmatpush1.msra.mxu0 0.0
        %3715 = vmatprep.subr.mxu0 0.0
        %3716 = vmatpush1.msra.mxu0 0.0
        %3717 = vmatprep.subr.mxu0 0.0
        %3718 = vmatpush1.msra.mxu0 0.0
        %3719 = vmatprep.subr.mxu0 0.0
        %3720 = vmatpush1.msra.mxu0 0.0
        %3721 = vmatprep.subr.mxu0 0.0
        %3722 = vmatpush1.msra.mxu0 0.0
        %3723 = vmatprep.subr.mxu0 0.0
        %3724 = vmatpush1.msra.mxu0 0.0
        %3725 = vmatprep.subr.mxu0 0.0
        %3726 = vmatpush1.msra.mxu0 0.0
        %3727 = vmatprep.subr.mxu0 0.0
        %3728 = vmatpush1.msra.mxu0 0.0
        %3729 = vmatprep.subr.mxu0 0.0
        %3730 = vmatpush1.msra.mxu0 0.0
        %3731 = vmatprep.subr.mxu0 0.0
        %3732 = vmatpush1.msra.mxu0 0.0
        %3733 = vmatprep.subr.mxu0 0.0
        %3734 = vmatpush1.msra.mxu0 0.0
        %3735 = vmatprep.subr.mxu0 0.0
        %3736 = vmatpush1.msra.mxu0 0.0
        %3737 = vmatprep.subr.mxu0 0.0
        %3738 = vmatpush1.msra.mxu0 0.0
        %3739 = vmatprep.subr.mxu0 0.0
        %3740 = vmatpush1.msra.mxu0 0.0
        %3741 = vmatprep.subr.mxu0 0.0
        %3742 = vmatpush1.msra.mxu0 0.0
        %3743 = vmatprep.subr.mxu0 0.0
        %3744 = vmatpush1.msra.mxu0 0.0
        %3745 = vmatprep.subr.mxu0 0.0
        %3746 = vmatpush1.msra.mxu0 0.0
        %3747 = vmatprep.subr.mxu0 0.0
        %3748 = vmatpush1.msra.mxu0 0.0
        %3749 = vmatprep.subr.mxu0 0.0
        %3750 = vmatpush1.msra.mxu0 0.0
        %3751 = vmatprep.subr.mxu0 0.0
        %3752 = vmatpush1.msra.mxu0 0.0
        %3753 = vmatprep.subr.mxu0 0.0
        %3754 = vmatpush1.msra.mxu0 0.0
        %3755 = vmatprep.subr.mxu0 0.0
        %3756 = vmatpush1.msra.mxu0 0.0
        %3757 = vmatprep.subr.mxu0 0.0
        %3758 = vmatpush1.msra.mxu0 0.0
        %3759 = vmatprep.mubr.f32.mxu0 0.0
        %3760 = vmatmul.mubr.f32.gmra.mrb[0].mxu0 %v3693
        %v3761 = vpop.f32.mrb[0].mxu0
        %v3762 = vadd.f32 0.0, %v3761
        %v3763 = vpop.f32.mrb[0].mxu0
        %3764 = vdwg.mxu0
        %v3766 = vsel %vm2888, %v1348, 0
        %3768 = vmatprep.subr.mxu0 0.0
        %3769 = vmatpush1.msra.mxu0 %v2204
        %3770 = vmatprep.subr.mxu0 0.0
        %3771 = vmatpush1.msra.mxu0 %v2340
        %3772 = vmatprep.subr.mxu0 0.0
        %3773 = vmatpush1.msra.mxu0 0.0
        %3774 = vmatprep.subr.mxu0 0.0
        %3775 = vmatpush1.msra.mxu0 0.0
        %3776 = vmatprep.subr.mxu0 0.0
        %3777 = vmatpush1.msra.mxu0 0.0
        %3778 = vmatprep.subr.mxu0 0.0
        %3779 = vmatpush1.msra.mxu0 0.0
        %3780 = vmatprep.subr.mxu0 0.0
        %3781 = vmatpush1.msra.mxu0 0.0
        %3782 = vmatprep.subr.mxu0 0.0
        %3783 = vmatpush1.msra.mxu0 0.0
        %3784 = vmatprep.subr.mxu0 0.0
        %3785 = vmatpush1.msra.mxu0 0.0
        %3786 = vmatprep.subr.mxu0 0.0
        %3787 = vmatpush1.msra.mxu0 0.0
        %3788 = vmatprep.subr.mxu0 0.0
        %3789 = vmatpush1.msra.mxu0 0.0
        %3790 = vmatprep.subr.mxu0 0.0
        %3791 = vmatpush1.msra.mxu0 0.0
        %3792 = vmatprep.subr.mxu0 0.0
        %3793 = vmatpush1.msra.mxu0 0.0
        %3794 = vmatprep.subr.mxu0 0.0
        %3795 = vmatpush1.msra.mxu0 0.0
        %3796 = vmatprep.subr.mxu0 0.0
        %3797 = vmatpush1.msra.mxu0 0.0
        %3798 = vmatprep.subr.mxu0 0.0
        %3799 = vmatpush1.msra.mxu0 0.0
        %3800 = vmatprep.subr.mxu0 0.0
        %3801 = vmatpush1.msra.mxu0 0.0
        %3802 = vmatprep.subr.mxu0 0.0
        %3803 = vmatpush1.msra.mxu0 0.0
        %3804 = vmatprep.subr.mxu0 0.0
        %3805 = vmatpush1.msra.mxu0 0.0
        %3806 = vmatprep.subr.mxu0 0.0
        %3807 = vmatpush1.msra.mxu0 0.0
        %3808 = vmatprep.subr.mxu0 0.0
        %3809 = vmatpush1.msra.mxu0 0.0
        %3810 = vmatprep.subr.mxu0 0.0
        %3811 = vmatpush1.msra.mxu0 0.0
        %3812 = vmatprep.subr.mxu0 0.0
        %3813 = vmatpush1.msra.mxu0 0.0
        %3814 = vmatprep.subr.mxu0 0.0
        %3815 = vmatpush1.msra.mxu0 0.0
        %3816 = vmatprep.subr.mxu0 0.0
        %3817 = vmatpush1.msra.mxu0 0.0
        %3818 = vmatprep.subr.mxu0 0.0
        %3819 = vmatpush1.msra.mxu0 0.0
        %3820 = vmatprep.subr.mxu0 0.0
        %3821 = vmatpush1.msra.mxu0 0.0
        %3822 = vmatprep.subr.mxu0 0.0
        %3823 = vmatpush1.msra.mxu0 0.0
        %3824 = vmatprep.subr.mxu0 0.0
        %3825 = vmatpush1.msra.mxu0 0.0
        %3826 = vmatprep.subr.mxu0 0.0
        %3827 = vmatpush1.msra.mxu0 0.0
        %3828 = vmatprep.subr.mxu0 0.0
        %3829 = vmatpush1.msra.mxu0 0.0
        %3830 = vmatprep.subr.mxu0 0.0
        %3831 = vmatpush1.msra.mxu0 0.0
        %3832 = vmatprep.mubr.f32.mxu0 0.0
        %3833 = vmatmul.mubr.f32.gmra.mrb[0].mxu0 %v3766
        %v3834 = vpop.f32.mrb[0].mxu0
        %v3835 = vadd.f32 0.0, %v3834
        %v3836 = vpop.f32.mrb[0].mxu0
        %3837 = vdwg.mxu0
        %v3839 = vsel %vm2888, %v1349, 0
        %3841 = vmatprep.subr.mxu0 0.0
        %3842 = vmatpush1.msra.mxu0 %v2205
        %3843 = vmatprep.subr.mxu0 0.0
        %3844 = vmatpush1.msra.mxu0 %v2341
        %3845 = vmatprep.subr.mxu0 0.0
        %3846 = vmatpush1.msra.mxu0 0.0
        %3847 = vmatprep.subr.mxu0 0.0
        %3848 = vmatpush1.msra.mxu0 0.0
        %3849 = vmatprep.subr.mxu0 0.0
        %3850 = vmatpush1.msra.mxu0 0.0
        %3851 = vmatprep.subr.mxu0 0.0
        %3852 = vmatpush1.msra.mxu0 0.0
        %3853 = vmatprep.subr.mxu0 0.0
        %3854 = vmatpush1.msra.mxu0 0.0
        %3855 = vmatprep.subr.mxu0 0.0
        %3856 = vmatpush1.msra.mxu0 0.0
        %3857 = vmatprep.subr.mxu0 0.0
        %3858 = vmatpush1.msra.mxu0 0.0
        %3859 = vmatprep.subr.mxu0 0.0
        %3860 = vmatpush1.msra.mxu0 0.0
        %3861 = vmatprep.subr.mxu0 0.0
        %3862 = vmatpush1.msra.mxu0 0.0
        %3863 = vmatprep.subr.mxu0 0.0
        %3864 = vmatpush1.msra.mxu0 0.0
        %3865 = vmatprep.subr.mxu0 0.0
        %3866 = vmatpush1.msra.mxu0 0.0
        %3867 = vmatprep.subr.mxu0 0.0
        %3868 = vmatpush1.msra.mxu0 0.0
        %3869 = vmatprep.subr.mxu0 0.0
        %3870 = vmatpush1.msra.mxu0 0.0
        %3871 = vmatprep.subr.mxu0 0.0
        %3872 = vmatpush1.msra.mxu0 0.0
        %3873 = vmatprep.subr.mxu0 0.0
        %3874 = vmatpush1.msra.mxu0 0.0
        %3875 = vmatprep.subr.mxu0 0.0
        %3876 = vmatpush1.msra.mxu0 0.0
        %3877 = vmatprep.subr.mxu0 0.0
        %3878 = vmatpush1.msra.mxu0 0.0
        %3879 = vmatprep.subr.mxu0 0.0
        %3880 = vmatpush1.msra.mxu0 0.0
        %3881 = vmatprep.subr.mxu0 0.0
        %3882 = vmatpush1.msra.mxu0 0.0
        %3883 = vmatprep.subr.mxu0 0.0
        %3884 = vmatpush1.msra.mxu0 0.0
        %3885 = vmatprep.subr.mxu0 0.0
        %3886 = vmatpush1.msra.mxu0 0.0
        %3887 = vmatprep.subr.mxu0 0.0
        %3888 = vmatpush1.msra.mxu0 0.0
        %3889 = vmatprep.subr.mxu0 0.0
        %3890 = vmatpush1.msra.mxu0 0.0
        %3891 = vmatprep.subr.mxu0 0.0
        %3892 = vmatpush1.msra.mxu0 0.0
        %3893 = vmatprep.subr.mxu0 0.0
        %3894 = vmatpush1.msra.mxu0 0.0
        %3895 = vmatprep.subr.mxu0 0.0
        %3896 = vmatpush1.msra.mxu0 0.0
        %3897 = vmatprep.subr.mxu0 0.0
        %3898 = vmatpush1.msra.mxu0 0.0
        %3899 = vmatprep.subr.mxu0 0.0
        %3900 = vmatpush1.msra.mxu0 0.0
        %3901 = vmatprep.subr.mxu0 0.0
        %3902 = vmatpush1.msra.mxu0 0.0
        %3903 = vmatprep.subr.mxu0 0.0
        %3904 = vmatpush1.msra.mxu0 0.0
        %3905 = vmatprep.mubr.f32.mxu0 0.0
        %3906 = vmatmul.mubr.f32.gmra.mrb[0].mxu0 %v3839
        %v3907 = vpop.f32.mrb[0].mxu0
        %v3908 = vadd.f32 0.0, %v3907
        %v3909 = vpop.f32.mrb[0].mxu0
        %3910 = vdwg.mxu0
        %v3912 = vsel %vm2888, %v1350, 0
        %3914 = vmatprep.subr.mxu0 0.0
        %3915 = vmatpush1.msra.mxu0 %v2206
        %3916 = vmatprep.subr.mxu0 0.0
        %3917 = vmatpush1.msra.mxu0 %v2342
        %3918 = vmatprep.subr.mxu0 0.0
        %3919 = vmatpush1.msra.mxu0 0.0
        %3920 = vmatprep.subr.mxu0 0.0
        %3921 = vmatpush1.msra.mxu0 0.0
        %3922 = vmatprep.subr.mxu0 0.0
        %3923 = vmatpush1.msra.mxu0 0.0
        %3924 = vmatprep.subr.mxu0 0.0
        %3925 = vmatpush1.msra.mxu0 0.0
        %3926 = vmatprep.subr.mxu0 0.0
        %3927 = vmatpush1.msra.mxu0 0.0
        %3928 = vmatprep.subr.mxu0 0.0
        %3929 = vmatpush1.msra.mxu0 0.0
        %3930 = vmatprep.subr.mxu0 0.0
        %3931 = vmatpush1.msra.mxu0 0.0
        %3932 = vmatprep.subr.mxu0 0.0
        %3933 = vmatpush1.msra.mxu0 0.0
        %3934 = vmatprep.subr.mxu0 0.0
        %3935 = vmatpush1.msra.mxu0 0.0
        %3936 = vmatprep.subr.mxu0 0.0
        %3937 = vmatpush1.msra.mxu0 0.0
        %3938 = vmatprep.subr.mxu0 0.0
        %3939 = vmatpush1.msra.mxu0 0.0
        %3940 = vmatprep.subr.mxu0 0.0
        %3941 = vmatpush1.msra.mxu0 0.0
        %3942 = vmatprep.subr.mxu0 0.0
        %3943 = vmatpush1.msra.mxu0 0.0
        %3944 = vmatprep.subr.mxu0 0.0
        %3945 = vmatpush1.msra.mxu0 0.0
        %3946 = vmatprep.subr.mxu0 0.0
        %3947 = vmatpush1.msra.mxu0 0.0
        %3948 = vmatprep.subr.mxu0 0.0
        %3949 = vmatpush1.msra.mxu0 0.0
        %3950 = vmatprep.subr.mxu0 0.0
        %3951 = vmatpush1.msra.mxu0 0.0
        %3952 = vmatprep.subr.mxu0 0.0
        %3953 = vmatpush1.msra.mxu0 0.0
        %3954 = vmatprep.subr.mxu0 0.0
        %3955 = vmatpush1.msra.mxu0 0.0
        %3956 = vmatprep.subr.mxu0 0.0
        %3957 = vmatpush1.msra.mxu0 0.0
        %3958 = vmatprep.subr.mxu0 0.0
        %3959 = vmatpush1.msra.mxu0 0.0
        %3960 = vmatprep.subr.mxu0 0.0
        %3961 = vmatpush1.msra.mxu0 0.0
        %3962 = vmatprep.subr.mxu0 0.0
        %3963 = vmatpush1.msra.mxu0 0.0
        %3964 = vmatprep.subr.mxu0 0.0
        %3965 = vmatpush1.msra.mxu0 0.0
        %3966 = vmatprep.subr.mxu0 0.0
        %3967 = vmatpush1.msra.mxu0 0.0
        %3968 = vmatprep.subr.mxu0 0.0
        %3969 = vmatpush1.msra.mxu0 0.0
        %3970 = vmatprep.subr.mxu0 0.0
        %3971 = vmatpush1.msra.mxu0 0.0
        %3972 = vmatprep.subr.mxu0 0.0
        %3973 = vmatpush1.msra.mxu0 0.0
        %3974 = vmatprep.subr.mxu0 0.0
        %3975 = vmatpush1.msra.mxu0 0.0
        %3976 = vmatprep.subr.mxu0 0.0
        %3977 = vmatpush1.msra.mxu0 0.0
        %3978 = vmatprep.mubr.f32.mxu0 0.0
        %3979 = vmatmul.mubr.f32.gmra.mrb[0].mxu0 %v3912
        %v3980 = vpop.f32.mrb[0].mxu0
        %v3981 = vadd.f32 0.0, %v3980
        %v3982 = vpop.f32.mrb[0].mxu0
        %3983 = vdwg.mxu0
        %v3985 = vsel %vm2888, %v1351, 0
        %3987 = vmatprep.subr.mxu0 0.0
        %3988 = vmatpush1.msra.mxu0 %v2207
        %3989 = vmatprep.subr.mxu0 0.0
        %3990 = vmatpush1.msra.mxu0 %v2343
        %3991 = vmatprep.subr.mxu0 0.0
        %3992 = vmatpush1.msra.mxu0 0.0
        %3993 = vmatprep.subr.mxu0 0.0
        %3994 = vmatpush1.msra.mxu0 0.0
        %3995 = vmatprep.subr.mxu0 0.0
        %3996 = vmatpush1.msra.mxu0 0.0
        %3997 = vmatprep.subr.mxu0 0.0
        %3998 = vmatpush1.msra.mxu0 0.0
        %3999 = vmatprep.subr.mxu0 0.0
        %4000 = vmatpush1.msra.mxu0 0.0
        %4001 = vmatprep.subr.mxu0 0.0
        %4002 = vmatpush1.msra.mxu0 0.0
        %4003 = vmatprep.subr.mxu0 0.0
        %4004 = vmatpush1.msra.mxu0 0.0
        %4005 = vmatprep.subr.mxu0 0.0
        %4006 = vmatpush1.msra.mxu0 0.0
        %4007 = vmatprep.subr.mxu0 0.0
        %4008 = vmatpush1.msra.mxu0 0.0
        %4009 = vmatprep.subr.mxu0 0.0
        %4010 = vmatpush1.msra.mxu0 0.0
        %4011 = vmatprep.subr.mxu0 0.0
        %4012 = vmatpush1.msra.mxu0 0.0
        %4013 = vmatprep.subr.mxu0 0.0
        %4014 = vmatpush1.msra.mxu0 0.0
        %4015 = vmatprep.subr.mxu0 0.0
        %4016 = vmatpush1.msra.mxu0 0.0
        %4017 = vmatprep.subr.mxu0 0.0
        %4018 = vmatpush1.msra.mxu0 0.0
        %4019 = vmatprep.subr.mxu0 0.0
        %4020 = vmatpush1.msra.mxu0 0.0
        %4021 = vmatprep.subr.mxu0 0.0
        %4022 = vmatpush1.msra.mxu0 0.0
        %4023 = vmatprep.subr.mxu0 0.0
        %4024 = vmatpush1.msra.mxu0 0.0
        %4025 = vmatprep.subr.mxu0 0.0
        %4026 = vmatpush1.msra.mxu0 0.0
        %4027 = vmatprep.subr.mxu0 0.0
        %4028 = vmatpush1.msra.mxu0 0.0
        %4029 = vmatprep.subr.mxu0 0.0
        %4030 = vmatpush1.msra.mxu0 0.0
        %4031 = vmatprep.subr.mxu0 0.0
        %4032 = vmatpush1.msra.mxu0 0.0
        %4033 = vmatprep.subr.mxu0 0.0
        %4034 = vmatpush1.msra.mxu0 0.0
        %4035 = vmatprep.subr.mxu0 0.0
        %4036 = vmatpush1.msra.mxu0 0.0
        %4037 = vmatprep.subr.mxu0 0.0
        %4038 = vmatpush1.msra.mxu0 0.0
        %4039 = vmatprep.subr.mxu0 0.0
        %4040 = vmatpush1.msra.mxu0 0.0
        %4041 = vmatprep.subr.mxu0 0.0
        %4042 = vmatpush1.msra.mxu0 0.0
        %4043 = vmatprep.subr.mxu0 0.0
        %4044 = vmatpush1.msra.mxu0 0.0
        %4045 = vmatprep.subr.mxu0 0.0
        %4046 = vmatpush1.msra.mxu0 0.0
        %4047 = vmatprep.subr.mxu0 0.0
        %4048 = vmatpush1.msra.mxu0 0.0
        %4049 = vmatprep.subr.mxu0 0.0
        %4050 = vmatpush1.msra.mxu0 0.0
        %4051 = vmatprep.mubr.f32.mxu0 0.0
        %4052 = vmatmul.mubr.f32.gmra.mrb[0].mxu0 %v3985
        %v4053 = vpop.f32.mrb[0].mxu0
        %v4054 = vadd.f32 0.0, %v4053
        %v4055 = vpop.f32.mrb[0].mxu0
        %4056 = vdwg.mxu0
        %v4058 = vsel %vm2888, %v1480, 0
        %4060 = vmatprep.subr.mxu0 0.0
        %4061 = vmatpush1.msra.mxu0 %v2472
        %4062 = vmatprep.subr.mxu0 0.0
        %4063 = vmatpush1.msra.mxu0 %v2608
        %4064 = vmatprep.subr.mxu0 0.0
        %4065 = vmatpush1.msra.mxu0 0.0
        %4066 = vmatprep.subr.mxu0 0.0
        %4067 = vmatpush1.msra.mxu0 0.0
        %4068 = vmatprep.subr.mxu0 0.0
        %4069 = vmatpush1.msra.mxu0 0.0
        %4070 = vmatprep.subr.mxu0 0.0
        %4071 = vmatpush1.msra.mxu0 0.0
        %4072 = vmatprep.subr.mxu0 0.0
        %4073 = vmatpush1.msra.mxu0 0.0
        %4074 = vmatprep.subr.mxu0 0.0
        %4075 = vmatpush1.msra.mxu0 0.0
        %4076 = vmatprep.subr.mxu0 0.0
        %4077 = vmatpush1.msra.mxu0 0.0
        %4078 = vmatprep.subr.mxu0 0.0
        %4079 = vmatpush1.msra.mxu0 0.0
        %4080 = vmatprep.subr.mxu0 0.0
        %4081 = vmatpush1.msra.mxu0 0.0
        %4082 = vmatprep.subr.mxu0 0.0
        %4083 = vmatpush1.msra.mxu0 0.0
        %4084 = vmatprep.subr.mxu0 0.0
        %4085 = vmatpush1.msra.mxu0 0.0
        %4086 = vmatprep.subr.mxu0 0.0
        %4087 = vmatpush1.msra.mxu0 0.0
        %4088 = vmatprep.subr.mxu0 0.0
        %4089 = vmatpush1.msra.mxu0 0.0
        %4090 = vmatprep.subr.mxu0 0.0
        %4091 = vmatpush1.msra.mxu0 0.0
        %4092 = vmatprep.subr.mxu0 0.0
        %4093 = vmatpush1.msra.mxu0 0.0
        %4094 = vmatprep.subr.mxu0 0.0
        %4095 = vmatpush1.msra.mxu0 0.0
        %4096 = vmatprep.subr.mxu0 0.0
        %4097 = vmatpush1.msra.mxu0 0.0
        %4098 = vmatprep.subr.mxu0 0.0
        %4099 = vmatpush1.msra.mxu0 0.0
        %4100 = vmatprep.subr.mxu0 0.0
        %4101 = vmatpush1.msra.mxu0 0.0
        %4102 = vmatprep.subr.mxu0 0.0
        %4103 = vmatpush1.msra.mxu0 0.0
        %4104 = vmatprep.subr.mxu0 0.0
        %4105 = vmatpush1.msra.mxu0 0.0
        %4106 = vmatprep.subr.mxu0 0.0
        %4107 = vmatpush1.msra.mxu0 0.0
        %4108 = vmatprep.subr.mxu0 0.0
        %4109 = vmatpush1.msra.mxu0 0.0
        %4110 = vmatprep.subr.mxu0 0.0
        %4111 = vmatpush1.msra.mxu0 0.0
        %4112 = vmatprep.subr.mxu0 0.0
        %4113 = vmatpush1.msra.mxu0 0.0
        %4114 = vmatprep.subr.mxu0 0.0
        %4115 = vmatpush1.msra.mxu0 0.0
        %4116 = vmatprep.subr.mxu0 0.0
        %4117 = vmatpush1.msra.mxu0 0.0
        %4118 = vmatprep.subr.mxu0 0.0
        %4119 = vmatpush1.msra.mxu0 0.0
        %4120 = vmatprep.subr.mxu0 0.0
        %4121 = vmatpush1.msra.mxu0 0.0
        %4122 = vmatprep.subr.mxu0 0.0
        %4123 = vmatpush1.msra.mxu0 0.0
        %4124 = vmatprep.mubr.f32.mxu0 0.0
        %4125 = vmatmul.mubr.f32.gmra.mrb[0].mxu0 %v4058
        %v4126 = vpop.f32.mrb[0].mxu0
        %v4127 = vadd.f32 0.0, %v4126
        %v4128 = vpop.f32.mrb[0].mxu0
        %4129 = vdwg.mxu0
        %v4131 = vsel %vm2888, %v1481, 0
        %4133 = vmatprep.subr.mxu0 0.0
        %4134 = vmatpush1.msra.mxu0 %v2473
        %4135 = vmatprep.subr.mxu0 0.0
        %4136 = vmatpush1.msra.mxu0 %v2609
        %4137 = vmatprep.subr.mxu0 0.0
        %4138 = vmatpush1.msra.mxu0 0.0
        %4139 = vmatprep.subr.mxu0 0.0
        %4140 = vmatpush1.msra.mxu0 0.0
        %4141 = vmatprep.subr.mxu0 0.0
        %4142 = vmatpush1.msra.mxu0 0.0
        %4143 = vmatprep.subr.mxu0 0.0
        %4144 = vmatpush1.msra.mxu0 0.0
        %4145 = vmatprep.subr.mxu0 0.0
        %4146 = vmatpush1.msra.mxu0 0.0
        %4147 = vmatprep.subr.mxu0 0.0
        %4148 = vmatpush1.msra.mxu0 0.0
        %4149 = vmatprep.subr.mxu0 0.0
        %4150 = vmatpush1.msra.mxu0 0.0
        %4151 = vmatprep.subr.mxu0 0.0
        %4152 = vmatpush1.msra.mxu0 0.0
        %4153 = vmatprep.subr.mxu0 0.0
        %4154 = vmatpush1.msra.mxu0 0.0
        %4155 = vmatprep.subr.mxu0 0.0
        %4156 = vmatpush1.msra.mxu0 0.0
        %4157 = vmatprep.subr.mxu0 0.0
        %4158 = vmatpush1.msra.mxu0 0.0
        %4159 = vmatprep.subr.mxu0 0.0
        %4160 = vmatpush1.msra.mxu0 0.0
        %4161 = vmatprep.subr.mxu0 0.0
        %4162 = vmatpush1.msra.mxu0 0.0
        %4163 = vmatprep.subr.mxu0 0.0
        %4164 = vmatpush1.msra.mxu0 0.0
        %4165 = vmatprep.subr.mxu0 0.0
        %4166 = vmatpush1.msra.mxu0 0.0
        %4167 = vmatprep.subr.mxu0 0.0
        %4168 = vmatpush1.msra.mxu0 0.0
        %4169 = vmatprep.subr.mxu0 0.0
        %4170 = vmatpush1.msra.mxu0 0.0
        %4171 = vmatprep.subr.mxu0 0.0
        %4172 = vmatpush1.msra.mxu0 0.0
        %4173 = vmatprep.subr.mxu0 0.0
        %4174 = vmatpush1.msra.mxu0 0.0
        %4175 = vmatprep.subr.mxu0 0.0
        %4176 = vmatpush1.msra.mxu0 0.0
        %4177 = vmatprep.subr.mxu0 0.0
        %4178 = vmatpush1.msra.mxu0 0.0
        %4179 = vmatprep.subr.mxu0 0.0
        %4180 = vmatpush1.msra.mxu0 0.0
        %4181 = vmatprep.subr.mxu0 0.0
        %4182 = vmatpush1.msra.mxu0 0.0
        %4183 = vmatprep.subr.mxu0 0.0
        %4184 = vmatpush1.msra.mxu0 0.0
        %4185 = vmatprep.subr.mxu0 0.0
        %4186 = vmatpush1.msra.mxu0 0.0
        %4187 = vmatprep.subr.mxu0 0.0
        %4188 = vmatpush1.msra.mxu0 0.0
        %4189 = vmatprep.subr.mxu0 0.0
        %4190 = vmatpush1.msra.mxu0 0.0
        %4191 = vmatprep.subr.mxu0 0.0
        %4192 = vmatpush1.msra.mxu0 0.0
        %4193 = vmatprep.subr.mxu0 0.0
        %4194 = vmatpush1.msra.mxu0 0.0
        %4195 = vmatprep.subr.mxu0 0.0
        %4196 = vmatpush1.msra.mxu0 0.0
        %4197 = vmatprep.mubr.f32.mxu0 0.0
        %4198 = vmatmul.mubr.f32.gmra.mrb[0].mxu0 %v4131
        %v4199 = vpop.f32.mrb[0].mxu0
        %v4200 = vadd.f32 0.0, %v4199
        %v4201 = vpop.f32.mrb[0].mxu0
        %4202 = vdwg.mxu0
        %v4204 = vsel %vm2888, %v1482, 0
        %4206 = vmatprep.subr.mxu0 0.0
        %4207 = vmatpush1.msra.mxu0 %v2474
        %4208 = vmatprep.subr.mxu0 0.0
        %4209 = vmatpush1.msra.mxu0 %v2610
        %4210 = vmatprep.subr.mxu0 0.0
        %4211 = vmatpush1.msra.mxu0 0.0
        %4212 = vmatprep.subr.mxu0 0.0
        %4213 = vmatpush1.msra.mxu0 0.0
        %4214 = vmatprep.subr.mxu0 0.0
        %4215 = vmatpush1.msra.mxu0 0.0
        %4216 = vmatprep.subr.mxu0 0.0
        %4217 = vmatpush1.msra.mxu0 0.0
        %4218 = vmatprep.subr.mxu0 0.0
        %4219 = vmatpush1.msra.mxu0 0.0
        %4220 = vmatprep.subr.mxu0 0.0
        %4221 = vmatpush1.msra.mxu0 0.0
        %4222 = vmatprep.subr.mxu0 0.0
        %4223 = vmatpush1.msra.mxu0 0.0
        %4224 = vmatprep.subr.mxu0 0.0
        %4225 = vmatpush1.msra.mxu0 0.0
        %4226 = vmatprep.subr.mxu0 0.0
        %4227 = vmatpush1.msra.mxu0 0.0
        %4228 = vmatprep.subr.mxu0 0.0
        %4229 = vmatpush1.msra.mxu0 0.0
        %4230 = vmatprep.subr.mxu0 0.0
        %4231 = vmatpush1.msra.mxu0 0.0
        %4232 = vmatprep.subr.mxu0 0.0
        %4233 = vmatpush1.msra.mxu0 0.0
        %4234 = vmatprep.subr.mxu0 0.0
        %4235 = vmatpush1.msra.mxu0 0.0
        %4236 = vmatprep.subr.mxu0 0.0
        %4237 = vmatpush1.msra.mxu0 0.0
        %4238 = vmatprep.subr.mxu0 0.0
        %4239 = vmatpush1.msra.mxu0 0.0
        %4240 = vmatprep.subr.mxu0 0.0
        %4241 = vmatpush1.msra.mxu0 0.0
        %4242 = vmatprep.subr.mxu0 0.0
        %4243 = vmatpush1.msra.mxu0 0.0
        %4244 = vmatprep.subr.mxu0 0.0
        %4245 = vmatpush1.msra.mxu0 0.0
        %4246 = vmatprep.subr.mxu0 0.0
        %4247 = vmatpush1.msra.mxu0 0.0
        %4248 = vmatprep.subr.mxu0 0.0
        %4249 = vmatpush1.msra.mxu0 0.0
        %4250 = vmatprep.subr.mxu0 0.0
        %4251 = vmatpush1.msra.mxu0 0.0
        %4252 = vmatprep.subr.mxu0 0.0
        %4253 = vmatpush1.msra.mxu0 0.0
        %4254 = vmatprep.subr.mxu0 0.0
        %4255 = vmatpush1.msra.mxu0 0.0
        %4256 = vmatprep.subr.mxu0 0.0
        %4257 = vmatpush1.msra.mxu0 0.0
        %4258 = vmatprep.subr.mxu0 0.0
        %4259 = vmatpush1.msra.mxu0 0.0
        %4260 = vmatprep.subr.mxu0 0.0
        %4261 = vmatpush1.msra.mxu0 0.0
        %4262 = vmatprep.subr.mxu0 0.0
        %4263 = vmatpush1.msra.mxu0 0.0
        %4264 = vmatprep.subr.mxu0 0.0
        %4265 = vmatpush1.msra.mxu0 0.0
        %4266 = vmatprep.subr.mxu0 0.0
        %4267 = vmatpush1.msra.mxu0 0.0
        %4268 = vmatprep.subr.mxu0 0.0
        %4269 = vmatpush1.msra.mxu0 0.0
        %4270 = vmatprep.mubr.f32.mxu0 0.0
        %4271 = vmatmul.mubr.f32.gmra.mrb[0].mxu0 %v4204
        %v4272 = vpop.f32.mrb[0].mxu0
        %v4273 = vadd.f32 0.0, %v4272
        %v4274 = vpop.f32.mrb[0].mxu0
        %4275 = vdwg.mxu0
        %v4277 = vsel %vm2888, %v1483, 0
        %4279 = vmatprep.subr.mxu0 0.0
        %4280 = vmatpush1.msra.mxu0 %v2475
        %4281 = vmatprep.subr.mxu0 0.0
        %4282 = vmatpush1.msra.mxu0 %v2611
        %4283 = vmatprep.subr.mxu0 0.0
        %4284 = vmatpush1.msra.mxu0 0.0
        %4285 = vmatprep.subr.mxu0 0.0
        %4286 = vmatpush1.msra.mxu0 0.0
        %4287 = vmatprep.subr.mxu0 0.0
        %4288 = vmatpush1.msra.mxu0 0.0
        %4289 = vmatprep.subr.mxu0 0.0
        %4290 = vmatpush1.msra.mxu0 0.0
        %4291 = vmatprep.subr.mxu0 0.0
        %4292 = vmatpush1.msra.mxu0 0.0
        %4293 = vmatprep.subr.mxu0 0.0
        %4294 = vmatpush1.msra.mxu0 0.0
        %4295 = vmatprep.subr.mxu0 0.0
        %4296 = vmatpush1.msra.mxu0 0.0
        %4297 = vmatprep.subr.mxu0 0.0
        %4298 = vmatpush1.msra.mxu0 0.0
        %4299 = vmatprep.subr.mxu0 0.0
        %4300 = vmatpush1.msra.mxu0 0.0
        %4301 = vmatprep.subr.mxu0 0.0
        %4302 = vmatpush1.msra.mxu0 0.0
        %4303 = vmatprep.subr.mxu0 0.0
        %4304 = vmatpush1.msra.mxu0 0.0
        %4305 = vmatprep.subr.mxu0 0.0
        %4306 = vmatpush1.msra.mxu0 0.0
        %4307 = vmatprep.subr.mxu0 0.0
        %4308 = vmatpush1.msra.mxu0 0.0
        %4309 = vmatprep.subr.mxu0 0.0
        %4310 = vmatpush1.msra.mxu0 0.0
        %4311 = vmatprep.subr.mxu0 0.0
        %4312 = vmatpush1.msra.mxu0 0.0
        %4313 = vmatprep.subr.mxu0 0.0
        %4314 = vmatpush1.msra.mxu0 0.0
        %4315 = vmatprep.subr.mxu0 0.0
        %4316 = vmatpush1.msra.mxu0 0.0
        %4317 = vmatprep.subr.mxu0 0.0
        %4318 = vmatpush1.msra.mxu0 0.0
        %4319 = vmatprep.subr.mxu0 0.0
        %4320 = vmatpush1.msra.mxu0 0.0
        %4321 = vmatprep.subr.mxu0 0.0
        %4322 = vmatpush1.msra.mxu0 0.0
        %4323 = vmatprep.subr.mxu0 0.0
        %4324 = vmatpush1.msra.mxu0 0.0
        %4325 = vmatprep.subr.mxu0 0.0
        %4326 = vmatpush1.msra.mxu0 0.0
        %4327 = vmatprep.subr.mxu0 0.0
        %4328 = vmatpush1.msra.mxu0 0.0
        %4329 = vmatprep.subr.mxu0 0.0
        %4330 = vmatpush1.msra.mxu0 0.0
        %4331 = vmatprep.subr.mxu0 0.0
        %4332 = vmatpush1.msra.mxu0 0.0
        %4333 = vmatprep.subr.mxu0 0.0
        %4334 = vmatpush1.msra.mxu0 0.0
        %4335 = vmatprep.subr.mxu0 0.0
        %4336 = vmatpush1.msra.mxu0 0.0
        %4337 = vmatprep.subr.mxu0 0.0
        %4338 = vmatpush1.msra.mxu0 0.0
        %4339 = vmatprep.subr.mxu0 0.0
        %4340 = vmatpush1.msra.mxu0 0.0
        %4341 = vmatprep.subr.mxu0 0.0
        %4342 = vmatpush1.msra.mxu0 0.0
        %4343 = vmatprep.mubr.f32.mxu0 0.0
        %4344 = vmatmul.mubr.f32.gmra.mrb[0].mxu0 %v4277
        %v4345 = vpop.f32.mrb[0].mxu0
        %v4346 = vadd.f32 0.0, %v4345
        %v4347 = vpop.f32.mrb[0].mxu0
        %4348 = vdwg.mxu0
        %v4350 = vsel %vm2888, %v1484, 0
        %4352 = vmatprep.subr.mxu0 0.0
        %4353 = vmatpush1.msra.mxu0 %v2476
        %4354 = vmatprep.subr.mxu0 0.0
        %4355 = vmatpush1.msra.mxu0 %v2612
        %4356 = vmatprep.subr.mxu0 0.0
        %4357 = vmatpush1.msra.mxu0 0.0
        %4358 = vmatprep.subr.mxu0 0.0
        %4359 = vmatpush1.msra.mxu0 0.0
        %4360 = vmatprep.subr.mxu0 0.0
        %4361 = vmatpush1.msra.mxu0 0.0
        %4362 = vmatprep.subr.mxu0 0.0
        %4363 = vmatpush1.msra.mxu0 0.0
        %4364 = vmatprep.subr.mxu0 0.0
        %4365 = vmatpush1.msra.mxu0 0.0
        %4366 = vmatprep.subr.mxu0 0.0
        %4367 = vmatpush1.msra.mxu0 0.0
        %4368 = vmatprep.subr.mxu0 0.0
        %4369 = vmatpush1.msra.mxu0 0.0
        %4370 = vmatprep.subr.mxu0 0.0
        %4371 = vmatpush1.msra.mxu0 0.0
        %4372 = vmatprep.subr.mxu0 0.0
        %4373 = vmatpush1.msra.mxu0 0.0
        %4374 = vmatprep.subr.mxu0 0.0
        %4375 = vmatpush1.msra.mxu0 0.0
        %4376 = vmatprep.subr.mxu0 0.0
        %4377 = vmatpush1.msra.mxu0 0.0
        %4378 = vmatprep.subr.mxu0 0.0
        %4379 = vmatpush1.msra.mxu0 0.0
        %4380 = vmatprep.subr.mxu0 0.0
        %4381 = vmatpush1.msra.mxu0 0.0
        %4382 = vmatprep.subr.mxu0 0.0
        %4383 = vmatpush1.msra.mxu0 0.0
        %4384 = vmatprep.subr.mxu0 0.0
        %4385 = vmatpush1.msra.mxu0 0.0
        %4386 = vmatprep.subr.mxu0 0.0
        %4387 = vmatpush1.msra.mxu0 0.0
        %4388 = vmatprep.subr.mxu0 0.0
        %4389 = vmatpush1.msra.mxu0 0.0
        %4390 = vmatprep.subr.mxu0 0.0
        %4391 = vmatpush1.msra.mxu0 0.0
        %4392 = vmatprep.subr.mxu0 0.0
        %4393 = vmatpush1.msra.mxu0 0.0
        %4394 = vmatprep.subr.mxu0 0.0
        %4395 = vmatpush1.msra.mxu0 0.0
        %4396 = vmatprep.subr.mxu0 0.0
        %4397 = vmatpush1.msra.mxu0 0.0
        %4398 = vmatprep.subr.mxu0 0.0
        %4399 = vmatpush1.msra.mxu0 0.0
        %4400 = vmatprep.subr.mxu0 0.0
        %4401 = vmatpush1.msra.mxu0 0.0
        %4402 = vmatprep.subr.mxu0 0.0
        %4403 = vmatpush1.msra.mxu0 0.0
        %4404 = vmatprep.subr.mxu0 0.0
        %4405 = vmatpush1.msra.mxu0 0.0
        %4406 = vmatprep.subr.mxu0 0.0
        %4407 = vmatpush1.msra.mxu0 0.0
        %4408 = vmatprep.subr.mxu0 0.0
        %4409 = vmatpush1.msra.mxu0 0.0
        %4410 = vmatprep.subr.mxu0 0.0
        %4411 = vmatpush1.msra.mxu0 0.0
        %4412 = vmatprep.subr.mxu0 0.0
        %4413 = vmatpush1.msra.mxu0 0.0
        %4414 = vmatprep.subr.mxu0 0.0
        %4415 = vmatpush1.msra.mxu0 0.0
        %4416 = vmatprep.mubr.f32.mxu0 0.0
        %4417 = vmatmul.mubr.f32.gmra.mrb[0].mxu0 %v4350
        %v4418 = vpop.f32.mrb[0].mxu0
        %v4419 = vadd.f32 0.0, %v4418
        %v4420 = vpop.f32.mrb[0].mxu0
        %4421 = vdwg.mxu0
        %v4423 = vsel %vm2888, %v1485, 0
        %4425 = vmatprep.subr.mxu0 0.0
        %4426 = vmatpush1.msra.mxu0 %v2477
        %4427 = vmatprep.subr.mxu0 0.0
        %4428 = vmatpush1.msra.mxu0 %v2613
        %4429 = vmatprep.subr.mxu0 0.0
        %4430 = vmatpush1.msra.mxu0 0.0
        %4431 = vmatprep.subr.mxu0 0.0
        %4432 = vmatpush1.msra.mxu0 0.0
        %4433 = vmatprep.subr.mxu0 0.0
        %4434 = vmatpush1.msra.mxu0 0.0
        %4435 = vmatprep.subr.mxu0 0.0
        %4436 = vmatpush1.msra.mxu0 0.0
        %4437 = vmatprep.subr.mxu0 0.0
        %4438 = vmatpush1.msra.mxu0 0.0
        %4439 = vmatprep.subr.mxu0 0.0
        %4440 = vmatpush1.msra.mxu0 0.0
        %4441 = vmatprep.subr.mxu0 0.0
        %4442 = vmatpush1.msra.mxu0 0.0
        %4443 = vmatprep.subr.mxu0 0.0
        %4444 = vmatpush1.msra.mxu0 0.0
        %4445 = vmatprep.subr.mxu0 0.0
        %4446 = vmatpush1.msra.mxu0 0.0
        %4447 = vmatprep.subr.mxu0 0.0
        %4448 = vmatpush1.msra.mxu0 0.0
        %4449 = vmatprep.subr.mxu0 0.0
        %4450 = vmatpush1.msra.mxu0 0.0
        %4451 = vmatprep.subr.mxu0 0.0
        %4452 = vmatpush1.msra.mxu0 0.0
        %4453 = vmatprep.subr.mxu0 0.0
        %4454 = vmatpush1.msra.mxu0 0.0
        %4455 = vmatprep.subr.mxu0 0.0
        %4456 = vmatpush1.msra.mxu0 0.0
        %4457 = vmatprep.subr.mxu0 0.0
        %4458 = vmatpush1.msra.mxu0 0.0
        %4459 = vmatprep.subr.mxu0 0.0
        %4460 = vmatpush1.msra.mxu0 0.0
        %4461 = vmatprep.subr.mxu0 0.0
        %4462 = vmatpush1.msra.mxu0 0.0
        %4463 = vmatprep.subr.mxu0 0.0
        %4464 = vmatpush1.msra.mxu0 0.0
        %4465 = vmatprep.subr.mxu0 0.0
        %4466 = vmatpush1.msra.mxu0 0.0
        %4467 = vmatprep.subr.mxu0 0.0
        %4468 = vmatpush1.msra.mxu0 0.0
        %4469 = vmatprep.subr.mxu0 0.0
        %4470 = vmatpush1.msra.mxu0 0.0
        %4471 = vmatprep.subr.mxu0 0.0
        %4472 = vmatpush1.msra.mxu0 0.0
        %4473 = vmatprep.subr.mxu0 0.0
        %4474 = vmatpush1.msra.mxu0 0.0
        %4475 = vmatprep.subr.mxu0 0.0
        %4476 = vmatpush1.msra.mxu0 0.0
        %4477 = vmatprep.subr.mxu0 0.0
        %4478 = vmatpush1.msra.mxu0 0.0
        %4479 = vmatprep.subr.mxu0 0.0
        %4480 = vmatpush1.msra.mxu0 0.0
        %4481 = vmatprep.subr.mxu0 0.0
        %4482 = vmatpush1.msra.mxu0 0.0
        %4483 = vmatprep.subr.mxu0 0.0
        %4484 = vmatpush1.msra.mxu0 0.0
        %4485 = vmatprep.subr.mxu0 0.0
        %4486 = vmatpush1.msra.mxu0 0.0
        %4487 = vmatprep.subr.mxu0 0.0
        %4488 = vmatpush1.msra.mxu0 0.0
        %4489 = vmatprep.mubr.f32.mxu0 0.0
        %4490 = vmatmul.mubr.f32.gmra.mrb[0].mxu0 %v4423
        %v4491 = vpop.f32.mrb[0].mxu0
        %v4492 = vadd.f32 0.0, %v4491
        %v4493 = vpop.f32.mrb[0].mxu0
        %4494 = vdwg.mxu0
        %v4496 = vsel %vm2888, %v1486, 0
        %4498 = vmatprep.subr.mxu0 0.0
        %4499 = vmatpush1.msra.mxu0 %v2478
        %4500 = vmatprep.subr.mxu0 0.0
        %4501 = vmatpush1.msra.mxu0 %v2614
        %4502 = vmatprep.subr.mxu0 0.0
        %4503 = vmatpush1.msra.mxu0 0.0
        %4504 = vmatprep.subr.mxu0 0.0
        %4505 = vmatpush1.msra.mxu0 0.0
        %4506 = vmatprep.subr.mxu0 0.0
        %4507 = vmatpush1.msra.mxu0 0.0
        %4508 = vmatprep.subr.mxu0 0.0
        %4509 = vmatpush1.msra.mxu0 0.0
        %4510 = vmatprep.subr.mxu0 0.0
        %4511 = vmatpush1.msra.mxu0 0.0
        %4512 = vmatprep.subr.mxu0 0.0
        %4513 = vmatpush1.msra.mxu0 0.0
        %4514 = vmatprep.subr.mxu0 0.0
        %4515 = vmatpush1.msra.mxu0 0.0
        %4516 = vmatprep.subr.mxu0 0.0
        %4517 = vmatpush1.msra.mxu0 0.0
        %4518 = vmatprep.subr.mxu0 0.0
        %4519 = vmatpush1.msra.mxu0 0.0
        %4520 = vmatprep.subr.mxu0 0.0
        %4521 = vmatpush1.msra.mxu0 0.0
        %4522 = vmatprep.subr.mxu0 0.0
        %4523 = vmatpush1.msra.mxu0 0.0
        %4524 = vmatprep.subr.mxu0 0.0
        %4525 = vmatpush1.msra.mxu0 0.0
        %4526 = vmatprep.subr.mxu0 0.0
        %4527 = vmatpush1.msra.mxu0 0.0
        %4528 = vmatprep.subr.mxu0 0.0
        %4529 = vmatpush1.msra.mxu0 0.0
        %4530 = vmatprep.subr.mxu0 0.0
        %4531 = vmatpush1.msra.mxu0 0.0
        %4532 = vmatprep.subr.mxu0 0.0
        %4533 = vmatpush1.msra.mxu0 0.0
        %4534 = vmatprep.subr.mxu0 0.0
        %4535 = vmatpush1.msra.mxu0 0.0
        %4536 = vmatprep.subr.mxu0 0.0
        %4537 = vmatpush1.msra.mxu0 0.0
        %4538 = vmatprep.subr.mxu0 0.0
        %4539 = vmatpush1.msra.mxu0 0.0
        %4540 = vmatprep.subr.mxu0 0.0
        %4541 = vmatpush1.msra.mxu0 0.0
        %4542 = vmatprep.subr.mxu0 0.0
        %4543 = vmatpush1.msra.mxu0 0.0
        %4544 = vmatprep.subr.mxu0 0.0
        %4545 = vmatpush1.msra.mxu0 0.0
        %4546 = vmatprep.subr.mxu0 0.0
        %4547 = vmatpush1.msra.mxu0 0.0
        %4548 = vmatprep.subr.mxu0 0.0
        %4549 = vmatpush1.msra.mxu0 0.0
        %4550 = vmatprep.subr.mxu0 0.0
        %4551 = vmatpush1.msra.mxu0 0.0
        %4552 = vmatprep.subr.mxu0 0.0
        %4553 = vmatpush1.msra.mxu0 0.0
        %4554 = vmatprep.subr.mxu0 0.0
        %4555 = vmatpush1.msra.mxu0 0.0
        %4556 = vmatprep.subr.mxu0 0.0
        %4557 = vmatpush1.msra.mxu0 0.0
        %4558 = vmatprep.subr.mxu0 0.0
        %4559 = vmatpush1.msra.mxu0 0.0
        %4560 = vmatprep.subr.mxu0 0.0
        %4561 = vmatpush1.msra.mxu0 0.0
        %4562 = vmatprep.mubr.f32.mxu0 0.0
        %4563 = vmatmul.mubr.f32.gmra.mrb[0].mxu0 %v4496
        %v4564 = vpop.f32.mrb[0].mxu0
        %v4565 = vadd.f32 0.0, %v4564
        %v4566 = vpop.f32.mrb[0].mxu0
        %4567 = vdwg.mxu0
        %v4569 = vsel %vm2888, %v1487, 0
        %4571 = vmatprep.subr.mxu0 0.0
        %4572 = vmatpush1.msra.mxu0 %v2479
        %4573 = vmatprep.subr.mxu0 0.0
        %4574 = vmatpush1.msra.mxu0 %v2615
        %4575 = vmatprep.subr.mxu0 0.0
        %4576 = vmatpush1.msra.mxu0 0.0
        %4577 = vmatprep.subr.mxu0 0.0
        %4578 = vmatpush1.msra.mxu0 0.0
        %4579 = vmatprep.subr.mxu0 0.0
        %4580 = vmatpush1.msra.mxu0 0.0
        %4581 = vmatprep.subr.mxu0 0.0
        %4582 = vmatpush1.msra.mxu0 0.0
        %4583 = vmatprep.subr.mxu0 0.0
        %4584 = vmatpush1.msra.mxu0 0.0
        %4585 = vmatprep.subr.mxu0 0.0
        %4586 = vmatpush1.msra.mxu0 0.0
        %4587 = vmatprep.subr.mxu0 0.0
        %4588 = vmatpush1.msra.mxu0 0.0
        %4589 = vmatprep.subr.mxu0 0.0
        %4590 = vmatpush1.msra.mxu0 0.0
        %4591 = vmatprep.subr.mxu0 0.0
        %4592 = vmatpush1.msra.mxu0 0.0
        %4593 = vmatprep.subr.mxu0 0.0
        %4594 = vmatpush1.msra.mxu0 0.0
        %4595 = vmatprep.subr.mxu0 0.0
        %4596 = vmatpush1.msra.mxu0 0.0
        %4597 = vmatprep.subr.mxu0 0.0
        %4598 = vmatpush1.msra.mxu0 0.0
        %4599 = vmatprep.subr.mxu0 0.0
        %4600 = vmatpush1.msra.mxu0 0.0
        %4601 = vmatprep.subr.mxu0 0.0
        %4602 = vmatpush1.msra.mxu0 0.0
        %4603 = vmatprep.subr.mxu0 0.0
        %4604 = vmatpush1.msra.mxu0 0.0
        %4605 = vmatprep.subr.mxu0 0.0
        %4606 = vmatpush1.msra.mxu0 0.0
        %4607 = vmatprep.subr.mxu0 0.0
        %4608 = vmatpush1.msra.mxu0 0.0
        %4609 = vmatprep.subr.mxu0 0.0
        %4610 = vmatpush1.msra.mxu0 0.0
        %4611 = vmatprep.subr.mxu0 0.0
        %4612 = vmatpush1.msra.mxu0 0.0
        %4613 = vmatprep.subr.mxu0 0.0
        %4614 = vmatpush1.msra.mxu0 0.0
        %4615 = vmatprep.subr.mxu0 0.0
        %4616 = vmatpush1.msra.mxu0 0.0
        %4617 = vmatprep.subr.mxu0 0.0
        %4618 = vmatpush1.msra.mxu0 0.0
        %4619 = vmatprep.subr.mxu0 0.0
        %4620 = vmatpush1.msra.mxu0 0.0
        %4621 = vmatprep.subr.mxu0 0.0
        %4622 = vmatpush1.msra.mxu0 0.0
        %4623 = vmatprep.subr.mxu0 0.0
        %4624 = vmatpush1.msra.mxu0 0.0
        %4625 = vmatprep.subr.mxu0 0.0
        %4626 = vmatpush1.msra.mxu0 0.0
        %4627 = vmatprep.subr.mxu0 0.0
        %4628 = vmatpush1.msra.mxu0 0.0
        %4629 = vmatprep.subr.mxu0 0.0
        %4630 = vmatpush1.msra.mxu0 0.0
        %4631 = vmatprep.subr.mxu0 0.0
        %4632 = vmatpush1.msra.mxu0 0.0
        %4633 = vmatprep.subr.mxu0 0.0
        %4634 = vmatpush1.msra.mxu0 0.0
        %4635 = vmatprep.mubr.f32.mxu0 0.0
        %4636 = vmatmul.mubr.f32.gmra.mrb[0].mxu0 %v4569
        %v4637 = vpop.f32.mrb[0].mxu0
        %v4638 = vadd.f32 0.0, %v4637
        %v4639 = vpop.f32.mrb[0].mxu0
        %4640 = vdwg.mxu0
        %v4642 = vsel %vm2888, %v1616, 0
        %4644 = vmatprep.subr.mxu0 0.0
        %4645 = vmatpush1.msra.mxu0 %v2744
        %4646 = vmatprep.subr.mxu0 0.0
        %4647 = vmatpush1.msra.mxu0 %v2880
        %4648 = vmatprep.subr.mxu0 0.0
        %4649 = vmatpush1.msra.mxu0 0.0
        %4650 = vmatprep.subr.mxu0 0.0
        %4651 = vmatpush1.msra.mxu0 0.0
        %4652 = vmatprep.subr.mxu0 0.0
        %4653 = vmatpush1.msra.mxu0 0.0
        %4654 = vmatprep.subr.mxu0 0.0
        %4655 = vmatpush1.msra.mxu0 0.0
        %4656 = vmatprep.subr.mxu0 0.0
        %4657 = vmatpush1.msra.mxu0 0.0
        %4658 = vmatprep.subr.mxu0 0.0
        %4659 = vmatpush1.msra.mxu0 0.0
        %4660 = vmatprep.subr.mxu0 0.0
        %4661 = vmatpush1.msra.mxu0 0.0
        %4662 = vmatprep.subr.mxu0 0.0
        %4663 = vmatpush1.msra.mxu0 0.0
        %4664 = vmatprep.subr.mxu0 0.0
        %4665 = vmatpush1.msra.mxu0 0.0
        %4666 = vmatprep.subr.mxu0 0.0
        %4667 = vmatpush1.msra.mxu0 0.0
        %4668 = vmatprep.subr.mxu0 0.0
        %4669 = vmatpush1.msra.mxu0 0.0
        %4670 = vmatprep.subr.mxu0 0.0
        %4671 = vmatpush1.msra.mxu0 0.0
        %4672 = vmatprep.subr.mxu0 0.0
        %4673 = vmatpush1.msra.mxu0 0.0
        %4674 = vmatprep.subr.mxu0 0.0
        %4675 = vmatpush1.msra.mxu0 0.0
        %4676 = vmatprep.subr.mxu0 0.0
        %4677 = vmatpush1.msra.mxu0 0.0
        %4678 = vmatprep.subr.mxu0 0.0
        %4679 = vmatpush1.msra.mxu0 0.0
        %4680 = vmatprep.subr.mxu0 0.0
        %4681 = vmatpush1.msra.mxu0 0.0
        %4682 = vmatprep.subr.mxu0 0.0
        %4683 = vmatpush1.msra.mxu0 0.0
        %4684 = vmatprep.subr.mxu0 0.0
        %4685 = vmatpush1.msra.mxu0 0.0
        %4686 = vmatprep.subr.mxu0 0.0
        %4687 = vmatpush1.msra.mxu0 0.0
        %4688 = vmatprep.subr.mxu0 0.0
        %4689 = vmatpush1.msra.mxu0 0.0
        %4690 = vmatprep.subr.mxu0 0.0
        %4691 = vmatpush1.msra.mxu0 0.0
        %4692 = vmatprep.subr.mxu0 0.0
        %4693 = vmatpush1.msra.mxu0 0.0
        %4694 = vmatprep.subr.mxu0 0.0
        %4695 = vmatpush1.msra.mxu0 0.0
        %4696 = vmatprep.subr.mxu0 0.0
        %4697 = vmatpush1.msra.mxu0 0.0
        %4698 = vmatprep.subr.mxu0 0.0
        %4699 = vmatpush1.msra.mxu0 0.0
        %4700 = vmatprep.subr.mxu0 0.0
        %4701 = vmatpush1.msra.mxu0 0.0
        %4702 = vmatprep.subr.mxu0 0.0
        %4703 = vmatpush1.msra.mxu0 0.0
        %4704 = vmatprep.subr.mxu0 0.0
        %4705 = vmatpush1.msra.mxu0 0.0
        %4706 = vmatprep.subr.mxu0 0.0
        %4707 = vmatpush1.msra.mxu0 0.0
        %4708 = vmatprep.mubr.f32.mxu0 0.0
        %4709 = vmatmul.mubr.f32.gmra.mrb[0].mxu0 %v4642
        %v4710 = vpop.f32.mrb[0].mxu0
        %v4711 = vadd.f32 0.0, %v4710
        %v4712 = vpop.f32.mrb[0].mxu0
        %4713 = vdwg.mxu0
        %v4715 = vsel %vm2888, %v1617, 0
        %4717 = vmatprep.subr.mxu0 0.0
        %4718 = vmatpush1.msra.mxu0 %v2745
        %4719 = vmatprep.subr.mxu0 0.0
        %4720 = vmatpush1.msra.mxu0 %v2881
        %4721 = vmatprep.subr.mxu0 0.0
        %4722 = vmatpush1.msra.mxu0 0.0
        %4723 = vmatprep.subr.mxu0 0.0
        %4724 = vmatpush1.msra.mxu0 0.0
        %4725 = vmatprep.subr.mxu0 0.0
        %4726 = vmatpush1.msra.mxu0 0.0
        %4727 = vmatprep.subr.mxu0 0.0
        %4728 = vmatpush1.msra.mxu0 0.0
        %4729 = vmatprep.subr.mxu0 0.0
        %4730 = vmatpush1.msra.mxu0 0.0
        %4731 = vmatprep.subr.mxu0 0.0
        %4732 = vmatpush1.msra.mxu0 0.0
        %4733 = vmatprep.subr.mxu0 0.0
        %4734 = vmatpush1.msra.mxu0 0.0
        %4735 = vmatprep.subr.mxu0 0.0
        %4736 = vmatpush1.msra.mxu0 0.0
        %4737 = vmatprep.subr.mxu0 0.0
        %4738 = vmatpush1.msra.mxu0 0.0
        %4739 = vmatprep.subr.mxu0 0.0
        %4740 = vmatpush1.msra.mxu0 0.0
        %4741 = vmatprep.subr.mxu0 0.0
        %4742 = vmatpush1.msra.mxu0 0.0
        %4743 = vmatprep.subr.mxu0 0.0
        %4744 = vmatpush1.msra.mxu0 0.0
        %4745 = vmatprep.subr.mxu0 0.0
        %4746 = vmatpush1.msra.mxu0 0.0
        %4747 = vmatprep.subr.mxu0 0.0
        %4748 = vmatpush1.msra.mxu0 0.0
        %4749 = vmatprep.subr.mxu0 0.0
        %4750 = vmatpush1.msra.mxu0 0.0
        %4751 = vmatprep.subr.mxu0 0.0
        %4752 = vmatpush1.msra.mxu0 0.0
        %4753 = vmatprep.subr.mxu0 0.0
        %4754 = vmatpush1.msra.mxu0 0.0
        %4755 = vmatprep.subr.mxu0 0.0
        %4756 = vmatpush1.msra.mxu0 0.0
        %4757 = vmatprep.subr.mxu0 0.0
        %4758 = vmatpush1.msra.mxu0 0.0
        %4759 = vmatprep.subr.mxu0 0.0
        %4760 = vmatpush1.msra.mxu0 0.0
        %4761 = vmatprep.subr.mxu0 0.0
        %4762 = vmatpush1.msra.mxu0 0.0
        %4763 = vmatprep.subr.mxu0 0.0
        %4764 = vmatpush1.msra.mxu0 0.0
        %4765 = vmatprep.subr.mxu0 0.0
        %4766 = vmatpush1.msra.mxu0 0.0
        %4767 = vmatprep.subr.mxu0 0.0
        %4768 = vmatpush1.msra.mxu0 0.0
        %4769 = vmatprep.subr.mxu0 0.0
        %4770 = vmatpush1.msra.mxu0 0.0
        %4771 = vmatprep.subr.mxu0 0.0
        %4772 = vmatpush1.msra.mxu0 0.0
        %4773 = vmatprep.subr.mxu0 0.0
        %4774 = vmatpush1.msra.mxu0 0.0
        %4775 = vmatprep.subr.mxu0 0.0
        %4776 = vmatpush1.msra.mxu0 0.0
        %4777 = vmatprep.subr.mxu0 0.0
        %4778 = vmatpush1.msra.mxu0 0.0
        %4779 = vmatprep.subr.mxu0 0.0
        %4780 = vmatpush1.msra.mxu0 0.0
        %4781 = vmatprep.mubr.f32.mxu0 0.0
        %4782 = vmatmul.mubr.f32.gmra.mrb[0].mxu0 %v4715
        %v4783 = vpop.f32.mrb[0].mxu0
        %v4784 = vadd.f32 0.0, %v4783
        %v4785 = vpop.f32.mrb[0].mxu0
        %4786 = vdwg.mxu0
        %v4788 = vsel %vm2888, %v1618, 0
        %4790 = vmatprep.subr.mxu0 0.0
        %4791 = vmatpush1.msra.mxu0 %v2746
        %4792 = vmatprep.subr.mxu0 0.0
        %4793 = vmatpush1.msra.mxu0 %v2882
        %4794 = vmatprep.subr.mxu0 0.0
        %4795 = vmatpush1.msra.mxu0 0.0
        %4796 = vmatprep.subr.mxu0 0.0
        %4797 = vmatpush1.msra.mxu0 0.0
        %4798 = vmatprep.subr.mxu0 0.0
        %4799 = vmatpush1.msra.mxu0 0.0
        %4800 = vmatprep.subr.mxu0 0.0
        %4801 = vmatpush1.msra.mxu0 0.0
        %4802 = vmatprep.subr.mxu0 0.0
        %4803 = vmatpush1.msra.mxu0 0.0
        %4804 = vmatprep.subr.mxu0 0.0
        %4805 = vmatpush1.msra.mxu0 0.0
        %4806 = vmatprep.subr.mxu0 0.0
        %4807 = vmatpush1.msra.mxu0 0.0
        %4808 = vmatprep.subr.mxu0 0.0
        %4809 = vmatpush1.msra.mxu0 0.0
        %4810 = vmatprep.subr.mxu0 0.0
        %4811 = vmatpush1.msra.mxu0 0.0
        %4812 = vmatprep.subr.mxu0 0.0
        %4813 = vmatpush1.msra.mxu0 0.0
        %4814 = vmatprep.subr.mxu0 0.0
        %4815 = vmatpush1.msra.mxu0 0.0
        %4816 = vmatprep.subr.mxu0 0.0
        %4817 = vmatpush1.msra.mxu0 0.0
        %4818 = vmatprep.subr.mxu0 0.0
        %4819 = vmatpush1.msra.mxu0 0.0
        %4820 = vmatprep.subr.mxu0 0.0
        %4821 = vmatpush1.msra.mxu0 0.0
        %4822 = vmatprep.subr.mxu0 0.0
        %4823 = vmatpush1.msra.mxu0 0.0
        %4824 = vmatprep.subr.mxu0 0.0
        %4825 = vmatpush1.msra.mxu0 0.0
        %4826 = vmatprep.subr.mxu0 0.0
        %4827 = vmatpush1.msra.mxu0 0.0
        %4828 = vmatprep.subr.mxu0 0.0
        %4829 = vmatpush1.msra.mxu0 0.0
        %4830 = vmatprep.subr.mxu0 0.0
        %4831 = vmatpush1.msra.mxu0 0.0
        %4832 = vmatprep.subr.mxu0 0.0
        %4833 = vmatpush1.msra.mxu0 0.0
        %4834 = vmatprep.subr.mxu0 0.0
        %4835 = vmatpush1.msra.mxu0 0.0
        %4836 = vmatprep.subr.mxu0 0.0
        %4837 = vmatpush1.msra.mxu0 0.0
        %4838 = vmatprep.subr.mxu0 0.0
        %4839 = vmatpush1.msra.mxu0 0.0
        %4840 = vmatprep.subr.mxu0 0.0
        %4841 = vmatpush1.msra.mxu0 0.0
        %4842 = vmatprep.subr.mxu0 0.0
        %4843 = vmatpush1.msra.mxu0 0.0
        %4844 = vmatprep.subr.mxu0 0.0
        %4845 = vmatpush1.msra.mxu0 0.0
        %4846 = vmatprep.subr.mxu0 0.0
        %4847 = vmatpush1.msra.mxu0 0.0
        %4848 = vmatprep.subr.mxu0 0.0
        %4849 = vmatpush1.msra.mxu0 0.0
        %4850 = vmatprep.subr.mxu0 0.0
        %4851 = vmatpush1.msra.mxu0 0.0
        %4852 = vmatprep.subr.mxu0 0.0
        %4853 = vmatpush1.msra.mxu0 0.0
        %4854 = vmatprep.mubr.f32.mxu0 0.0
        %4855 = vmatmul.mubr.f32.gmra.mrb[0].mxu0 %v4788
        %v4856 = vpop.f32.mrb[0].mxu0
        %v4857 = vadd.f32 0.0, %v4856
        %v4858 = vpop.f32.mrb[0].mxu0
        %4859 = vdwg.mxu0
        %v4861 = vsel %vm2888, %v1619, 0
        %4863 = vmatprep.subr.mxu0 0.0
        %4864 = vmatpush1.msra.mxu0 %v2747
        %4865 = vmatprep.subr.mxu0 0.0
        %4866 = vmatpush1.msra.mxu0 %v2883
        %4867 = vmatprep.subr.mxu0 0.0
        %4868 = vmatpush1.msra.mxu0 0.0
        %4869 = vmatprep.subr.mxu0 0.0
        %4870 = vmatpush1.msra.mxu0 0.0
        %4871 = vmatprep.subr.mxu0 0.0
        %4872 = vmatpush1.msra.mxu0 0.0
        %4873 = vmatprep.subr.mxu0 0.0
        %4874 = vmatpush1.msra.mxu0 0.0
        %4875 = vmatprep.subr.mxu0 0.0
        %4876 = vmatpush1.msra.mxu0 0.0
        %4877 = vmatprep.subr.mxu0 0.0
        %4878 = vmatpush1.msra.mxu0 0.0
        %4879 = vmatprep.subr.mxu0 0.0
        %4880 = vmatpush1.msra.mxu0 0.0
        %4881 = vmatprep.subr.mxu0 0.0
        %4882 = vmatpush1.msra.mxu0 0.0
        %4883 = vmatprep.subr.mxu0 0.0
        %4884 = vmatpush1.msra.mxu0 0.0
        %4885 = vmatprep.subr.mxu0 0.0
        %4886 = vmatpush1.msra.mxu0 0.0
        %4887 = vmatprep.subr.mxu0 0.0
        %4888 = vmatpush1.msra.mxu0 0.0
        %4889 = vmatprep.subr.mxu0 0.0
        %4890 = vmatpush1.msra.mxu0 0.0
        %4891 = vmatprep.subr.mxu0 0.0
        %4892 = vmatpush1.msra.mxu0 0.0
        %4893 = vmatprep.subr.mxu0 0.0
        %4894 = vmatpush1.msra.mxu0 0.0
        %4895 = vmatprep.subr.mxu0 0.0
        %4896 = vmatpush1.msra.mxu0 0.0
        %4897 = vmatprep.subr.mxu0 0.0
        %4898 = vmatpush1.msra.mxu0 0.0
        %4899 = vmatprep.subr.mxu0 0.0
        %4900 = vmatpush1.msra.mxu0 0.0
        %4901 = vmatprep.subr.mxu0 0.0
        %4902 = vmatpush1.msra.mxu0 0.0
        %4903 = vmatprep.subr.mxu0 0.0
        %4904 = vmatpush1.msra.mxu0 0.0
        %4905 = vmatprep.subr.mxu0 0.0
        %4906 = vmatpush1.msra.mxu0 0.0
        %4907 = vmatprep.subr.mxu0 0.0
        %4908 = vmatpush1.msra.mxu0 0.0
        %4909 = vmatprep.subr.mxu0 0.0
        %4910 = vmatpush1.msra.mxu0 0.0
        %4911 = vmatprep.subr.mxu0 0.0
        %4912 = vmatpush1.msra.mxu0 0.0
        %4913 = vmatprep.subr.mxu0 0.0
        %4914 = vmatpush1.msra.mxu0 0.0
        %4915 = vmatprep.subr.mxu0 0.0
        %4916 = vmatpush1.msra.mxu0 0.0
        %4917 = vmatprep.subr.mxu0 0.0
        %4918 = vmatpush1.msra.mxu0 0.0
        %4919 = vmatprep.subr.mxu0 0.0
        %4920 = vmatpush1.msra.mxu0 0.0
        %4921 = vmatprep.subr.mxu0 0.0
        %4922 = vmatpush1.msra.mxu0 0.0
        %4923 = vmatprep.subr.mxu0 0.0
        %4924 = vmatpush1.msra.mxu0 0.0
        %4925 = vmatprep.subr.mxu0 0.0
        %4926 = vmatpush1.msra.mxu0 0.0
        %4927 = vmatprep.mubr.f32.mxu0 0.0
        %4928 = vmatmul.mubr.f32.gmra.mrb[0].mxu0 %v4861
        %v4929 = vpop.f32.mrb[0].mxu0
        %v4930 = vadd.f32 0.0, %v4929
        %v4931 = vpop.f32.mrb[0].mxu0
        %4932 = vdwg.mxu0
        %v4934 = vsel %vm2888, %v1620, 0
        %4936 = vmatprep.subr.mxu0 0.0
        %4937 = vmatpush1.msra.mxu0 %v2748
        %4938 = vmatprep.subr.mxu0 0.0
        %4939 = vmatpush1.msra.mxu0 %v2884
        %4940 = vmatprep.subr.mxu0 0.0
        %4941 = vmatpush1.msra.mxu0 0.0
        %4942 = vmatprep.subr.mxu0 0.0
        %4943 = vmatpush1.msra.mxu0 0.0
        %4944 = vmatprep.subr.mxu0 0.0
        %4945 = vmatpush1.msra.mxu0 0.0
        %4946 = vmatprep.subr.mxu0 0.0
        %4947 = vmatpush1.msra.mxu0 0.0
        %4948 = vmatprep.subr.mxu0 0.0
        %4949 = vmatpush1.msra.mxu0 0.0
        %4950 = vmatprep.subr.mxu0 0.0
        %4951 = vmatpush1.msra.mxu0 0.0
        %4952 = vmatprep.subr.mxu0 0.0
        %4953 = vmatpush1.msra.mxu0 0.0
        %4954 = vmatprep.subr.mxu0 0.0
        %4955 = vmatpush1.msra.mxu0 0.0
        %4956 = vmatprep.subr.mxu0 0.0
        %4957 = vmatpush1.msra.mxu0 0.0
        %4958 = vmatprep.subr.mxu0 0.0
        %4959 = vmatpush1.msra.mxu0 0.0
        %4960 = vmatprep.subr.mxu0 0.0
        %4961 = vmatpush1.msra.mxu0 0.0
        %4962 = vmatprep.subr.mxu0 0.0
        %4963 = vmatpush1.msra.mxu0 0.0
        %4964 = vmatprep.subr.mxu0 0.0
        %4965 = vmatpush1.msra.mxu0 0.0
        %4966 = vmatprep.subr.mxu0 0.0
        %4967 = vmatpush1.msra.mxu0 0.0
        %4968 = vmatprep.subr.mxu0 0.0
        %4969 = vmatpush1.msra.mxu0 0.0
        %4970 = vmatprep.subr.mxu0 0.0
        %4971 = vmatpush1.msra.mxu0 0.0
        %4972 = vmatprep.subr.mxu0 0.0
        %4973 = vmatpush1.msra.mxu0 0.0
        %4974 = vmatprep.subr.mxu0 0.0
        %4975 = vmatpush1.msra.mxu0 0.0
        %4976 = vmatprep.subr.mxu0 0.0
        %4977 = vmatpush1.msra.mxu0 0.0
        %4978 = vmatprep.subr.mxu0 0.0
        %4979 = vmatpush1.msra.mxu0 0.0
        %4980 = vmatprep.subr.mxu0 0.0
        %4981 = vmatpush1.msra.mxu0 0.0
        %4982 = vmatprep.subr.mxu0 0.0
        %4983 = vmatpush1.msra.mxu0 0.0
        %4984 = vmatprep.subr.mxu0 0.0
        %4985 = vmatpush1.msra.mxu0 0.0
        %4986 = vmatprep.subr.mxu0 0.0
        %4987 = vmatpush1.msra.mxu0 0.0
        %4988 = vmatprep.subr.mxu0 0.0
        %4989 = vmatpush1.msra.mxu0 0.0
        %4990 = vmatprep.subr.mxu0 0.0
        %4991 = vmatpush1.msra.mxu0 0.0
        %4992 = vmatprep.subr.mxu0 0.0
        %4993 = vmatpush1.msra.mxu0 0.0
        %4994 = vmatprep.subr.mxu0 0.0
        %4995 = vmatpush1.msra.mxu0 0.0
        %4996 = vmatprep.subr.mxu0 0.0
        %4997 = vmatpush1.msra.mxu0 0.0
        %4998 = vmatprep.subr.mxu0 0.0
        %4999 = vmatpush1.msra.mxu0 0.0
        %5000 = vmatprep.mubr.f32.mxu0 0.0
        %5001 = vmatmul.mubr.f32.gmra.mrb[0].mxu0 %v4934
        %v5002 = vpop.f32.mrb[0].mxu0
        %v5003 = vadd.f32 0.0, %v5002
        %v5004 = vpop.f32.mrb[0].mxu0
        %5005 = vdwg.mxu0
        %v5007 = vsel %vm2888, %v1621, 0
        %5009 = vmatprep.subr.mxu0 0.0
        %5010 = vmatpush1.msra.mxu0 %v2749
        %5011 = vmatprep.subr.mxu0 0.0
        %5012 = vmatpush1.msra.mxu0 %v2885
        %5013 = vmatprep.subr.mxu0 0.0
        %5014 = vmatpush1.msra.mxu0 0.0
        %5015 = vmatprep.subr.mxu0 0.0
        %5016 = vmatpush1.msra.mxu0 0.0
        %5017 = vmatprep.subr.mxu0 0.0
        %5018 = vmatpush1.msra.mxu0 0.0
        %5019 = vmatprep.subr.mxu0 0.0
        %5020 = vmatpush1.msra.mxu0 0.0
        %5021 = vmatprep.subr.mxu0 0.0
        %5022 = vmatpush1.msra.mxu0 0.0
        %5023 = vmatprep.subr.mxu0 0.0
        %5024 = vmatpush1.msra.mxu0 0.0
        %5025 = vmatprep.subr.mxu0 0.0
        %5026 = vmatpush1.msra.mxu0 0.0
        %5027 = vmatprep.subr.mxu0 0.0
        %5028 = vmatpush1.msra.mxu0 0.0
        %5029 = vmatprep.subr.mxu0 0.0
        %5030 = vmatpush1.msra.mxu0 0.0
        %5031 = vmatprep.subr.mxu0 0.0
        %5032 = vmatpush1.msra.mxu0 0.0
        %5033 = vmatprep.subr.mxu0 0.0
        %5034 = vmatpush1.msra.mxu0 0.0
        %5035 = vmatprep.subr.mxu0 0.0
        %5036 = vmatpush1.msra.mxu0 0.0
        %5037 = vmatprep.subr.mxu0 0.0
        %5038 = vmatpush1.msra.mxu0 0.0
        %5039 = vmatprep.subr.mxu0 0.0
        %5040 = vmatpush1.msra.mxu0 0.0
        %5041 = vmatprep.subr.mxu0 0.0
        %5042 = vmatpush1.msra.mxu0 0.0
        %5043 = vmatprep.subr.mxu0 0.0
        %5044 = vmatpush1.msra.mxu0 0.0
        %5045 = vmatprep.subr.mxu0 0.0
        %5046 = vmatpush1.msra.mxu0 0.0
        %5047 = vmatprep.subr.mxu0 0.0
        %5048 = vmatpush1.msra.mxu0 0.0
        %5049 = vmatprep.subr.mxu0 0.0
        %5050 = vmatpush1.msra.mxu0 0.0
        %5051 = vmatprep.subr.mxu0 0.0
        %5052 = vmatpush1.msra.mxu0 0.0
        %5053 = vmatprep.subr.mxu0 0.0
        %5054 = vmatpush1.msra.mxu0 0.0
        %5055 = vmatprep.subr.mxu0 0.0
        %5056 = vmatpush1.msra.mxu0 0.0
        %5057 = vmatprep.subr.mxu0 0.0
        %5058 = vmatpush1.msra.mxu0 0.0
        %5059 = vmatprep.subr.mxu0 0.0
        %5060 = vmatpush1.msra.mxu0 0.0
        %5061 = vmatprep.subr.mxu0 0.0
        %5062 = vmatpush1.msra.mxu0 0.0
        %5063 = vmatprep.subr.mxu0 0.0
        %5064 = vmatpush1.msra.mxu0 0.0
        %5065 = vmatprep.subr.mxu0 0.0
        %5066 = vmatpush1.msra.mxu0 0.0
        %5067 = vmatprep.subr.mxu0 0.0
        %5068 = vmatpush1.msra.mxu0 0.0
        %5069 = vmatprep.subr.mxu0 0.0
        %5070 = vmatpush1.msra.mxu0 0.0
        %5071 = vmatprep.subr.mxu0 0.0
        %5072 = vmatpush1.msra.mxu0 0.0
        %5073 = vmatprep.mubr.f32.mxu0 0.0
        %5074 = vmatmul.mubr.f32.gmra.mrb[0].mxu0 %v5007
        %v5075 = vpop.f32.mrb[0].mxu0
        %v5076 = vadd.f32 0.0, %v5075
        %v5077 = vpop.f32.mrb[0].mxu0
        %5078 = vdwg.mxu0
        %v5080 = vsel %vm2888, %v1622, 0
        %5082 = vmatprep.subr.mxu0 0.0
        %5083 = vmatpush1.msra.mxu0 %v2750
        %5084 = vmatprep.subr.mxu0 0.0
        %5085 = vmatpush1.msra.mxu0 %v2886
        %5086 = vmatprep.subr.mxu0 0.0
        %5087 = vmatpush1.msra.mxu0 0.0
        %5088 = vmatprep.subr.mxu0 0.0
        %5089 = vmatpush1.msra.mxu0 0.0
        %5090 = vmatprep.subr.mxu0 0.0
        %5091 = vmatpush1.msra.mxu0 0.0
        %5092 = vmatprep.subr.mxu0 0.0
        %5093 = vmatpush1.msra.mxu0 0.0
        %5094 = vmatprep.subr.mxu0 0.0
        %5095 = vmatpush1.msra.mxu0 0.0
        %5096 = vmatprep.subr.mxu0 0.0
        %5097 = vmatpush1.msra.mxu0 0.0
        %5098 = vmatprep.subr.mxu0 0.0
        %5099 = vmatpush1.msra.mxu0 0.0
        %5100 = vmatprep.subr.mxu0 0.0
        %5101 = vmatpush1.msra.mxu0 0.0
        %5102 = vmatprep.subr.mxu0 0.0
        %5103 = vmatpush1.msra.mxu0 0.0
        %5104 = vmatprep.subr.mxu0 0.0
        %5105 = vmatpush1.msra.mxu0 0.0
        %5106 = vmatprep.subr.mxu0 0.0
        %5107 = vmatpush1.msra.mxu0 0.0
        %5108 = vmatprep.subr.mxu0 0.0
        %5109 = vmatpush1.msra.mxu0 0.0
        %5110 = vmatprep.subr.mxu0 0.0
        %5111 = vmatpush1.msra.mxu0 0.0
        %5112 = vmatprep.subr.mxu0 0.0
        %5113 = vmatpush1.msra.mxu0 0.0
        %5114 = vmatprep.subr.mxu0 0.0
        %5115 = vmatpush1.msra.mxu0 0.0
        %5116 = vmatprep.subr.mxu0 0.0
        %5117 = vmatpush1.msra.mxu0 0.0
        %5118 = vmatprep.subr.mxu0 0.0
        %5119 = vmatpush1.msra.mxu0 0.0
        %5120 = vmatprep.subr.mxu0 0.0
        %5121 = vmatpush1.msra.mxu0 0.0
        %5122 = vmatprep.subr.mxu0 0.0
        %5123 = vmatpush1.msra.mxu0 0.0
        %5124 = vmatprep.subr.mxu0 0.0
        %5125 = vmatpush1.msra.mxu0 0.0
        %5126 = vmatprep.subr.mxu0 0.0
        %5127 = vmatpush1.msra.mxu0 0.0
        %5128 = vmatprep.subr.mxu0 0.0
        %5129 = vmatpush1.msra.mxu0 0.0
        %5130 = vmatprep.subr.mxu0 0.0
        %5131 = vmatpush1.msra.mxu0 0.0
        %5132 = vmatprep.subr.mxu0 0.0
        %5133 = vmatpush1.msra.mxu0 0.0
        %5134 = vmatprep.subr.mxu0 0.0
        %5135 = vmatpush1.msra.mxu0 0.0
        %5136 = vmatprep.subr.mxu0 0.0
        %5137 = vmatpush1.msra.mxu0 0.0
        %5138 = vmatprep.subr.mxu0 0.0
        %5139 = vmatpush1.msra.mxu0 0.0
        %5140 = vmatprep.subr.mxu0 0.0
        %5141 = vmatpush1.msra.mxu0 0.0
        %5142 = vmatprep.subr.mxu0 0.0
        %5143 = vmatpush1.msra.mxu0 0.0
        %5144 = vmatprep.subr.mxu0 0.0
        %5145 = vmatpush1.msra.mxu0 0.0
        %5146 = vmatprep.mubr.f32.mxu0 0.0
        %5147 = vmatmul.mubr.f32.gmra.mrb[0].mxu0 %v5080
        %v5148 = vpop.f32.mrb[0].mxu0
        %v5149 = vadd.f32 0.0, %v5148
        %v5150 = vpop.f32.mrb[0].mxu0
        %5151 = vdwg.mxu0
        %v5153 = vsel %vm2888, %v1623, 0
        %5155 = vmatprep.subr.mxu0 0.0
        %5156 = vmatpush1.msra.mxu0 %v2751
        %5157 = vmatprep.subr.mxu0 0.0
        %5158 = vmatpush1.msra.mxu0 %v2887
        %5159 = vmatprep.subr.mxu0 0.0
        %5160 = vmatpush1.msra.mxu0 0.0
        %5161 = vmatprep.subr.mxu0 0.0
        %5162 = vmatpush1.msra.mxu0 0.0
        %5163 = vmatprep.subr.mxu0 0.0
        %5164 = vmatpush1.msra.mxu0 0.0
        %5165 = vmatprep.subr.mxu0 0.0
        %5166 = vmatpush1.msra.mxu0 0.0
        %5167 = vmatprep.subr.mxu0 0.0
        %5168 = vmatpush1.msra.mxu0 0.0
        %5169 = vmatprep.subr.mxu0 0.0
        %5170 = vmatpush1.msra.mxu0 0.0
        %5171 = vmatprep.subr.mxu0 0.0
        %5172 = vmatpush1.msra.mxu0 0.0
        %5173 = vmatprep.subr.mxu0 0.0
        %5174 = vmatpush1.msra.mxu0 0.0
        %5175 = vmatprep.subr.mxu0 0.0
        %5176 = vmatpush1.msra.mxu0 0.0
        %5177 = vmatprep.subr.mxu0 0.0
        %5178 = vmatpush1.msra.mxu0 0.0
        %5179 = vmatprep.subr.mxu0 0.0
        %5180 = vmatpush1.msra.mxu0 0.0
        %5181 = vmatprep.subr.mxu0 0.0
        %5182 = vmatpush1.msra.mxu0 0.0
        %5183 = vmatprep.subr.mxu0 0.0
        %5184 = vmatpush1.msra.mxu0 0.0
        %5185 = vmatprep.subr.mxu0 0.0
        %5186 = vmatpush1.msra.mxu0 0.0
        %5187 = vmatprep.subr.mxu0 0.0
        %5188 = vmatpush1.msra.mxu0 0.0
        %5189 = vmatprep.subr.mxu0 0.0
        %5190 = vmatpush1.msra.mxu0 0.0
        %5191 = vmatprep.subr.mxu0 0.0
        %5192 = vmatpush1.msra.mxu0 0.0
        %5193 = vmatprep.subr.mxu0 0.0
        %5194 = vmatpush1.msra.mxu0 0.0
        %5195 = vmatprep.subr.mxu0 0.0
        %5196 = vmatpush1.msra.mxu0 0.0
        %5197 = vmatprep.subr.mxu0 0.0
        %5198 = vmatpush1.msra.mxu0 0.0
        %5199 = vmatprep.subr.mxu0 0.0
        %5200 = vmatpush1.msra.mxu0 0.0
        %5201 = vmatprep.subr.mxu0 0.0
        %5202 = vmatpush1.msra.mxu0 0.0
        %5203 = vmatprep.subr.mxu0 0.0
        %5204 = vmatpush1.msra.mxu0 0.0
        %5205 = vmatprep.subr.mxu0 0.0
        %5206 = vmatpush1.msra.mxu0 0.0
        %5207 = vmatprep.subr.mxu0 0.0
        %5208 = vmatpush1.msra.mxu0 0.0
        %5209 = vmatprep.subr.mxu0 0.0
        %5210 = vmatpush1.msra.mxu0 0.0
        %5211 = vmatprep.subr.mxu0 0.0
        %5212 = vmatpush1.msra.mxu0 0.0
        %5213 = vmatprep.subr.mxu0 0.0
        %5214 = vmatpush1.msra.mxu0 0.0
        %5215 = vmatprep.subr.mxu0 0.0
        %5216 = vmatpush1.msra.mxu0 0.0
        %5217 = vmatprep.subr.mxu0 0.0
        %5218 = vmatpush1.msra.mxu0 0.0
        %5219 = vmatprep.mubr.f32.mxu0 0.0
        %5220 = vmatmul.mubr.f32.gmra.mrb[0].mxu0 %v5153
        %v5221 = vpop.f32.mrb[0].mxu0
        %v5222 = vadd.f32 0.0, %v5221
        %v5223 = vpop.f32.mrb[0].mxu0
        %5224 = vdwg.mxu0
        %v5225 = vcombine.low %v2959, %v3105
        %v5226 = vcombine.high %v2959, %v3105
        %v5228 = vunpack.c.l.s4 1983009808
        %v5229 = vunpack.c.0.s8 %v5228
        %v5230 = vlaneseq
        %v5231 = vshrl.u32 %v5230, 7
        %v5232 = vsub.s32 %v5229, %v5231
        %v5233 = vrot.slane %v5225, %v5232
        %v5235 = vunpack.c.l.s4 1983009808
        %v5236 = vunpack.c.0.s8 %v5235
        %v5237 = vlaneseq
        %v5238 = vshrl.u32 %v5237, 7
        %v5239 = vsub.s32 %v5236, %v5238
        %v5240 = vrot.slane %v5226, %v5239
        %v5241 = vcombine.low %v3032, %v3178
        %v5242 = vcombine.high %v3032, %v3178
        %v5244 = vunpack.c.l.s4 1983009808
        %v5245 = vunpack.c.0.s8 %v5244
        %v5246 = vlaneseq
        %v5247 = vshrl.u32 %v5246, 7
        %v5248 = vsub.s32 %v5245, %v5247
        %v5249 = vrot.slane %v5241, %v5248
        %v5251 = vunpack.c.l.s4 1983009808
        %v5252 = vunpack.c.0.s8 %v5251
        %v5253 = vlaneseq
        %v5254 = vshrl.u32 %v5253, 7
        %v5255 = vsub.s32 %v5252, %v5254
        %v5256 = vrot.slane %v5242, %v5255
        %v5257 = vcombine.low %v3251, %v3397
        %v5258 = vcombine.high %v3251, %v3397
        %v5260 = vunpack.c.l.s4 1983009808
        %v5261 = vunpack.c.0.s8 %v5260
        %v5262 = vlaneseq
        %v5263 = vshrl.u32 %v5262, 7
        %v5264 = vsub.s32 %v5261, %v5263
        %v5265 = vrot.slane %v5257, %v5264
        %v5267 = vunpack.c.l.s4 1983009808
        %v5268 = vunpack.c.0.s8 %v5267
        %v5269 = vlaneseq
        %v5270 = vshrl.u32 %v5269, 7
        %v5271 = vsub.s32 %v5268, %v5270
        %v5272 = vrot.slane %v5258, %v5271
        %v5273 = vcombine.low %v3324, %v3470
        %v5274 = vcombine.high %v3324, %v3470
        %v5276 = vunpack.c.l.s4 1983009808
        %v5277 = vunpack.c.0.s8 %v5276
        %v5278 = vlaneseq
        %v5279 = vshrl.u32 %v5278, 7
        %v5280 = vsub.s32 %v5277, %v5279
        %v5281 = vrot.slane %v5273, %v5280
        %v5283 = vunpack.c.l.s4 1983009808
        %v5284 = vunpack.c.0.s8 %v5283
        %v5285 = vlaneseq
        %v5286 = vshrl.u32 %v5285, 7
        %v5287 = vsub.s32 %v5284, %v5286
        %v5288 = vrot.slane %v5274, %v5287
        %v5289 = vcombine.low %v5233, %v5249
        %v5290 = vcombine.high %v5233, %v5249
        %v5292 = vunpack.c.l.s4 1934713408
        %v5293 = vunpack.c.0.s8 %v5292
        %v5294 = vlaneseq
        %v5295 = vshrl.u32 %v5294, 7
        %v5296 = vsub.s32 %v5293, %v5295
        %v5297 = vrot.slane %v5289, %v5296
        %v5299 = vunpack.c.l.s4 1934713408
        %v5300 = vunpack.c.0.s8 %v5299
        %v5301 = vlaneseq
        %v5302 = vshrl.u32 %v5301, 7
        %v5303 = vsub.s32 %v5300, %v5302
        %v5304 = vrot.slane %v5290, %v5303
        %v5305 = vcombine.low %v5240, %v5256
        %v5306 = vcombine.high %v5240, %v5256
        %v5308 = vunpack.c.l.s4 1934713408
        %v5309 = vunpack.c.0.s8 %v5308
        %v5310 = vlaneseq
        %v5311 = vshrl.u32 %v5310, 7
        %v5312 = vsub.s32 %v5309, %v5311
        %v5313 = vrot.slane %v5305, %v5312
        %v5315 = vunpack.c.l.s4 1934713408
        %v5316 = vunpack.c.0.s8 %v5315
        %v5317 = vlaneseq
        %v5318 = vshrl.u32 %v5317, 7
        %v5319 = vsub.s32 %v5316, %v5318
        %v5320 = vrot.slane %v5306, %v5319
        %v5321 = vcombine.low %v5265, %v5281
        %v5322 = vcombine.high %v5265, %v5281
        %v5324 = vunpack.c.l.s4 1934713408
        %v5325 = vunpack.c.0.s8 %v5324
        %v5326 = vlaneseq
        %v5327 = vshrl.u32 %v5326, 7
        %v5328 = vsub.s32 %v5325, %v5327
        %v5329 = vrot.slane %v5321, %v5328
        %v5331 = vunpack.c.l.s4 1934713408
        %v5332 = vunpack.c.0.s8 %v5331
        %v5333 = vlaneseq
        %v5334 = vshrl.u32 %v5333, 7
        %v5335 = vsub.s32 %v5332, %v5334
        %v5336 = vrot.slane %v5322, %v5335
        %v5337 = vcombine.low %v5272, %v5288
        %v5338 = vcombine.high %v5272, %v5288
        %v5340 = vunpack.c.l.s4 1934713408
        %v5341 = vunpack.c.0.s8 %v5340
        %v5342 = vlaneseq
        %v5343 = vshrl.u32 %v5342, 7
        %v5344 = vsub.s32 %v5341, %v5343
        %v5345 = vrot.slane %v5337, %v5344
        %v5347 = vunpack.c.l.s4 1934713408
        %v5348 = vunpack.c.0.s8 %v5347
        %v5349 = vlaneseq
        %v5350 = vshrl.u32 %v5349, 7
        %v5351 = vsub.s32 %v5348, %v5350
        %v5352 = vrot.slane %v5338, %v5351
        %v5353 = vcombine.low %v5297, %v5329
        %v5354 = vcombine.high %v5297, %v5329
        %v5355 = vcombine.low %v5304, %v5336
        %v5356 = vcombine.high %v5304, %v5336
        %v5357 = vcombine.low %v5313, %v5345
        %v5358 = vcombine.high %v5313, %v5345
        %v5359 = vcombine.low %v5320, %v5352
        %v5360 = vcombine.high %v5320, %v5352
        %v5361 = vcombine.low %v3543, %v3689
        %v5362 = vcombine.high %v3543, %v3689
        %v5364 = vunpack.c.l.s4 1983009808
        %v5365 = vunpack.c.0.s8 %v5364
        %v5366 = vlaneseq
        %v5367 = vshrl.u32 %v5366, 7
        %v5368 = vsub.s32 %v5365, %v5367
        %v5369 = vrot.slane %v5361, %v5368
        %v5371 = vunpack.c.l.s4 1983009808
        %v5372 = vunpack.c.0.s8 %v5371
        %v5373 = vlaneseq
        %v5374 = vshrl.u32 %v5373, 7
        %v5375 = vsub.s32 %v5372, %v5374
        %v5376 = vrot.slane %v5362, %v5375
        %v5377 = vcombine.low %v3616, %v3762
        %v5378 = vcombine.high %v3616, %v3762
        %v5380 = vunpack.c.l.s4 1983009808
        %v5381 = vunpack.c.0.s8 %v5380
        %v5382 = vlaneseq
        %v5383 = vshrl.u32 %v5382, 7
        %v5384 = vsub.s32 %v5381, %v5383
        %v5385 = vrot.slane %v5377, %v5384
        %v5387 = vunpack.c.l.s4 1983009808
        %v5388 = vunpack.c.0.s8 %v5387
        %v5389 = vlaneseq
        %v5390 = vshrl.u32 %v5389, 7
        %v5391 = vsub.s32 %v5388, %v5390
        %v5392 = vrot.slane %v5378, %v5391
        %v5393 = vcombine.low %v3835, %v3981
        %v5394 = vcombine.high %v3835, %v3981
        %v5396 = vunpack.c.l.s4 1983009808
        %v5397 = vunpack.c.0.s8 %v5396
        %v5398 = vlaneseq
        %v5399 = vshrl.u32 %v5398, 7
        %v5400 = vsub.s32 %v5397, %v5399
        %v5401 = vrot.slane %v5393, %v5400
        %v5403 = vunpack.c.l.s4 1983009808
        %v5404 = vunpack.c.0.s8 %v5403
        %v5405 = vlaneseq
        %v5406 = vshrl.u32 %v5405, 7
        %v5407 = vsub.s32 %v5404, %v5406
        %v5408 = vrot.slane %v5394, %v5407
        %v5409 = vcombine.low %v3908, %v4054
        %v5410 = vcombine.high %v3908, %v4054
        %v5412 = vunpack.c.l.s4 1983009808
        %v5413 = vunpack.c.0.s8 %v5412
        %v5414 = vlaneseq
        %v5415 = vshrl.u32 %v5414, 7
        %v5416 = vsub.s32 %v5413, %v5415
        %v5417 = vrot.slane %v5409, %v5416
        %v5419 = vunpack.c.l.s4 1983009808
        %v5420 = vunpack.c.0.s8 %v5419
        %v5421 = vlaneseq
        %v5422 = vshrl.u32 %v5421, 7
        %v5423 = vsub.s32 %v5420, %v5422
        %v5424 = vrot.slane %v5410, %v5423
        %v5425 = vcombine.low %v5369, %v5385
        %v5426 = vcombine.high %v5369, %v5385
        %v5428 = vunpack.c.l.s4 1934713408
        %v5429 = vunpack.c.0.s8 %v5428
        %v5430 = vlaneseq
        %v5431 = vshrl.u32 %v5430, 7
        %v5432 = vsub.s32 %v5429, %v5431
        %v5433 = vrot.slane %v5425, %v5432
        %v5435 = vunpack.c.l.s4 1934713408
        %v5436 = vunpack.c.0.s8 %v5435
        %v5437 = vlaneseq
        %v5438 = vshrl.u32 %v5437, 7
        %v5439 = vsub.s32 %v5436, %v5438
        %v5440 = vrot.slane %v5426, %v5439
        %v5441 = vcombine.low %v5376, %v5392
        %v5442 = vcombine.high %v5376, %v5392
        %v5444 = vunpack.c.l.s4 1934713408
        %v5445 = vunpack.c.0.s8 %v5444
        %v5446 = vlaneseq
        %v5447 = vshrl.u32 %v5446, 7
        %v5448 = vsub.s32 %v5445, %v5447
        %v5449 = vrot.slane %v5441, %v5448
        %v5451 = vunpack.c.l.s4 1934713408
        %v5452 = vunpack.c.0.s8 %v5451
        %v5453 = vlaneseq
        %v5454 = vshrl.u32 %v5453, 7
        %v5455 = vsub.s32 %v5452, %v5454
        %v5456 = vrot.slane %v5442, %v5455
        %v5457 = vcombine.low %v5401, %v5417
        %v5458 = vcombine.high %v5401, %v5417
        %v5460 = vunpack.c.l.s4 1934713408
        %v5461 = vunpack.c.0.s8 %v5460
        %v5462 = vlaneseq
        %v5463 = vshrl.u32 %v5462, 7
        %v5464 = vsub.s32 %v5461, %v5463
        %v5465 = vrot.slane %v5457, %v5464
        %v5467 = vunpack.c.l.s4 1934713408
        %v5468 = vunpack.c.0.s8 %v5467
        %v5469 = vlaneseq
        %v5470 = vshrl.u32 %v5469, 7
        %v5471 = vsub.s32 %v5468, %v5470
        %v5472 = vrot.slane %v5458, %v5471
        %v5473 = vcombine.low %v5408, %v5424
        %v5474 = vcombine.high %v5408, %v5424
        %v5476 = vunpack.c.l.s4 1934713408
        %v5477 = vunpack.c.0.s8 %v5476
        %v5478 = vlaneseq
        %v5479 = vshrl.u32 %v5478, 7
        %v5480 = vsub.s32 %v5477, %v5479
        %v5481 = vrot.slane %v5473, %v5480
        %v5483 = vunpack.c.l.s4 1934713408
        %v5484 = vunpack.c.0.s8 %v5483
        %v5485 = vlaneseq
        %v5486 = vshrl.u32 %v5485, 7
        %v5487 = vsub.s32 %v5484, %v5486
        %v5488 = vrot.slane %v5474, %v5487
        %v5489 = vcombine.low %v5433, %v5465
        %v5490 = vcombine.high %v5433, %v5465
        %v5491 = vcombine.low %v5440, %v5472
        %v5492 = vcombine.high %v5440, %v5472
        %v5493 = vcombine.low %v5449, %v5481
        %v5494 = vcombine.high %v5449, %v5481
        %v5495 = vcombine.low %v5456, %v5488
        %v5496 = vcombine.high %v5456, %v5488
        %v5497 = vcombine.low %v4127, %v4273
        %v5498 = vcombine.high %v4127, %v4273
        %v5500 = vunpack.c.l.s4 1983009808
        %v5501 = vunpack.c.0.s8 %v5500
        %v5502 = vlaneseq
        %v5503 = vshrl.u32 %v5502, 7
        %v5504 = vsub.s32 %v5501, %v5503
        %v5505 = vrot.slane %v5497, %v5504
        %v5507 = vunpack.c.l.s4 1983009808
        %v5508 = vunpack.c.0.s8 %v5507
        %v5509 = vlaneseq
        %v5510 = vshrl.u32 %v5509, 7
        %v5511 = vsub.s32 %v5508, %v5510
        %v5512 = vrot.slane %v5498, %v5511
        %v5513 = vcombine.low %v4200, %v4346
        %v5514 = vcombine.high %v4200, %v4346
        %v5516 = vunpack.c.l.s4 1983009808
        %v5517 = vunpack.c.0.s8 %v5516
        %v5518 = vlaneseq
        %v5519 = vshrl.u32 %v5518, 7
        %v5520 = vsub.s32 %v5517, %v5519
        %v5521 = vrot.slane %v5513, %v5520
        %v5523 = vunpack.c.l.s4 1983009808
        %v5524 = vunpack.c.0.s8 %v5523
        %v5525 = vlaneseq
        %v5526 = vshrl.u32 %v5525, 7
        %v5527 = vsub.s32 %v5524, %v5526
        %v5528 = vrot.slane %v5514, %v5527
        %v5529 = vcombine.low %v4419, %v4565
        %v5530 = vcombine.high %v4419, %v4565
        %v5532 = vunpack.c.l.s4 1983009808
        %v5533 = vunpack.c.0.s8 %v5532
        %v5534 = vlaneseq
        %v5535 = vshrl.u32 %v5534, 7
        %v5536 = vsub.s32 %v5533, %v5535
        %v5537 = vrot.slane %v5529, %v5536
        %v5539 = vunpack.c.l.s4 1983009808
        %v5540 = vunpack.c.0.s8 %v5539
        %v5541 = vlaneseq
        %v5542 = vshrl.u32 %v5541, 7
        %v5543 = vsub.s32 %v5540, %v5542
        %v5544 = vrot.slane %v5530, %v5543
        %v5545 = vcombine.low %v4492, %v4638
        %v5546 = vcombine.high %v4492, %v4638
        %v5548 = vunpack.c.l.s4 1983009808
        %v5549 = vunpack.c.0.s8 %v5548
        %v5550 = vlaneseq
        %v5551 = vshrl.u32 %v5550, 7
        %v5552 = vsub.s32 %v5549, %v5551
        %v5553 = vrot.slane %v5545, %v5552
        %v5555 = vunpack.c.l.s4 1983009808
        %v5556 = vunpack.c.0.s8 %v5555
        %v5557 = vlaneseq
        %v5558 = vshrl.u32 %v5557, 7
        %v5559 = vsub.s32 %v5556, %v5558
        %v5560 = vrot.slane %v5546, %v5559
        %v5561 = vcombine.low %v5505, %v5521
        %v5562 = vcombine.high %v5505, %v5521
        %v5564 = vunpack.c.l.s4 1934713408
        %v5565 = vunpack.c.0.s8 %v5564
        %v5566 = vlaneseq
        %v5567 = vshrl.u32 %v5566, 7
        %v5568 = vsub.s32 %v5565, %v5567
        %v5569 = vrot.slane %v5561, %v5568
        %v5571 = vunpack.c.l.s4 1934713408
        %v5572 = vunpack.c.0.s8 %v5571
        %v5573 = vlaneseq
        %v5574 = vshrl.u32 %v5573, 7
        %v5575 = vsub.s32 %v5572, %v5574
        %v5576 = vrot.slane %v5562, %v5575
        %v5577 = vcombine.low %v5512, %v5528
        %v5578 = vcombine.high %v5512, %v5528
        %v5580 = vunpack.c.l.s4 1934713408
        %v5581 = vunpack.c.0.s8 %v5580
        %v5582 = vlaneseq
        %v5583 = vshrl.u32 %v5582, 7
        %v5584 = vsub.s32 %v5581, %v5583
        %v5585 = vrot.slane %v5577, %v5584
        %v5587 = vunpack.c.l.s4 1934713408
        %v5588 = vunpack.c.0.s8 %v5587
        %v5589 = vlaneseq
        %v5590 = vshrl.u32 %v5589, 7
        %v5591 = vsub.s32 %v5588, %v5590
        %v5592 = vrot.slane %v5578, %v5591
        %v5593 = vcombine.low %v5537, %v5553
        %v5594 = vcombine.high %v5537, %v5553
        %v5596 = vunpack.c.l.s4 1934713408
        %v5597 = vunpack.c.0.s8 %v5596
        %v5598 = vlaneseq
        %v5599 = vshrl.u32 %v5598, 7
        %v5600 = vsub.s32 %v5597, %v5599
        %v5601 = vrot.slane %v5593, %v5600
        %v5603 = vunpack.c.l.s4 1934713408
        %v5604 = vunpack.c.0.s8 %v5603
        %v5605 = vlaneseq
        %v5606 = vshrl.u32 %v5605, 7
        %v5607 = vsub.s32 %v5604, %v5606
        %v5608 = vrot.slane %v5594, %v5607
        %v5609 = vcombine.low %v5544, %v5560
        %v5610 = vcombine.high %v5544, %v5560
        %v5612 = vunpack.c.l.s4 1934713408
        %v5613 = vunpack.c.0.s8 %v5612
        %v5614 = vlaneseq
        %v5615 = vshrl.u32 %v5614, 7
        %v5616 = vsub.s32 %v5613, %v5615
        %v5617 = vrot.slane %v5609, %v5616
        %v5619 = vunpack.c.l.s4 1934713408
        %v5620 = vunpack.c.0.s8 %v5619
        %v5621 = vlaneseq
        %v5622 = vshrl.u32 %v5621, 7
        %v5623 = vsub.s32 %v5620, %v5622
        %v5624 = vrot.slane %v5610, %v5623
        %v5625 = vcombine.low %v5569, %v5601
        %v5626 = vcombine.high %v5569, %v5601
        %v5627 = vcombine.low %v5576, %v5608
        %v5628 = vcombine.high %v5576, %v5608
        %v5629 = vcombine.low %v5585, %v5617
        %v5630 = vcombine.high %v5585, %v5617
        %v5631 = vcombine.low %v5592, %v5624
        %v5632 = vcombine.high %v5592, %v5624
        %v5633 = vcombine.low %v4711, %v4857
        %v5634 = vcombine.high %v4711, %v4857
        %v5636 = vunpack.c.l.s4 1983009808
        %v5637 = vunpack.c.0.s8 %v5636
        %v5638 = vlaneseq
        %v5639 = vshrl.u32 %v5638, 7
        %v5640 = vsub.s32 %v5637, %v5639
        %v5641 = vrot.slane %v5633, %v5640
        %v5643 = vunpack.c.l.s4 1983009808
        %v5644 = vunpack.c.0.s8 %v5643
        %v5645 = vlaneseq
        %v5646 = vshrl.u32 %v5645, 7
        %v5647 = vsub.s32 %v5644, %v5646
        %v5648 = vrot.slane %v5634, %v5647
        %v5649 = vcombine.low %v4784, %v4930
        %v5650 = vcombine.high %v4784, %v4930
        %v5652 = vunpack.c.l.s4 1983009808
        %v5653 = vunpack.c.0.s8 %v5652
        %v5654 = vlaneseq
        %v5655 = vshrl.u32 %v5654, 7
        %v5656 = vsub.s32 %v5653, %v5655
        %v5657 = vrot.slane %v5649, %v5656
        %v5659 = vunpack.c.l.s4 1983009808
        %v5660 = vunpack.c.0.s8 %v5659
        %v5661 = vlaneseq
        %v5662 = vshrl.u32 %v5661, 7
        %v5663 = vsub.s32 %v5660, %v5662
        %v5664 = vrot.slane %v5650, %v5663
        %v5665 = vcombine.low %v5003, %v5149
        %v5666 = vcombine.high %v5003, %v5149
        %v5668 = vunpack.c.l.s4 1983009808
        %v5669 = vunpack.c.0.s8 %v5668
        %v5670 = vlaneseq
        %v5671 = vshrl.u32 %v5670, 7
        %v5672 = vsub.s32 %v5669, %v5671
        %v5673 = vrot.slane %v5665, %v5672
        %v5675 = vunpack.c.l.s4 1983009808
        %v5676 = vunpack.c.0.s8 %v5675
        %v5677 = vlaneseq
        %v5678 = vshrl.u32 %v5677, 7
        %v5679 = vsub.s32 %v5676, %v5678
        %v5680 = vrot.slane %v5666, %v5679
        %v5681 = vcombine.low %v5076, %v5222
        %v5682 = vcombine.high %v5076, %v5222
        %v5684 = vunpack.c.l.s4 1983009808
        %v5685 = vunpack.c.0.s8 %v5684
        %v5686 = vlaneseq
        %v5687 = vshrl.u32 %v5686, 7
        %v5688 = vsub.s32 %v5685, %v5687
        %v5689 = vrot.slane %v5681, %v5688
        %v5691 = vunpack.c.l.s4 1983009808
        %v5692 = vunpack.c.0.s8 %v5691
        %v5693 = vlaneseq
        %v5694 = vshrl.u32 %v5693, 7
        %v5695 = vsub.s32 %v5692, %v5694
        %v5696 = vrot.slane %v5682, %v5695
        %v5697 = vcombine.low %v5641, %v5657
        %v5698 = vcombine.high %v5641, %v5657
        %v5700 = vunpack.c.l.s4 1934713408
        %v5701 = vunpack.c.0.s8 %v5700
        %v5702 = vlaneseq
        %v5703 = vshrl.u32 %v5702, 7
        %v5704 = vsub.s32 %v5701, %v5703
        %v5705 = vrot.slane %v5697, %v5704
        %v5707 = vunpack.c.l.s4 1934713408
        %v5708 = vunpack.c.0.s8 %v5707
        %v5709 = vlaneseq
        %v5710 = vshrl.u32 %v5709, 7
        %v5711 = vsub.s32 %v5708, %v5710
        %v5712 = vrot.slane %v5698, %v5711
        %v5713 = vcombine.low %v5648, %v5664
        %v5714 = vcombine.high %v5648, %v5664
        %v5716 = vunpack.c.l.s4 1934713408
        %v5717 = vunpack.c.0.s8 %v5716
        %v5718 = vlaneseq
        %v5719 = vshrl.u32 %v5718, 7
        %v5720 = vsub.s32 %v5717, %v5719
        %v5721 = vrot.slane %v5713, %v5720
        %v5723 = vunpack.c.l.s4 1934713408
        %v5724 = vunpack.c.0.s8 %v5723
        %v5725 = vlaneseq
        %v5726 = vshrl.u32 %v5725, 7
        %v5727 = vsub.s32 %v5724, %v5726
        %v5728 = vrot.slane %v5714, %v5727
        %v5729 = vcombine.low %v5673, %v5689
        %v5730 = vcombine.high %v5673, %v5689
        %v5732 = vunpack.c.l.s4 1934713408
        %v5733 = vunpack.c.0.s8 %v5732
        %v5734 = vlaneseq
        %v5735 = vshrl.u32 %v5734, 7
        %v5736 = vsub.s32 %v5733, %v5735
        %v5737 = vrot.slane %v5729, %v5736
        %v5739 = vunpack.c.l.s4 1934713408
        %v5740 = vunpack.c.0.s8 %v5739
        %v5741 = vlaneseq
        %v5742 = vshrl.u32 %v5741, 7
        %v5743 = vsub.s32 %v5740, %v5742
        %v5744 = vrot.slane %v5730, %v5743
        %v5745 = vcombine.low %v5680, %v5696
        %v5746 = vcombine.high %v5680, %v5696
        %v5748 = vunpack.c.l.s4 1934713408
        %v5749 = vunpack.c.0.s8 %v5748
        %v5750 = vlaneseq
        %v5751 = vshrl.u32 %v5750, 7
        %v5752 = vsub.s32 %v5749, %v5751
        %v5753 = vrot.slane %v5745, %v5752
        %v5755 = vunpack.c.l.s4 1934713408
        %v5756 = vunpack.c.0.s8 %v5755
        %v5757 = vlaneseq
        %v5758 = vshrl.u32 %v5757, 7
        %v5759 = vsub.s32 %v5756, %v5758
        %v5760 = vrot.slane %v5746, %v5759
        %v5761 = vcombine.low %v5705, %v5737
        %v5762 = vcombine.high %v5705, %v5737
        %v5763 = vcombine.low %v5712, %v5744
        %v5764 = vcombine.high %v5712, %v5744
        %v5765 = vcombine.low %v5721, %v5753
        %v5766 = vcombine.high %v5721, %v5753
        %v5767 = vcombine.low %v5728, %v5760
        %v5768 = vcombine.high %v5728, %v5760
        %5773 = vrot.lane.b32.xlu0 %v5354, 16
        %v5774 = vpop.permute.xlu0 %5773
        %5775 = vrot.lane.b32.xlu0 %v5490, 16
        %v5776 = vpop.permute.xlu0 %5775
        %5777 = vrot.lane.b32.xlu0 %v5626, 16
        %v5778 = vpop.permute.xlu0 %5777
        %5779 = vrot.lane.b32.xlu0 %v5762, 16
        %v5780 = vpop.permute.xlu0 %5779
        %5789 = vrot.lane.b32.xlu0 %v5355, 32
        %v5790 = vpop.permute.xlu0 %5789
        %5791 = vrot.lane.b32.xlu0 %v5491, 32
        %v5792 = vpop.permute.xlu0 %5791
        %5793 = vrot.lane.b32.xlu0 %v5627, 32
        %v5794 = vpop.permute.xlu0 %5793
        %5795 = vrot.lane.b32.xlu0 %v5763, 32
        %v5796 = vpop.permute.xlu0 %5795
        %5805 = vrot.lane.b32.xlu0 %v5356, 48
        %v5806 = vpop.permute.xlu0 %5805
        %5807 = vrot.lane.b32.xlu0 %v5492, 48
        %v5808 = vpop.permute.xlu0 %5807
        %5809 = vrot.lane.b32.xlu0 %v5628, 48
        %v5810 = vpop.permute.xlu0 %5809
        %5811 = vrot.lane.b32.xlu0 %v5764, 48
        %v5812 = vpop.permute.xlu0 %5811
        %5821 = vrot.lane.b32.xlu0 %v5357, 64
        %v5822 = vpop.permute.xlu0 %5821
        %5823 = vrot.lane.b32.xlu0 %v5493, 64
        %v5824 = vpop.permute.xlu0 %5823
        %5825 = vrot.lane.b32.xlu0 %v5629, 64
        %v5826 = vpop.permute.xlu0 %5825
        %5827 = vrot.lane.b32.xlu0 %v5765, 64
        %v5828 = vpop.permute.xlu0 %5827
        %5837 = vrot.lane.b32.xlu0 %v5358, 80
        %v5838 = vpop.permute.xlu0 %5837
        %5839 = vrot.lane.b32.xlu0 %v5494, 80
        %v5840 = vpop.permute.xlu0 %5839
        %5841 = vrot.lane.b32.xlu0 %v5630, 80
        %v5842 = vpop.permute.xlu0 %5841
        %5843 = vrot.lane.b32.xlu0 %v5766, 80
        %v5844 = vpop.permute.xlu0 %5843
        %5853 = vrot.lane.b32.xlu0 %v5359, 96
        %v5854 = vpop.permute.xlu0 %5853
        %5855 = vrot.lane.b32.xlu0 %v5495, 96
        %v5856 = vpop.permute.xlu0 %5855
        %5857 = vrot.lane.b32.xlu0 %v5631, 96
        %v5858 = vpop.permute.xlu0 %5857
        %5859 = vrot.lane.b32.xlu0 %v5767, 96
        %v5860 = vpop.permute.xlu0 %5859
        %5869 = vrot.lane.b32.xlu0 %v5360, 112
        %v5870 = vpop.permute.xlu0 %5869
        %5871 = vrot.lane.b32.xlu0 %v5496, 112
        %v5872 = vpop.permute.xlu0 %5871
        %5873 = vrot.lane.b32.xlu0 %v5632, 112
        %v5874 = vpop.permute.xlu0 %5873
        %5875 = vrot.lane.b32.xlu0 %v5768, 112
        %v5876 = vpop.permute.xlu0 %5875
        %v5881 = vsel %vm2888, %v5353, %v5774
        %v5882 = vsel %vm2888, %v5489, %v5776
        %v5883 = vsel %vm2888, %v5625, %v5778
        %v5884 = vsel %vm2888, %v5761, %v5780
        %v5885 = vsel %vm442, %v5881, %v5790
        %v5886 = vsel %vm442, %v5882, %v5792
        %v5887 = vsel %vm442, %v5883, %v5794
        %v5888 = vsel %vm442, %v5884, %v5796
        %vm5889 = vcmask 392192
        %v5890 = vsel %vm5889, %v5885, %v5806
        %v5891 = vsel %vm5889, %v5886, %v5808
        %v5892 = vsel %vm5889, %v5887, %v5810
        %v5893 = vsel %vm5889, %v5888, %v5812
        %vm5894 = vcmask 523264
        %v5895 = vsel %vm5894, %v5890, %v5822
        %v5896 = vsel %vm5894, %v5891, %v5824
        %v5897 = vsel %vm5894, %v5892, %v5826
        %v5898 = vsel %vm5894, %v5893, %v5828
        %vm5899 = vcmask 654336
        %v5900 = vsel %vm5899, %v5895, %v5838
        %v5901 = vsel %vm5899, %v5896, %v5840
        %v5902 = vsel %vm5899, %v5897, %v5842
        %v5903 = vsel %vm5899, %v5898, %v5844
        %vm5904 = vcmask 785408
        %v5905 = vsel %vm5904, %v5900, %v5854
        %v5906 = vsel %vm5904, %v5901, %v5856
        %v5907 = vsel %vm5904, %v5902, %v5858
        %v5908 = vsel %vm5904, %v5903, %v5860
        %vm5909 = vcmask 916480
        %v5910 = vsel %vm5909, %v5905, %v5870
        %v5911 = vsel %vm5909, %v5906, %v5872
        %v5912 = vsel %vm5909, %v5907, %v5874
        %v5913 = vsel %vm5909, %v5908, %v5876
        %5914 = vst [vmem:[%s407] sm:$0xff] %v5910
        %5915 = vst [vmem:[%s407 + $0x8] sm:$0xff] %v5911
        %5916 = vst [vmem:[%s407 + $0x10] sm:$0xff] %v5912
        %5917 = vst [vmem:[%s407 + $0x18] sm:$0xff] %v5913
        %s5918 = sand.u32 %s251, 1
        %s5919 = scalar_lea.sflag [#allocation4], %s5918
        %s5920 = sand.u32 %s251, 1
        %s5921 = smul.addr %s5920, 32
        %s5922 = scalar_lea.vmem [#allocation8], %s5921
        // Predicated region
        $region73: #{tpu_custom_call.1} parent=59 // pred_check
          %p5923 = pneg %p261
        $region74: #{tpu_custom_call.1} parent=59 // pred_check_branch
          %5925 = sbr.rel (%p5923) target = $region76
        $region75: #{tpu_custom_call.1} parent=59 // pred_region
          %s5926 = smul.u32 2, %s28
          %s5928 = ssub.s32 512, 512
          %5929 = vsyncadd %s5919, %s5928
          %s5930 = smul.addr %s5926, 2
          %s5931 = smul.addr %s5930, 128
          %s5932 = scalar_lea.hbm %s10, %s5931
          %s5933 = sshll.u32 %s5922, 4
          %s5934 = int_to_ptr.vmem [resolvable:$true] %s5933
          %5939 = dma.vmem_to_hbm [thread:$0]  %s5934, 512, %s5932, %s5919, 128, 128, 8
        $region76: #{tpu_custom_call.1} parent=59 // pred_fallthru
          _
      $region60: #{tpu_custom_call.1} parent=5 // pred_fallthru
        _
      %p5940 = scmp.le.s32.totalorder 2, %s23
      // Predicated region
      $region77: #{tpu_custom_call.1} parent=5 // pred_check
        %p5941 = pneg %p5940
      $region78: #{tpu_custom_call.1} parent=5 // pred_check_branch
        %5943 = sbr.rel (%p5941) target = $region80
      $region79: #{tpu_custom_call.1} parent=5 // pred_region
        %s5944 = ssub.s32 %s23, 2
        // Predicated region
        $region81: #{tpu_custom_call.1} parent=79 // pred_check
          %p5945 = pneg %p267
        $region82: #{tpu_custom_call.1} parent=79 // pred_check_branch
          %5947 = sbr.rel (%p5945) target = $region84
        $region83: #{tpu_custom_call.1} parent=79 // pred_region
          %s5948 = sand.u32 %s252, 1
          %s5949 = scalar_lea.sflag [#allocation4], %s5948
          %s5950 = sand.u32 %s252, 1
          %s5951 = smul.addr %s5950, 32
          %s5952 = scalar_lea.vmem [#allocation8], %s5951
          %5953 = dma.done %s5949, 512
        $region84: #{tpu_custom_call.1} parent=79 // pred_fallthru
          _
      $region80: #{tpu_custom_call.1} parent=5 // pred_fallthru
        _
    $region6: #{tpu_custom_call.1} parent=1 // loop_footer
      %s27 = sadd.s32 1, %s23
    $region7: #{tpu_custom_call.1} parent=1 // loop_footer_branch
      %22 = sbr.rel target = $region3
    $region8: #{tpu_custom_call.1} parent=1 // loop_exit
      _
    %5954 = vsyncpa [#allocation3], 1
    %s5955 = scalar_lea.sflag [#allocation3], 1
    %5956 = vsyncpa %s5955, 1
    %5957 = vsyncpa [#allocation6], 1
    %5958 = vsyncpa [#allocation4], 1
    %s5959 = scalar_lea.sflag [#allocation4], 1
    %5960 = vsyncpa %s5959, 1

</llo_original>
